<compile_context>
chip_gen: v7x
topology: tpu7x:2x2x1
jax: 0.10.0
libtpu: 0.0.40
codegen_flags: <defaults>
</compile_context>

<pallas_src>
import functools

import jax
import jax.numpy as jnp
from jax import lax
from jax.experimental import pallas as pl
from jax.experimental.pallas import tpu as pltpu


def _head_kernel(x_ref, w3_ref, bns_ref, w1_ref, cwT_ref, rh_ref, b1_ref,
                 o_ref, t_ref):
    # x_ref:   (1, Hp, Wp, Cin)  zero-padded NHWC input tile (bf16)
    # w3_ref:  (9*Cin, Cmid)     3x3 taps, BN scale folded in, rows ordered (kx, ky, cin) (bf16)
    # bns_ref: (1, Cmid)         BN shift (f32)
    # w1_ref:  (Cmid, Cout)      1x1 conv weight (bf16)
    # cwT_ref: (W, Wo)           width interp matrix Cw^T, align_corners=True (f32)
    # rh_ref:  (tho, H)          height interp rows for this output row tile (f32)
    # b1_ref:  (Cout, 1)         1x1 conv bias (f32), folded in post-upsample
    # o_ref:   (1, Cout, tho, Wo) NCHW output row tile (lane dim = Wo)
    # t_ref:   (Cout, H, Wo)     VMEM scratch: width-upsampled channels-first logits (+ bias)
    j = pl.program_id(1)
    _, Hp, Wp, Cin = x_ref.shape
    H, W = Hp - 2, Wp - 2
    Cout, _, Wo = t_ref.shape

    # ---- heavy stage: once per image (j == 0) ----
    @pl.when(j == 0)
    def _():
        xp = x_ref[0]                                        # (Hp, Wp, Cin) bf16
        pieces = []
        for dx in range(3):                                  # 3 sublane-shifted copies ...
            xdx = xp[:, dx:dx + W, :]                        # (Hp, W, Cin)
            for dy in range(3):                              # ... reused across dy (cheap slice)
                pieces.append(xdx[dy:dy + H].reshape(H * W, Cin))
        cols = jnp.concatenate(pieces, axis=1)               # (H*W, 9*Cin) im2col in VMEM

        # 3x3 conv (+ folded BN scale): one MXU matmul, K = 9*Cin
        fm = jnp.dot(cols, w3_ref[...], preferred_element_type=jnp.float32)
        fm = jnp.maximum(fm + bns_ref[...], 0.0)             # BN shift + ReLU (f32 epilogue)

        # 1x1 conv (bias deferred): (H*W, Cmid) @ (Cmid, Cout)
        logits = jnp.dot(fm.astype(jnp.bfloat16), w1_ref[...],
                         preferred_element_type=jnp.float32)  # (H*W, Cout)

        # channels-first relayout of the (small) logits, then per-channel width upsample
        logits_hcw = jnp.transpose(logits.reshape(H, W, Cout), (0, 2, 1))  # (H, Cout, W)
        for c in range(Cout):
            t_ref[c] = (jnp.dot(logits_hcw[:, c, :], cwT_ref[...],
                                preferred_element_type=jnp.float32)
                        + b1_ref[c])                          # bias exact post-upsample

    # ---- height upsample for this output row tile (every grid step) ----
    rh = rh_ref[...]                                          # (tho, H) f32
    for c in range(Cout):
        o_ref[0, c] = jnp.dot(rh, t_ref[c],
                              preferred_element_type=jnp.float32).astype(o_ref.dtype)


def _interp_matrix(out_size, in_size):
    # PyTorch F.interpolate(..., mode='bilinear', align_corners=True) 1-D weights.
    i = jnp.arange(out_size, dtype=jnp.float32)
    if out_size > 1:
        src = i * (in_size - 1) / (out_size - 1)
    else:
        src = jnp.zeros_like(i)
    i0 = jnp.clip(jnp.floor(src).astype(jnp.int32), 0, in_size - 1)
    i1 = jnp.clip(i0 + 1, 0, in_size - 1)
    w = src - i0.astype(jnp.float32)
    return (jax.nn.one_hot(i0, in_size, dtype=jnp.float32) * (1.0 - w)[:, None]
            + jax.nn.one_hot(i1, in_size, dtype=jnp.float32) * w[:, None])


def _rup(a, m):
    return ((a + m - 1) // m) * m


def _pick_row_tile(Ho, Wo, Cout):
    """Largest multiple-of-8 divisor of Ho within a ~4 MiB per-tile output budget (cap 256)."""
    cap = max(8, min(256, (4 * 2**20) // max(1, Cout * Wo * 4)))
    cap -= cap % 8
    cap = max(cap, 8)
    if Ho <= cap:
        return Ho
    for d in range(cap, 7, -8):
        if Ho % d == 0:
            return d
    return Ho


def _vmem_estimate(Hp, Wp, Cin, Cmid, Cout, H, W, Wo, tho):
    b = 0
    b += 2 * Hp * _rup(Wp, 16) * _rup(Cin, 128) * 2            # x block (bf16, double-buffered)
    b += 2 * _rup(9 * Cin, 16) * _rup(Cmid, 128) * 2           # w3
    b += 2 * _rup(Cmid, 16) * 128 * 2                          # w1
    b += 2 * 8 * _rup(Cmid, 128) * 4                           # bn shift
    b += 2 * _rup(W, 8) * _rup(Wo, 128) * 4                    # CwT
    b += 2 * _rup(tho, 8) * _rup(H, 128) * 4                   # Rh tile
    b += 2 * Cout * _rup(tho, 8) * _rup(Wo, 128) * 4           # output block
    b += Cout * _rup(H, 8) * _rup(Wo, 128) * 4                 # scratch t_ref
    # j == 0 temporaries (im2col, fm, logits) headroom
    b += H * W * _rup(9 * Cin, 128) * 2
    b += 2 * H * W * _rup(Cmid, 128) * 4
    b += 3 * H * _rup(W, 128) * 4
    return b


@functools.partial(jax.jit, static_argnames=("scale", "row_tile"))
def bisenet_head_forward(x_nchw, params, scale, row_tile=None):
    """x_nchw: (B, Cin, H, W) float32. Returns (B, Cout, H*scale, W*scale) (NCHW)."""
    B, Cin, H, W = x_nchw.shape
    w3 = params["w3"]                 # (Cmid, Cin, 3, 3) torch conv layout
    Cmid = w3.shape[0]
    w1 = params["w1"]                 # (Cout, Cmid, 1, 1)
    Cout = w1.shape[0]
    eps = 1e-5

    # ---- fold BatchNorm (eval mode) into the 3x3 conv ----
    bn_scale = params["bn_gamma"] * lax.rsqrt(params["bn_var"] + eps)
    bn_shift = params["bn_beta"] - params["bn_mean"] * bn_scale
    w3f = w3 * bn_scale[:, None, None, None]                  # (Cmid, Cin, 3, 3)
    # rows ordered (kx, ky, cin) to match the kernel's (dx outer, dy inner) im2col order
    w3m = jnp.transpose(w3f, (3, 2, 1, 0)).reshape(9 * Cin, Cmid).astype(jnp.bfloat16)
    bns = bn_shift.reshape(1, Cmid).astype(jnp.float32)
    w1m = jnp.transpose(w1[:, :, 0, 0], (1, 0)).astype(jnp.bfloat16)   # (Cmid, Cout)
    b1v = params["b1"].reshape(Cout, 1).astype(jnp.float32)

    # ---- NHWC, zero-padded, bf16 (lane dim = Cin -> dense input DMA at real widths) ----
    x_nhwc = jnp.transpose(x_nchw, (0, 2, 3, 1))
    xpad = jnp.pad(x_nhwc, ((0, 0), (1, 1), (1, 1), (0, 0))).astype(jnp.bfloat16)
    Hp, Wp = H + 2, W + 2

    # ---- separable bilinear interpolation matrices (align_corners=True) ----
    Ho, Wo = H * scale, W * scale
    Rh = _interp_matrix(Ho, H)                                 # (Ho, H) f32
    CwT = _interp_matrix(Wo, W).T                              # (W, Wo) f32

    tho = _pick_row_tile(Ho, Wo, Cout) if row_tile is None else int(row_tile)
    assert Ho % tho == 0 and (tho % 8 == 0 or tho == Ho), (Ho, tho)
    n_tiles = Ho // tho

    vmem_limit = int(min(64 * 2**20,
                         max(32 * 2**20,
                             2 * _vmem_estimate(Hp, Wp, Cin, Cmid, Cout, H, W, Wo, tho))))

    out = pl.pallas_call(
        _head_kernel,
        out_shape=jax.ShapeDtypeStruct((B, Cout, Ho, Wo), jnp.float32),
        grid_spec=pltpu.PrefetchScalarGridSpec(
            num_scalar_prefetch=0,
            grid=(B, n_tiles),
            in_specs=[
                pl.BlockSpec((1, Hp, Wp, Cin), lambda b, j: (b, 0, 0, 0)),
                pl.BlockSpec((9 * Cin, Cmid), lambda b, j: (0, 0)),
                pl.BlockSpec((1, Cmid), lambda b, j: (0, 0)),
                pl.BlockSpec((Cmid, Cout), lambda b, j: (0, 0)),
                pl.BlockSpec((W, Wo), lambda b, j: (0, 0)),
                pl.BlockSpec((tho, H), lambda b, j: (j, 0)),
                pl.BlockSpec((Cout, 1), lambda b, j: (0, 0)),
            ],
            out_specs=pl.BlockSpec((1, Cout, tho, Wo), lambda b, j: (b, 0, j, 0)),
            scratch_shapes=[pltpu.VMEM((Cout, H, Wo), jnp.float32)],
        ),
        compiler_params=pltpu.CompilerParams(
            dimension_semantics=("parallel", "arbitrary"),
            vmem_limit_bytes=vmem_limit),
    )(xpad, w3m, bns, w1m, CwT, Rh, b1v)
    return out                                                 # already NCHW


def _reference_forward(x_nchw, params, scale):
    """Pure-JAX reference (lax.conv + explicit BN + separable upsample)."""
    eps = 1e-5
    fm = lax.conv_general_dilated(
        x_nchw, params["w3"], window_strides=(1, 1), padding=((1, 1), (1, 1)),
        dimension_numbers=("NCHW", "OIHW", "NCHW"))
    scale_v = params["bn_gamma"] / jnp.sqrt(params["bn_var"] + eps)
    shift_v = params["bn_beta"] - params["bn_mean"] * scale_v
    fm = fm * scale_v[None, :, None, None] + shift_v[None, :, None, None]
    fm = jnp.maximum(fm, 0.0)
    out = lax.conv_general_dilated(
        fm, params["w1"], window_strides=(1, 1), padding=((0, 0), (0, 0)),
        dimension_numbers=("NCHW", "OIHW", "NCHW"))
    out = out + params["b1"][None, :, None, None]
    B, Cout, H, W = out.shape
    Ho, Wo = H * scale, W * scale
    Rh = _interp_matrix(Ho, H)
    Cw = _interp_matrix(Wo, W)
    out = jnp.einsum("oh,bchw->bcow", Rh, out)
    out = jnp.einsum("pw,bcow->bcop", Cw, out)
    return out


def make_params(key, in_planes, out_planes, is_aux=False):
    cmid = 256 if is_aux else 64
    k = jax.random.split(key, 6)
    return {
        "w3": 0.1 * jax.random.normal(k[0], (cmid, in_planes, 3, 3), jnp.float32),
        "bn_gamma": 1.0 + 0.05 * jax.random.normal(k[1], (cmid,), jnp.float32),
        "bn_beta": 0.05 * jax.random.normal(k[2], (cmid,), jnp.float32),
        "bn_mean": 0.05 * jax.random.normal(k[3], (cmid,), jnp.float32),
        "bn_var": jnp.abs(jax.random.normal(k[4], (cmid,), jnp.float32)) + 0.5,
        "w1": 0.1 * jax.random.normal(k[5], (out_planes, cmid, 1, 1), jnp.float32),
        "b1": 0.01 * jnp.arange(out_planes, dtype=jnp.float32),
    }


if __name__ == "__main__":
    key = jax.random.PRNGKey(0)
    kx, kp = jax.random.split(key)

    B, Cin, H, W = 2, 4, 16, 16
    out_planes, scale = 3, 2

    x = jax.random.normal(kx, (B, Cin, H, W), jnp.float32)
    params = make_params(kp, Cin, out_planes, is_aux=False)

    out = jax.block_until_ready(bisenet_head_forward(x, params, scale))
    ref = jax.block_until_ready(_reference_forward(x, params, scale))
    assert out.shape == (B, out_planes, H * scale, W * scale), out.shape
    # bf16 MXU operands in the conv / 1x1 -> compare with a correspondingly loose tolerance
    assert jnp.allclose(out, ref, atol=2e-2, rtol=2e-2), \
        float(jnp.max(jnp.abs(out - ref)))

    # exercise the multi-row-tile path (scratch carried across j > 0 grid steps)
    out2 = jax.block_until_ready(bisenet_head_forward(x, params, 4, row_tile=16))
    ref2 = jax.block_until_ready(_reference_forward(x, params, 4))
    assert out2.shape == (B, out_planes, H * 4, W * 4), out2.shape
    assert jnp.allclose(out2, ref2, atol=2e-2, rtol=2e-2), \
        float(jnp.max(jnp.abs(out2 - ref2)))

    print("KERNEL_OK")
</pallas_src>

<mosaic_0001>
module attributes {stable_mosaic.version = 11 : i64} {
  func.func @_head_kernel(%arg0: i32, %arg1: i32, %arg2: memref<1x18x18x4xbf16, #tpu.memory_space<vmem>>, %arg3: memref<36x64xbf16, #tpu.memory_space<vmem>>, %arg4: memref<1x64xf32, #tpu.memory_space<vmem>>, %arg5: memref<64x3xbf16, #tpu.memory_space<vmem>>, %arg6: memref<16x32xf32, #tpu.memory_space<vmem>>, %arg7: memref<32x16xf32, #tpu.memory_space<vmem>>, %arg8: memref<3x1xf32, #tpu.memory_space<vmem>>, %arg9: memref<1x3x32x32xf32, #tpu.memory_space<vmem>>, %arg10: memref<3x16x32xf32, #tpu.memory_space<vmem>>) attributes {dimension_semantics = [#tpu.dimension_semantics<parallel>, #tpu.dimension_semantics<arbitrary>], iteration_bounds = array<i64: 2, 1>, scalar_prefetch = 0 : i64, scratch_operands = 1 : i64, tpu.core_type = #tpu.core_type<tc>, window_params = [{transform_indices = @transform_0, window_bounds = array<i64: 1, 18, 18, 4>}, {pipeline_mode = #tpu.pipeline_mode<synchronous>, transform_indices = @transform_1, window_bounds = array<i64: 36, 64>}, {pipeline_mode = #tpu.pipeline_mode<synchronous>, transform_indices = @transform_2, window_bounds = array<i64: 1, 64>}, {pipeline_mode = #tpu.pipeline_mode<synchronous>, transform_indices = @transform_3, window_bounds = array<i64: 64, 3>}, {pipeline_mode = #tpu.pipeline_mode<synchronous>, transform_indices = @transform_4, window_bounds = array<i64: 16, 32>}, {transform_indices = @transform_5, window_bounds = array<i64: 32, 16>}, {pipeline_mode = #tpu.pipeline_mode<synchronous>, transform_indices = @transform_6, window_bounds = array<i64: 3, 1>}, {transform_indices = @transform_7, window_bounds = array<i64: 1, 3, 32, 32>}]} {
    %c0_i32 = arith.constant 0 : i32
    %0 = arith.cmpi eq, %arg1, %c0_i32 : i32
    %1 = arith.extui %0 : i1 to i32
    %c0_i32_0 = arith.constant 0 : i32
    %2 = arith.cmpi ne, %1, %c0_i32_0 : i32
    scf.if %2 {
      %c0_23 = arith.constant 0 : index
      %c0_24 = arith.constant 0 : index
      %c0_25 = arith.constant 0 : index
      %c0_26 = arith.constant 0 : index
      %22 = vector.load %arg2[%c0_23, %c0_24, %c0_25, %c0_26] : memref<1x18x18x4xbf16, #tpu.memory_space<vmem>>, vector<1x18x18x4xbf16>
      %23 = vector.shape_cast %22 : vector<1x18x18x4xbf16> to vector<18x18x4xbf16>
      %24 = vector.extract_strided_slice %23 {offsets = [0, 0, 0], sizes = [18, 16, 4], strides = [1, 1, 1]} : vector<18x18x4xbf16> to vector<18x16x4xbf16>
      %25 = vector.extract_strided_slice %24 {offsets = [0, 0, 0], sizes = [16, 16, 4], strides = [1, 1, 1]} : vector<18x16x4xbf16> to vector<16x16x4xbf16>
      %26 = vector.shape_cast %25 : vector<16x16x4xbf16> to vector<256x4xbf16>
      %27 = vector.extract_strided_slice %24 {offsets = [1, 0, 0], sizes = [16, 16, 4], strides = [1, 1, 1]} : vector<18x16x4xbf16> to vector<16x16x4xbf16>
      %28 = vector.shape_cast %27 : vector<16x16x4xbf16> to vector<256x4xbf16>
      %29 = vector.extract_strided_slice %24 {offsets = [2, 0, 0], sizes = [16, 16, 4], strides = [1, 1, 1]} : vector<18x16x4xbf16> to vector<16x16x4xbf16>
      %30 = vector.shape_cast %29 : vector<16x16x4xbf16> to vector<256x4xbf16>
      %31 = vector.extract_strided_slice %23 {offsets = [0, 1, 0], sizes = [18, 16, 4], strides = [1, 1, 1]} : vector<18x18x4xbf16> to vector<18x16x4xbf16>
      %32 = vector.extract_strided_slice %31 {offsets = [0, 0, 0], sizes = [16, 16, 4], strides = [1, 1, 1]} : vector<18x16x4xbf16> to vector<16x16x4xbf16>
      %33 = vector.shape_cast %32 : vector<16x16x4xbf16> to vector<256x4xbf16>
      %34 = vector.extract_strided_slice %31 {offsets = [1, 0, 0], sizes = [16, 16, 4], strides = [1, 1, 1]} : vector<18x16x4xbf16> to vector<16x16x4xbf16>
      %35 = vector.shape_cast %34 : vector<16x16x4xbf16> to vector<256x4xbf16>
      %36 = vector.extract_strided_slice %31 {offsets = [2, 0, 0], sizes = [16, 16, 4], strides = [1, 1, 1]} : vector<18x16x4xbf16> to vector<16x16x4xbf16>
      %37 = vector.shape_cast %36 : vector<16x16x4xbf16> to vector<256x4xbf16>
      %38 = vector.extract_strided_slice %23 {offsets = [0, 2, 0], sizes = [18, 16, 4], strides = [1, 1, 1]} : vector<18x18x4xbf16> to vector<18x16x4xbf16>
      %39 = vector.extract_strided_slice %38 {offsets = [0, 0, 0], sizes = [16, 16, 4], strides = [1, 1, 1]} : vector<18x16x4xbf16> to vector<16x16x4xbf16>
      %40 = vector.shape_cast %39 : vector<16x16x4xbf16> to vector<256x4xbf16>
      %41 = vector.extract_strided_slice %38 {offsets = [1, 0, 0], sizes = [16, 16, 4], strides = [1, 1, 1]} : vector<18x16x4xbf16> to vector<16x16x4xbf16>
      %42 = vector.shape_cast %41 : vector<16x16x4xbf16> to vector<256x4xbf16>
      %43 = vector.extract_strided_slice %38 {offsets = [2, 0, 0], sizes = [16, 16, 4], strides = [1, 1, 1]} : vector<18x16x4xbf16> to vector<16x16x4xbf16>
      %44 = vector.shape_cast %43 : vector<16x16x4xbf16> to vector<256x4xbf16>
      %45 = tpu.concatenate %26, %28, %30, %33, %35, %37, %40, %42, %44 in 1 : vector<256x4xbf16>, vector<256x4xbf16>, vector<256x4xbf16>, vector<256x4xbf16>, vector<256x4xbf16>, vector<256x4xbf16>, vector<256x4xbf16>, vector<256x4xbf16>, vector<256x4xbf16> -> vector<256x36xbf16>
      %c0_27 = arith.constant 0 : index
      %c0_28 = arith.constant 0 : index
      %46 = vector.load %arg3[%c0_27, %c0_28] : memref<36x64xbf16, #tpu.memory_space<vmem>>, vector<36x64xbf16>
      %cst_29 = arith.constant dense<0.000000e+00> : vector<256x64xf32>
      %47 = tpu.matmul %45, %46, %cst_29 {dimension_numbers = #tpu.dot_dimension_numbers<[1], [0], [0], [1], [0, 0, 1, 1], [], []>} : vector<256x36xbf16>, vector<36x64xbf16>, vector<256x64xf32> -> vector<256x64xf32>
      %c0_30 = arith.constant 0 : index
      %c0_31 = arith.constant 0 : index
      %48 = vector.load %arg4[%c0_30, %c0_31] : memref<1x64xf32, #tpu.memory_space<vmem>>, vector<1x64xf32>
      %49 = vector.broadcast %48 : vector<1x64xf32> to vector<256x64xf32>
      %50 = arith.addf %47, %49 : vector<256x64xf32>
      %cst_32 = arith.constant 0.000000e+00 : f32
      %51 = vector.broadcast %cst_32 : f32 to vector<256x64xf32>
      %52 = arith.maximumf %50, %51 : vector<256x64xf32>
      %53 = arith.truncf %52 : vector<256x64xf32> to vector<256x64xbf16>
      %c0_33 = arith.constant 0 : index
      %c0_34 = arith.constant 0 : index
      %54 = vector.load %arg5[%c0_33, %c0_34] : memref<64x3xbf16, #tpu.memory_space<vmem>>, vector<64x3xbf16>
      %cst_35 = arith.constant dense<0.000000e+00> : vector<256x3xf32>
      %55 = tpu.matmul %53, %54, %cst_35 {dimension_numbers = #tpu.dot_dimension_numbers<[1], [0], [0], [1], [0, 0, 1, 1], [], []>} : vector<256x64xbf16>, vector<64x3xbf16>, vector<256x3xf32> -> vector<256x3xf32>
      %56 = vector.shape_cast %55 : vector<256x3xf32> to vector<16x16x3xf32>
      %57 = tpu.transpose %56, [0, 2, 1] : vector<16x16x3xf32> -> vector<16x3x16xf32>
      %58 = vector.extract_strided_slice %57 {offsets = [0, 0, 0], sizes = [16, 1, 16], strides = [1, 1, 1]} : vector<16x3x16xf32> to vector<16x1x16xf32>
      %59 = vector.shape_cast %58 : vector<16x1x16xf32> to vector<16x16xf32>
      %c0_36 = arith.constant 0 : index
      %c0_37 = arith.constant 0 : index
      %60 = vector.load %arg6[%c0_36, %c0_37] : memref<16x32xf32, #tpu.memory_space<vmem>>, vector<16x32xf32>
      %cst_38 = arith.constant dense<0.000000e+00> : vector<16x32xf32>
      %61 = tpu.matmul %59, %60, %cst_38 {dimension_numbers = #tpu.dot_dimension_numbers<[1], [0], [0], [1], [0, 0, 1, 1], [], []>} : vector<16x16xf32>, vector<16x32xf32>, vector<16x32xf32> -> vector<16x32xf32>
      %c0_39 = arith.constant 0 : index
      %c0_40 = arith.constant 0 : index
      %62 = vector.load %arg8[%c0_39, %c0_40] : memref<3x1xf32, #tpu.memory_space<vmem>>, vector<1x1xf32>
      %63 = vector.shape_cast %62 : vector<1x1xf32> to vector<1xf32>
      %64 = vector.shape_cast %63 : vector<1xf32> to vector<1x1xf32>
      %65 = vector.broadcast %64 : vector<1x1xf32> to vector<16x32xf32>
      %66 = arith.addf %61, %65 : vector<16x32xf32>
      %c0_41 = arith.constant 0 : index
      %c0_42 = arith.constant 0 : index
      %c0_43 = arith.constant 0 : index
      %67 = vector.load %arg10[%c0_41, %c0_42, %c0_43] : memref<3x16x32xf32, #tpu.memory_space<vmem>>, vector<1x16x32xf32>
      %68 = vector.shape_cast %67 : vector<1x16x32xf32> to vector<16x32xf32>
      %69 = vector.shape_cast %66 : vector<16x32xf32> to vector<1x16x32xf32>
      tpu.vector_store %arg10[%c0_41, %c0_42, %c0_43], %69 {strides = array<i32>} : memref<3x16x32xf32, #tpu.memory_space<vmem>>, vector<1x16x32xf32>,
      %70 = vector.extract_strided_slice %57 {offsets = [0, 1, 0], sizes = [16, 1, 16], strides = [1, 1, 1]} : vector<16x3x16xf32> to vector<16x1x16xf32>
      %71 = vector.shape_cast %70 : vector<16x1x16xf32> to vector<16x16xf32>
      %c0_44 = arith.constant 0 : index
      %c0_45 = arith.constant 0 : index
      %72 = vector.load %arg6[%c0_44, %c0_45] : memref<16x32xf32, #tpu.memory_space<vmem>>, vector<16x32xf32>
      %cst_46 = arith.constant dense<0.000000e+00> : vector<16x32xf32>
      %73 = tpu.matmul %71, %72, %cst_46 {dimension_numbers = #tpu.dot_dimension_numbers<[1], [0], [0], [1], [0, 0, 1, 1], [], []>} : vector<16x16xf32>, vector<16x32xf32>, vector<16x32xf32> -> vector<16x32xf32>
      %c1_47 = arith.constant 1 : index
      %c0_48 = arith.constant 0 : index
      %74 = vector.load %arg8[%c1_47, %c0_48] : memref<3x1xf32, #tpu.memory_space<vmem>>, vector<1x1xf32>
      %75 = vector.shape_cast %74 : vector<1x1xf32> to vector<1xf32>
      %76 = vector.shape_cast %75 : vector<1xf32> to vector<1x1xf32>
      %77 = vector.broadcast %76 : vector<1x1xf32> to vector<16x32xf32>
      %78 = arith.addf %73, %77 : vector<16x32xf32>
      %c1_49 = arith.constant 1 : index
      %c0_50 = arith.constant 0 : index
      %c0_51 = arith.constant 0 : index
      %79 = vector.load %arg10[%c1_49, %c0_50, %c0_51] : memref<3x16x32xf32, #tpu.memory_space<vmem>>, vector<1x16x32xf32>
      %80 = vector.shape_cast %79 : vector<1x16x32xf32> to vector<16x32xf32>
      %81 = vector.shape_cast %78 : vector<16x32xf32> to vector<1x16x32xf32>
      tpu.vector_store %arg10[%c1_49, %c0_50, %c0_51], %81 {strides = array<i32>} : memref<3x16x32xf32, #tpu.memory_space<vmem>>, vector<1x16x32xf32>,
      %82 = vector.extract_strided_slice %57 {offsets = [0, 2, 0], sizes = [16, 1, 16], strides = [1, 1, 1]} : vector<16x3x16xf32> to vector<16x1x16xf32>
      %83 = vector.shape_cast %82 : vector<16x1x16xf32> to vector<16x16xf32>
      %c0_52 = arith.constant 0 : index
      %c0_53 = arith.constant 0 : index
      %84 = vector.load %arg6[%c0_52, %c0_53] : memref<16x32xf32, #tpu.memory_space<vmem>>, vector<16x32xf32>
      %cst_54 = arith.constant dense<0.000000e+00> : vector<16x32xf32>
      %85 = tpu.matmul %83, %84, %cst_54 {dimension_numbers = #tpu.dot_dimension_numbers<[1], [0], [0], [1], [0, 0, 1, 1], [], []>} : vector<16x16xf32>, vector<16x32xf32>, vector<16x32xf32> -> vector<16x32xf32>
      %c2_55 = arith.constant 2 : index
      %c0_56 = arith.constant 0 : index
      %86 = vector.load %arg8[%c2_55, %c0_56] : memref<3x1xf32, #tpu.memory_space<vmem>>, vector<1x1xf32>
      %87 = vector.shape_cast %86 : vector<1x1xf32> to vector<1xf32>
      %88 = vector.shape_cast %87 : vector<1xf32> to vector<1x1xf32>
      %89 = vector.broadcast %88 : vector<1x1xf32> to vector<16x32xf32>
      %90 = arith.addf %85, %89 : vector<16x32xf32>
      %c2_57 = arith.constant 2 : index
      %c0_58 = arith.constant 0 : index
      %c0_59 = arith.constant 0 : index
      %91 = vector.load %arg10[%c2_57, %c0_58, %c0_59] : memref<3x16x32xf32, #tpu.memory_space<vmem>>, vector<1x16x32xf32>
      %92 = vector.shape_cast %91 : vector<1x16x32xf32> to vector<16x32xf32>
      %93 = vector.shape_cast %90 : vector<16x32xf32> to vector<1x16x32xf32>
      tpu.vector_store %arg10[%c2_57, %c0_58, %c0_59], %93 {strides = array<i32>} : memref<3x16x32xf32, #tpu.memory_space<vmem>>, vector<1x16x32xf32>,
    } else {
    }
    %c0 = arith.constant 0 : index
    %c0_1 = arith.constant 0 : index
    %3 = vector.load %arg7[%c0, %c0_1] : memref<32x16xf32, #tpu.memory_space<vmem>>, vector<32x16xf32>
    %c0_2 = arith.constant 0 : index
    %c0_3 = arith.constant 0 : index
    %c0_4 = arith.constant 0 : index
    %4 = vector.load %arg10[%c0_2, %c0_3, %c0_4] : memref<3x16x32xf32, #tpu.memory_space<vmem>>, vector<1x16x32xf32>
    %5 = vector.shape_cast %4 : vector<1x16x32xf32> to vector<16x32xf32>
    %cst = arith.constant dense<0.000000e+00> : vector<32x32xf32>
    %6 = tpu.matmul %3, %5, %cst {dimension_numbers = #tpu.dot_dimension_numbers<[1], [0], [0], [1], [0, 0, 1, 1], [], []>} : vector<32x16xf32>, vector<16x32xf32>, vector<32x32xf32> -> vector<32x32xf32>
    %c0_5 = arith.constant 0 : index
    %c0_6 = arith.constant 0 : index
    %c0_7 = arith.constant 0 : index
    %c0_8 = arith.constant 0 : index
    %7 = vector.load %arg9[%c0_5, %c0_6, %c0_7, %c0_8] : memref<1x3x32x32xf32, #tpu.memory_space<vmem>>, vector<1x1x32x32xf32>
    %8 = vector.shape_cast %7 : vector<1x1x32x32xf32> to vector<32x32xf32>
    %9 = vector.shape_cast %6 : vector<32x32xf32> to vector<1x1x32x32xf32>
    tpu.vector_store %arg9[%c0_5, %c0_6, %c0_7, %c0_8], %9 {strides = array<i32>} : memref<1x3x32x32xf32, #tpu.memory_space<vmem>>, vector<1x1x32x32xf32>,
    %c1 = arith.constant 1 : index
    %c0_9 = arith.constant 0 : index
    %c0_10 = arith.constant 0 : index
    %10 = vector.load %arg10[%c1, %c0_9, %c0_10] : memref<3x16x32xf32, #tpu.memory_space<vmem>>, vector<1x16x32xf32>
    %11 = vector.shape_cast %10 : vector<1x16x32xf32> to vector<16x32xf32>
    %cst_11 = arith.constant dense<0.000000e+00> : vector<32x32xf32>
    %12 = tpu.matmul %3, %11, %cst_11 {dimension_numbers = #tpu.dot_dimension_numbers<[1], [0], [0], [1], [0, 0, 1, 1], [], []>} : vector<32x16xf32>, vector<16x32xf32>, vector<32x32xf32> -> vector<32x32xf32>
    %c0_12 = arith.constant 0 : index
    %c1_13 = arith.constant 1 : index
    %c0_14 = arith.constant 0 : index
    %c0_15 = arith.constant 0 : index
    %13 = vector.load %arg9[%c0_12, %c1_13, %c0_14, %c0_15] : memref<1x3x32x32xf32, #tpu.memory_space<vmem>>, vector<1x1x32x32xf32>
    %14 = vector.shape_cast %13 : vector<1x1x32x32xf32> to vector<32x32xf32>
    %15 = vector.shape_cast %12 : vector<32x32xf32> to vector<1x1x32x32xf32>
    tpu.vector_store %arg9[%c0_12, %c1_13, %c0_14, %c0_15], %15 {strides = array<i32>} : memref<1x3x32x32xf32, #tpu.memory_space<vmem>>, vector<1x1x32x32xf32>,
    %c2 = arith.constant 2 : index
    %c0_16 = arith.constant 0 : index
    %c0_17 = arith.constant 0 : index
    %16 = vector.load %arg10[%c2, %c0_16, %c0_17] : memref<3x16x32xf32, #tpu.memory_space<vmem>>, vector<1x16x32xf32>
    %17 = vector.shape_cast %16 : vector<1x16x32xf32> to vector<16x32xf32>
    %cst_18 = arith.constant dense<0.000000e+00> : vector<32x32xf32>
    %18 = tpu.matmul %3, %17, %cst_18 {dimension_numbers = #tpu.dot_dimension_numbers<[1], [0], [0], [1], [0, 0, 1, 1], [], []>} : vector<32x16xf32>, vector<16x32xf32>, vector<32x32xf32> -> vector<32x32xf32>
    %c0_19 = arith.constant 0 : index
    %c2_20 = arith.constant 2 : index
    %c0_21 = arith.constant 0 : index
    %c0_22 = arith.constant 0 : index
    %19 = vector.load %arg9[%c0_19, %c2_20, %c0_21, %c0_22] : memref<1x3x32x32xf32, #tpu.memory_space<vmem>>, vector<1x1x32x32xf32>
    %20 = vector.shape_cast %19 : vector<1x1x32x32xf32> to vector<32x32xf32>
    %21 = vector.shape_cast %18 : vector<32x32xf32> to vector<1x1x32x32xf32>
    tpu.vector_store %arg9[%c0_19, %c2_20, %c0_21, %c0_22], %21 {strides = array<i32>} : memref<1x3x32x32xf32, #tpu.memory_space<vmem>>, vector<1x1x32x32xf32>,
    return
  }
  func.func @transform_0(%arg0: i32, %arg1: i32) -> (i32, i32, i32, i32) {
    %c0_i32 = arith.constant 0 : i32
    %c0_i32_0 = arith.constant 0 : i32
    %c0_i32_1 = arith.constant 0 : i32
    %c0_i32_2 = arith.constant 0 : i32
    return %arg0, %c0_i32, %c0_i32_0, %c0_i32_1 : i32, i32, i32, i32
  }
  func.func @transform_1(%arg0: i32, %arg1: i32) -> (i32, i32) {
    %c0_i32 = arith.constant 0 : i32
    %c0_i32_0 = arith.constant 0 : i32
    %c0_i32_1 = arith.constant 0 : i32
    return %c0_i32, %c0_i32_0 : i32, i32
  }
  func.func @transform_2(%arg0: i32, %arg1: i32) -> (i32, i32) {
    %c0_i32 = arith.constant 0 : i32
    %c0_i32_0 = arith.constant 0 : i32
    %c0_i32_1 = arith.constant 0 : i32
    return %c0_i32, %c0_i32_0 : i32, i32
  }
  func.func @transform_3(%arg0: i32, %arg1: i32) -> (i32, i32) {
    %c0_i32 = arith.constant 0 : i32
    %c0_i32_0 = arith.constant 0 : i32
    %c0_i32_1 = arith.constant 0 : i32
    return %c0_i32, %c0_i32_0 : i32, i32
  }
  func.func @transform_4(%arg0: i32, %arg1: i32) -> (i32, i32) {
    %c0_i32 = arith.constant 0 : i32
    %c0_i32_0 = arith.constant 0 : i32
    %c0_i32_1 = arith.constant 0 : i32
    return %c0_i32, %c0_i32_0 : i32, i32
  }
  func.func @transform_5(%arg0: i32, %arg1: i32) -> (i32, i32) {
    %c0_i32 = arith.constant 0 : i32
    %c0_i32_0 = arith.constant 0 : i32
    return %arg1, %c0_i32 : i32, i32
  }
  func.func @transform_6(%arg0: i32, %arg1: i32) -> (i32, i32) {
    %c0_i32 = arith.constant 0 : i32
    %c0_i32_0 = arith.constant 0 : i32
    %c0_i32_1 = arith.constant 0 : i32
    return %c0_i32, %c0_i32_0 : i32, i32
  }
  func.func @transform_7(%arg0: i32, %arg1: i32) -> (i32, i32, i32, i32) {
    %c0_i32 = arith.constant 0 : i32
    %c0_i32_0 = arith.constant 0 : i32
    %c0_i32_1 = arith.constant 0 : i32
    return %arg0, %c0_i32, %arg1, %c0_i32_0 : i32, i32, i32, i32
  }
}

</mosaic_0001>

<llo_original>
// kernel: bisenet_head_forward.1
$region0: #{bisenet_head_forward.1}
  #allocation0 [shape = 'u32[]', space=smem, size = 0x4, offset = 0x4, fixed_abs, tag = 'smem constant byte address 0x4 - core index']
  #allocation1 [shape = 'u32[144,128]{1,0:T(1,128)}', space=vmem, size = 0x12000, scoped, tag = 'internal scratch']
  #allocation2 [shape = 'f32[3,16,32]{2,1,0:T(8,128)}', space=vmem, size = 0x6000, scoped, tag = 'scratch operand']
  %s0 = inlined_call_operand.vmem [shape: bf16[2,18,18,4], index: 0, kind: input, shape index: {}]
  %s1 = inlined_call_operand.vmem [shape: bf16[36,64], index: 1, kind: input, shape index: {}]
  %s2 = inlined_call_operand.vmem [shape: f32[1,64], index: 2, kind: input, shape index: {}]
  %s3 = inlined_call_operand.vmem [shape: bf16[64,3], index: 3, kind: input, shape index: {}]
  %s4 = inlined_call_operand.vmem [shape: f32[16,32], index: 4, kind: input, shape index: {}]
  %s5 = inlined_call_operand.vmem [shape: f32[32,16], index: 5, kind: input, shape index: {}]
  %s6 = inlined_call_operand.vmem [shape: f32[3,1], index: 6, kind: input, shape index: {}]
  %s7 = inlined_call_operand.hbm [shape: f32[2,3,32,32], index: 7, kind: output, shape index: {}]
  %s8 = sld [smem:[#allocation0]]
  $region65: #{bisenet_head_forward.1} parent=0
    _
  %s10 = ssub.s32 1, %s8
  %s11 = scalar_select 0, %s10, %s8
  $region1: #{bisenet_head_forward.1} parent=0
    #allocation3 [shape = 'u8[98304]{0}', space=vmem, size = 0x18000, scoped, tag = 'output window, operand 0']
    #allocation4 [shape = 's32[2]{0}', space=sflag, size = 0x8, scoped, tag = 'scoped memory for bisenet_head_forward.1']
    %12 = vsyncpa [#allocation4], 0
    %s13 = scalar_lea.sflag [#allocation4], 1
    %14 = vsyncpa %s13, 0
    loop: start=0, step=1, limit=4
    $region2: #{bisenet_head_forward.1} parent=1 // loop_pre_header
      _
    $region3: #{bisenet_head_forward.1} parent=1 // loop_header
      %s16 = sphi 0, %s20
      %p17 = scmp.ge.s32.totalorder %s16, 4
      %s23 = sphi 0, %s35
      %s24 = sphi 0, %s31
      %s25 = sphi 0, %s23
      %s26 = sphi 0, %s24
      %s27 = sphi 0, %s25
      %s28 = sphi 0, %s26
      %s38 = sphi 0, %s40
      %s41 = sphi 0, %s38
      %s42 = sphi 0, %s41
      %s58 = sphi 0, %s42
      %s62 = sphi 0, %s62
      %s64 = sphi 0, %s62
      %s65 = sphi 0, %s64
      %s79 = sphi 0, %s65
      %s83 = sphi 0, %s83
      %s85 = sphi 0, %s83
      %s86 = sphi 0, %s85
      %s100 = sphi 0, %s86
      %s104 = sphi 0, %s104
      %s106 = sphi 0, %s104
      %s107 = sphi 0, %s106
      %s121 = sphi 0, %s107
      %s125 = sphi 0, %s125
      %s127 = sphi 0, %s125
      %s128 = sphi 0, %s127
      %s142 = sphi 0, %s128
      %s148 = sphi 0, %s150
      %s151 = sphi 0, %s148
      %s152 = sphi 0, %s151
      %s168 = sphi 0, %s152
      %s172 = sphi 0, %s172
      %s174 = sphi 0, %s172
      %s175 = sphi 0, %s174
      %s189 = sphi 0, %s175
      %s197 = sphi 0, %s199
      %s200 = sphi 0, %s197
      %s201 = sphi 0, %s200
      %s217 = sphi 0, %s201
    $region4: #{bisenet_head_forward.1} parent=1 // loop_header_branch
      %19 = sbr.rel (%p17) target = $region8
    $region5: #{bisenet_head_forward.1} parent=1 // loop_body
      %s21 = ssub.s32 %s16, 1
      %s22 = ssub.s32 %s16, 2
      %s29 = sadd.s32 1, %s24
      %p30 = scmp.ge.s32.totalorder %s29, 1
      %s31 = scalar_select %p30, 0, %s29
      %s32 = sadd.s32 1, %s23
      %s33 = scalar_select %p30, %s32, %s23
      %p34 = scmp.ge.s32.totalorder %s33, 2
      %s35 = scalar_select %p34, 0, %s33
      %s36 = ssub.s32 %s23, %s35
      %p37 = scmp.eq.s32.totalorder %s36, 0
      %s39 = sadd.s32 %s38, 1
      %s40 = scalar_select %p37, %s38, %s39
      %p43 = pneg %p37
      %p44 = scmp.eq.s32.totalorder %s16, 1
      %p45 = por %p43, %p44
      %p46 = scmp.ne.s32.totalorder %s38, %s41
      %p47 = scmp.eq.s32.totalorder %s16, 0
      %p48 = por %p46, %p47
      %p49 = scmp.ne.s32.totalorder %s38, %s41
      %p50 = scmp.eq.s32.totalorder %s21, 1
      %p51 = por %p49, %p50
      %p52 = scmp.ne.s32.totalorder %s41, %s42
      %p53 = scmp.eq.s32.totalorder %s21, 0
      %p54 = por %p52, %p53
      %p55 = scmp.ne.s32.totalorder %s41, %s42
      %p56 = scmp.eq.s32.totalorder %s22, 1
      %p57 = por %p55, %p56
      %p59 = scmp.ne.s32.totalorder %s42, %s58
      %p60 = scmp.eq.s32.totalorder %s22, 0
      %p61 = por %p59, %p60
      %s63 = sadd.s32 %s62, 1
      %p66 = scmp.eq.s32.totalorder %s16, 1
      %p67 = scmp.ne.s32.totalorder %s62, %s64
      %p68 = scmp.eq.s32.totalorder %s16, 0
      %p69 = por %p67, %p68
      %p70 = scmp.ne.s32.totalorder %s62, %s64
      %p71 = scmp.eq.s32.totalorder %s21, 1
      %p72 = por %p70, %p71
      %p73 = scmp.ne.s32.totalorder %s64, %s65
      %p74 = scmp.eq.s32.totalorder %s21, 0
      %p75 = por %p73, %p74
      %p76 = scmp.ne.s32.totalorder %s64, %s65
      %p77 = scmp.eq.s32.totalorder %s22, 1
      %p78 = por %p76, %p77
      %p80 = scmp.ne.s32.totalorder %s65, %s79
      %p81 = scmp.eq.s32.totalorder %s22, 0
      %p82 = por %p80, %p81
      %s84 = sadd.s32 %s83, 1
      %p87 = scmp.eq.s32.totalorder %s16, 1
      %p88 = scmp.ne.s32.totalorder %s83, %s85
      %p89 = scmp.eq.s32.totalorder %s16, 0
      %p90 = por %p88, %p89
      %p91 = scmp.ne.s32.totalorder %s83, %s85
      %p92 = scmp.eq.s32.totalorder %s21, 1
      %p93 = por %p91, %p92
      %p94 = scmp.ne.s32.totalorder %s85, %s86
      %p95 = scmp.eq.s32.totalorder %s21, 0
      %p96 = por %p94, %p95
      %p97 = scmp.ne.s32.totalorder %s85, %s86
      %p98 = scmp.eq.s32.totalorder %s22, 1
      %p99 = por %p97, %p98
      %p101 = scmp.ne.s32.totalorder %s86, %s100
      %p102 = scmp.eq.s32.totalorder %s22, 0
      %p103 = por %p101, %p102
      %s105 = sadd.s32 %s104, 1
      %p108 = scmp.eq.s32.totalorder %s16, 1
      %p109 = scmp.ne.s32.totalorder %s104, %s106
      %p110 = scmp.eq.s32.totalorder %s16, 0
      %p111 = por %p109, %p110
      %p112 = scmp.ne.s32.totalorder %s104, %s106
      %p113 = scmp.eq.s32.totalorder %s21, 1
      %p114 = por %p112, %p113
      %p115 = scmp.ne.s32.totalorder %s106, %s107
      %p116 = scmp.eq.s32.totalorder %s21, 0
      %p117 = por %p115, %p116
      %p118 = scmp.ne.s32.totalorder %s106, %s107
      %p119 = scmp.eq.s32.totalorder %s22, 1
      %p120 = por %p118, %p119
      %p122 = scmp.ne.s32.totalorder %s107, %s121
      %p123 = scmp.eq.s32.totalorder %s22, 0
      %p124 = por %p122, %p123
      %s126 = sadd.s32 %s125, 1
      %p129 = scmp.eq.s32.totalorder %s16, 1
      %p130 = scmp.ne.s32.totalorder %s125, %s127
      %p131 = scmp.eq.s32.totalorder %s16, 0
      %p132 = por %p130, %p131
      %p133 = scmp.ne.s32.totalorder %s125, %s127
      %p134 = scmp.eq.s32.totalorder %s21, 1
      %p135 = por %p133, %p134
      %p136 = scmp.ne.s32.totalorder %s127, %s128
      %p137 = scmp.eq.s32.totalorder %s21, 0
      %p138 = por %p136, %p137
      %p139 = scmp.ne.s32.totalorder %s127, %s128
      %p140 = scmp.eq.s32.totalorder %s22, 1
      %p141 = por %p139, %p140
      %p143 = scmp.ne.s32.totalorder %s128, %s142
      %p144 = scmp.eq.s32.totalorder %s22, 0
      %p145 = por %p143, %p144
      %s146 = ssub.s32 %s24, %s31
      %p147 = scmp.eq.s32.totalorder %s146, 0
      %s149 = sadd.s32 %s148, 1
      %s150 = scalar_select %p147, %s148, %s149
      %p153 = pneg %p147
      %p154 = scmp.eq.s32.totalorder %s16, 1
      %p155 = por %p153, %p154
      %p156 = scmp.ne.s32.totalorder %s148, %s151
      %p157 = scmp.eq.s32.totalorder %s16, 0
      %p158 = por %p156, %p157
      %p159 = scmp.ne.s32.totalorder %s148, %s151
      %p160 = scmp.eq.s32.totalorder %s21, 1
      %p161 = por %p159, %p160
      %p162 = scmp.ne.s32.totalorder %s151, %s152
      %p163 = scmp.eq.s32.totalorder %s21, 0
      %p164 = por %p162, %p163
      %p165 = scmp.ne.s32.totalorder %s151, %s152
      %p166 = scmp.eq.s32.totalorder %s22, 1
      %p167 = por %p165, %p166
      %p169 = scmp.ne.s32.totalorder %s152, %s168
      %p170 = scmp.eq.s32.totalorder %s22, 0
      %p171 = por %p169, %p170
      %s173 = sadd.s32 %s172, 1
      %p176 = scmp.eq.s32.totalorder %s16, 1
      %p177 = scmp.ne.s32.totalorder %s172, %s174
      %p178 = scmp.eq.s32.totalorder %s16, 0
      %p179 = por %p177, %p178
      %p180 = scmp.ne.s32.totalorder %s172, %s174
      %p181 = scmp.eq.s32.totalorder %s21, 1
      %p182 = por %p180, %p181
      %p183 = scmp.ne.s32.totalorder %s174, %s175
      %p184 = scmp.eq.s32.totalorder %s21, 0
      %p185 = por %p183, %p184
      %p186 = scmp.ne.s32.totalorder %s174, %s175
      %p187 = scmp.eq.s32.totalorder %s22, 1
      %p188 = por %p186, %p187
      %p190 = scmp.ne.s32.totalorder %s175, %s189
      %p191 = scmp.eq.s32.totalorder %s22, 0
      %p192 = por %p190, %p191
      %s193 = ssub.s32 %s23, %s35
      %s194 = ssub.s32 %s24, %s31
      %s195 = sor.u32 %s193, %s194
      %p196 = scmp.eq.s32.totalorder %s195, 0
      %s198 = sadd.s32 %s197, 1
      %s199 = scalar_select %p196, %s197, %s198
      %p202 = pneg %p196
      %p203 = scmp.eq.s32.totalorder %s16, 1
      %p204 = por %p202, %p203
      %p205 = scmp.ne.s32.totalorder %s197, %s200
      %p206 = scmp.eq.s32.totalorder %s16, 0
      %p207 = por %p205, %p206
      %p208 = scmp.ne.s32.totalorder %s197, %s200
      %p209 = scmp.eq.s32.totalorder %s21, 1
      %p210 = por %p208, %p209
      %p211 = scmp.ne.s32.totalorder %s200, %s201
      %p212 = scmp.eq.s32.totalorder %s21, 0
      %p213 = por %p211, %p212
      %p214 = scmp.ne.s32.totalorder %s200, %s201
      %p215 = scmp.eq.s32.totalorder %s22, 1
      %p216 = por %p214, %p215
      %p218 = scmp.ne.s32.totalorder %s201, %s217
      %p219 = scmp.eq.s32.totalorder %s22, 0
      %p220 = por %p218, %p219
      %p221 = scmp.le.s32.totalorder 1, %s16
      %p222 = scmp.lt.s32.totalorder %s16, 3
      %p223 = pnand %p221, %p222
      %p224 = pneg %p223
      // Predicated region
      $region9: #{bisenet_head_forward.1} parent=5 // pred_check
        _
      $region10: #{bisenet_head_forward.1} parent=5 // pred_check_branch
        %226 = sbr.rel (%p223) target = $region12
      $region11: #{bisenet_head_forward.1} parent=5 // pred_region
        %s227 = ssub.s32 %s16, 1
        // Predicated region
        $region13: #{bisenet_head_forward.1} parent=11 // pred_check
          %p228 = pneg %p75
        $region14: #{bisenet_head_forward.1} parent=11 // pred_check_branch
          %230 = sbr.rel (%p228) target = $region16
        $region15: #{bisenet_head_forward.1} parent=11 // pred_region
          _
        $region16: #{bisenet_head_forward.1} parent=11 // pred_fallthru
          _
        // Predicated region
        $region17: #{bisenet_head_forward.1} parent=11 // pred_check
          %p231 = pneg %p96
        $region18: #{bisenet_head_forward.1} parent=11 // pred_check_branch
          %233 = sbr.rel (%p231) target = $region20
        $region19: #{bisenet_head_forward.1} parent=11 // pred_region
          _
        $region20: #{bisenet_head_forward.1} parent=11 // pred_fallthru
          _
        // Predicated region
        $region21: #{bisenet_head_forward.1} parent=11 // pred_check
          %p234 = pneg %p117
        $region22: #{bisenet_head_forward.1} parent=11 // pred_check_branch
          %236 = sbr.rel (%p234) target = $region24
        $region23: #{bisenet_head_forward.1} parent=11 // pred_region
          _
        $region24: #{bisenet_head_forward.1} parent=11 // pred_fallthru
          _
        // Predicated region
        $region25: #{bisenet_head_forward.1} parent=11 // pred_check
          %p237 = pneg %p138
        $region26: #{bisenet_head_forward.1} parent=11 // pred_check_branch
          %239 = sbr.rel (%p237) target = $region28
        $region27: #{bisenet_head_forward.1} parent=11 // pred_region
          _
        $region28: #{bisenet_head_forward.1} parent=11 // pred_fallthru
          _
        // Predicated region
        $region29: #{bisenet_head_forward.1} parent=11 // pred_check
          %p240 = pneg %p164
        $region30: #{bisenet_head_forward.1} parent=11 // pred_check_branch
          %242 = sbr.rel (%p240) target = $region32
        $region31: #{bisenet_head_forward.1} parent=11 // pred_region
          %s243 = smul.u32 4, %s26
          %p244 = scmp.lt.s32.totalorder %s243, 3
          %s245 = scalar_select %p244, %s243, 3
          %s246 = smul.addr %s245, 8
          %s247 = scalar_lea.vmem %s5, %s246
          %s248 = smul.u32 4, %s26
        $region32: #{bisenet_head_forward.1} parent=11 // pred_fallthru
          _
        // Predicated region
        $region33: #{bisenet_head_forward.1} parent=11 // pred_check
          %p249 = pneg %p185
        $region34: #{bisenet_head_forward.1} parent=11 // pred_check_branch
          %251 = sbr.rel (%p249) target = $region36
        $region35: #{bisenet_head_forward.1} parent=11 // pred_region
          _
        $region36: #{bisenet_head_forward.1} parent=11 // pred_fallthru
          _
      $region12: #{bisenet_head_forward.1} parent=5 // pred_fallthru
        _
      %p252 = scmp.lt.s32.totalorder %s16, 2
      // Predicated region
      $region37: #{bisenet_head_forward.1} parent=5 // pred_check
        %p253 = pneg %p252
      $region38: #{bisenet_head_forward.1} parent=5 // pred_check_branch
        %255 = sbr.rel (%p253) target = $region40
      $region39: #{bisenet_head_forward.1} parent=5 // pred_region
        // Predicated region
        $region41: #{bisenet_head_forward.1} parent=39 // pred_check
          %p256 = pneg %p48
        $region42: #{bisenet_head_forward.1} parent=39 // pred_check_branch
          %258 = sbr.rel (%p256) target = $region44
        $region43: #{bisenet_head_forward.1} parent=39 // pred_region
          %p259 = scmp.lt.s32.totalorder %s23, 1
          %s260 = scalar_select %p259, %s23, 1
          %s261 = smul.addr %s260, 54
          %s262 = smul.addr %s261, 4
          %s263 = scalar_lea.vmem %s0, %s262
        $region44: #{bisenet_head_forward.1} parent=39 // pred_fallthru
          _
      $region40: #{bisenet_head_forward.1} parent=5 // pred_fallthru
        _
      %p264 = scmp.le.s32.totalorder 1, %s16
      %p265 = scmp.lt.s32.totalorder %s16, 3
      %p266 = pnand %p264, %p265
      %p267 = pneg %p266
      // Predicated region
      $region45: #{bisenet_head_forward.1} parent=5 // pred_check
        _
      $region46: #{bisenet_head_forward.1} parent=5 // pred_check_branch
        %269 = sbr.rel (%p266) target = $region48
      $region47: #{bisenet_head_forward.1} parent=5 // pred_region
        %s270 = ssub.s32 %s16, 1
        %p271 = scmp.lt.s32.totalorder %s25, 1
        %s272 = scalar_select %p271, %s25, 1
        %s273 = smul.addr %s272, 54
        %s274 = smul.addr %s273, 4
        %s275 = scalar_lea.vmem %s0, %s274
        %p276 = pneg %p54
        %p277 = pneg %p51
        %p278 = pneg %p75
        %p279 = pneg %p72
        %p280 = pneg %p96
        %p281 = pneg %p93
        %p282 = pneg %p117
        %p283 = pneg %p114
        %p284 = pneg %p138
        %p285 = pneg %p135
        %s286 = smul.u32 4, %s26
        %p287 = scmp.lt.s32.totalorder %s286, 3
        %s288 = scalar_select %p287, %s286, 3
        %s289 = smul.addr %s288, 8
        %s290 = scalar_lea.vmem %s5, %s289
        %p291 = pneg %p164
        %p292 = pneg %p161
        %p293 = pneg %p185
        %p294 = pneg %p182
        %p295 = pneg %p213
        %p296 = pneg %p210
        %s297 = sand.u32 %s200, 1
        %s298 = scalar_lea.sflag [#allocation4], %s297
        %s299 = sand.u32 %s200, 1
        %s300 = smul.addr %s299, 96
        %s301 = scalar_lea.vmem [#allocation3], %s300
        %p302 = scmp.lt.s32.totalorder %s25, 1
        %s303 = scalar_select %p302, %s25, 1
        %s304 = smul.addr %s303, 54
        %s305 = smul.addr %s304, 4
        %s306 = scalar_lea.vmem %s0, %s305
        %s307 = smul.u32 4, %s26
        %p308 = scmp.lt.s32.totalorder %s307, 3
        %s309 = scalar_select %p308, %s307, 3
        %s310 = smul.addr %s309, 8
        %s311 = scalar_lea.vmem %s5, %s310
        %s312 = smul.u32 4, %s26
        %s313 = smul.u32 4, %s26
        %p315 = scmp.eq.s32.totalorder %s26, 0
        // Predicated region
        $region49: #{bisenet_head_forward.1} parent=47 // pred_check
          %p316 = pneg %p315
        $region50: #{bisenet_head_forward.1} parent=47 // pred_check_branch
          %318 = sbr.rel (%p316) target = $region52
        $region51: #{bisenet_head_forward.1} parent=47 // pred_region
          %v319 = vld [vmem:[%s306] sm:$0xf]
          %v320 = vld [vmem:[%s306 + $0x4] sm:$0xf]
          %v321 = vld [vmem:[%s306 + $0x8] sm:$0x1]
          %v322 = vld [vmem:[%s306 + $0xc] sm:$0xf]
          %v323 = vld [vmem:[%s306 + $0x10] sm:$0xf]
          %v324 = vld [vmem:[%s306 + $0x14] sm:$0x1]
          %v325 = vld [vmem:[%s306 + $0x18] sm:$0xf]
          %v326 = vld [vmem:[%s306 + $0x1c] sm:$0xf]
          %v327 = vld [vmem:[%s306 + $0x20] sm:$0x1]
          %v328 = vld [vmem:[%s306 + $0x24] sm:$0xf]
          %v329 = vld [vmem:[%s306 + $0x28] sm:$0xf]
          %v330 = vld [vmem:[%s306 + $0x2c] sm:$0x1]
          %v331 = vld [vmem:[%s306 + $0x30] sm:$0xf]
          %v332 = vld [vmem:[%s306 + $0x34] sm:$0xf]
          %v333 = vld [vmem:[%s306 + $0x38] sm:$0x1]
          %v334 = vld [vmem:[%s306 + $0x3c] sm:$0xf]
          %v335 = vld [vmem:[%s306 + $0x40] sm:$0xf]
          %v336 = vld [vmem:[%s306 + $0x44] sm:$0x1]
          %v337 = vld [vmem:[%s306 + $0x48] sm:$0xf]
          %v338 = vld [vmem:[%s306 + $0x4c] sm:$0xf]
          %v339 = vld [vmem:[%s306 + $0x50] sm:$0x1]
          %v340 = vld [vmem:[%s306 + $0x54] sm:$0xf]
          %v341 = vld [vmem:[%s306 + $0x58] sm:$0xf]
          %v342 = vld [vmem:[%s306 + $0x5c] sm:$0x1]
          %v343 = vld [vmem:[%s306 + $0x60] sm:$0xf]
          %v344 = vld [vmem:[%s306 + $0x64] sm:$0xf]
          %v345 = vld [vmem:[%s306 + $0x68] sm:$0x1]
          %v346 = vld [vmem:[%s306 + $0x6c] sm:$0xf]
          %v347 = vld [vmem:[%s306 + $0x70] sm:$0xf]
          %v348 = vld [vmem:[%s306 + $0x74] sm:$0x1]
          %v349 = vld [vmem:[%s306 + $0x78] sm:$0xf]
          %v350 = vld [vmem:[%s306 + $0x7c] sm:$0xf]
          %v351 = vld [vmem:[%s306 + $0x80] sm:$0x1]
          %v352 = vld [vmem:[%s306 + $0x84] sm:$0xf]
          %v353 = vld [vmem:[%s306 + $0x88] sm:$0xf]
          %v354 = vld [vmem:[%s306 + $0x8c] sm:$0x1]
          %v355 = vld [vmem:[%s306 + $0x90] sm:$0xf]
          %v356 = vld [vmem:[%s306 + $0x94] sm:$0xf]
          %v357 = vld [vmem:[%s306 + $0x98] sm:$0x1]
          %v358 = vld [vmem:[%s306 + $0x9c] sm:$0xf]
          %v359 = vld [vmem:[%s306 + $0xa0] sm:$0xf]
          %v360 = vld [vmem:[%s306 + $0xa4] sm:$0x1]
          %v361 = vld [vmem:[%s306 + $0xa8] sm:$0xf]
          %v362 = vld [vmem:[%s306 + $0xac] sm:$0xf]
          %v363 = vld [vmem:[%s306 + $0xb0] sm:$0x1]
          %v364 = vld [vmem:[%s306 + $0xb4] sm:$0xf]
          %v365 = vld [vmem:[%s306 + $0xb8] sm:$0xf]
          %v366 = vld [vmem:[%s306 + $0xbc] sm:$0x1]
          %v367 = vld [vmem:[%s306 + $0xc0] sm:$0xf]
          %v368 = vld [vmem:[%s306 + $0xc4] sm:$0xf]
          %v369 = vld [vmem:[%s306 + $0xc8] sm:$0x1]
          %v370 = vld [vmem:[%s306 + $0xcc] sm:$0xf]
          %v371 = vld [vmem:[%s306 + $0xd0] sm:$0xf]
          %v372 = vld [vmem:[%s306 + $0xd4] sm:$0x1]
          %vm373 = vsmask.f32 3328
          %vm374 = vsmask.f32 7440
          %vm375 = vmor %vm373, %vm374
          %v377 = vshrl.u32 %v319, 16
          %v379 = vrot.slane %v377, 4
          %v380 = vshll.u32 %v319, 16
          %v382 = vrot.slane %v380, 5
          %v383 = vor.u32 %v379, %v382
          %v384 = vrot.slane %v383, 4
          %v386 = vshll.u32 %v320, 16
          %v388 = vrot.slane %v386, 5
          %v389 = vsel %vm375, %v384, %v388
          %v390 = vshrl.u32 %v320, 16
          %v392 = vrot.slane %v390, 4
          %v393 = vor.u32 %v392, %v388
          %v394 = vrot.slane %v393, 4
          %v396 = vshll.u32 %v321, 16
          %v398 = vrot.slane %v396, 5
          %v399 = vsel %vm375, %v394, %v398
          %v401 = vshrl.u32 %v322, 16
          %v403 = vrot.slane %v401, 4
          %v404 = vshll.u32 %v322, 16
          %v406 = vrot.slane %v404, 5
          %v407 = vor.u32 %v403, %v406
          %v408 = vrot.slane %v407, 4
          %v410 = vshll.u32 %v323, 16
          %v412 = vrot.slane %v410, 5
          %v413 = vsel %vm375, %v408, %v412
          %v414 = vshrl.u32 %v323, 16
          %v416 = vrot.slane %v414, 4
          %v417 = vor.u32 %v416, %v412
          %v418 = vrot.slane %v417, 4
          %v420 = vshll.u32 %v324, 16
          %v422 = vrot.slane %v420, 5
          %v423 = vsel %vm375, %v418, %v422
          %v425 = vshrl.u32 %v325, 16
          %v427 = vrot.slane %v425, 4
          %v428 = vshll.u32 %v325, 16
          %v430 = vrot.slane %v428, 5
          %v431 = vor.u32 %v427, %v430
          %v432 = vrot.slane %v431, 4
          %v434 = vshll.u32 %v326, 16
          %v436 = vrot.slane %v434, 5
          %v437 = vsel %vm375, %v432, %v436
          %v438 = vshrl.u32 %v326, 16
          %v440 = vrot.slane %v438, 4
          %v441 = vor.u32 %v440, %v436
          %v442 = vrot.slane %v441, 4
          %v444 = vshll.u32 %v327, 16
          %v446 = vrot.slane %v444, 5
          %v447 = vsel %vm375, %v442, %v446
          %v449 = vshrl.u32 %v328, 16
          %v451 = vrot.slane %v449, 4
          %v452 = vshll.u32 %v328, 16
          %v454 = vrot.slane %v452, 5
          %v455 = vor.u32 %v451, %v454
          %v456 = vrot.slane %v455, 4
          %v458 = vshll.u32 %v329, 16
          %v460 = vrot.slane %v458, 5
          %v461 = vsel %vm375, %v456, %v460
          %v462 = vshrl.u32 %v329, 16
          %v464 = vrot.slane %v462, 4
          %v465 = vor.u32 %v464, %v460
          %v466 = vrot.slane %v465, 4
          %v468 = vshll.u32 %v330, 16
          %v470 = vrot.slane %v468, 5
          %v471 = vsel %vm375, %v466, %v470
          %v473 = vshrl.u32 %v331, 16
          %v475 = vrot.slane %v473, 4
          %v476 = vshll.u32 %v331, 16
          %v478 = vrot.slane %v476, 5
          %v479 = vor.u32 %v475, %v478
          %v480 = vrot.slane %v479, 4
          %v482 = vshll.u32 %v332, 16
          %v484 = vrot.slane %v482, 5
          %v485 = vsel %vm375, %v480, %v484
          %v486 = vshrl.u32 %v332, 16
          %v488 = vrot.slane %v486, 4
          %v489 = vor.u32 %v488, %v484
          %v490 = vrot.slane %v489, 4
          %v492 = vshll.u32 %v333, 16
          %v494 = vrot.slane %v492, 5
          %v495 = vsel %vm375, %v490, %v494
          %v497 = vshrl.u32 %v334, 16
          %v499 = vrot.slane %v497, 4
          %v500 = vshll.u32 %v334, 16
          %v502 = vrot.slane %v500, 5
          %v503 = vor.u32 %v499, %v502
          %v504 = vrot.slane %v503, 4
          %v506 = vshll.u32 %v335, 16
          %v508 = vrot.slane %v506, 5
          %v509 = vsel %vm375, %v504, %v508
          %v510 = vshrl.u32 %v335, 16
          %v512 = vrot.slane %v510, 4
          %v513 = vor.u32 %v512, %v508
          %v514 = vrot.slane %v513, 4
          %v516 = vshll.u32 %v336, 16
          %v518 = vrot.slane %v516, 5
          %v519 = vsel %vm375, %v514, %v518
          %v521 = vshrl.u32 %v337, 16
          %v523 = vrot.slane %v521, 4
          %v524 = vshll.u32 %v337, 16
          %v526 = vrot.slane %v524, 5
          %v527 = vor.u32 %v523, %v526
          %v528 = vrot.slane %v527, 4
          %v530 = vshll.u32 %v338, 16
          %v532 = vrot.slane %v530, 5
          %v533 = vsel %vm375, %v528, %v532
          %v534 = vshrl.u32 %v338, 16
          %v536 = vrot.slane %v534, 4
          %v537 = vor.u32 %v536, %v532
          %v538 = vrot.slane %v537, 4
          %v540 = vshll.u32 %v339, 16
          %v542 = vrot.slane %v540, 5
          %v543 = vsel %vm375, %v538, %v542
          %v545 = vshrl.u32 %v340, 16
          %v547 = vrot.slane %v545, 4
          %v548 = vshll.u32 %v340, 16
          %v550 = vrot.slane %v548, 5
          %v551 = vor.u32 %v547, %v550
          %v552 = vrot.slane %v551, 4
          %v554 = vshll.u32 %v341, 16
          %v556 = vrot.slane %v554, 5
          %v557 = vsel %vm375, %v552, %v556
          %v558 = vshrl.u32 %v341, 16
          %v560 = vrot.slane %v558, 4
          %v561 = vor.u32 %v560, %v556
          %v562 = vrot.slane %v561, 4
          %v564 = vshll.u32 %v342, 16
          %v566 = vrot.slane %v564, 5
          %v567 = vsel %vm375, %v562, %v566
          %v569 = vshrl.u32 %v343, 16
          %v571 = vrot.slane %v569, 4
          %v572 = vshll.u32 %v343, 16
          %v574 = vrot.slane %v572, 5
          %v575 = vor.u32 %v571, %v574
          %v576 = vrot.slane %v575, 4
          %v578 = vshll.u32 %v344, 16
          %v580 = vrot.slane %v578, 5
          %v581 = vsel %vm375, %v576, %v580
          %v582 = vshrl.u32 %v344, 16
          %v584 = vrot.slane %v582, 4
          %v585 = vor.u32 %v584, %v580
          %v586 = vrot.slane %v585, 4
          %v588 = vshll.u32 %v345, 16
          %v590 = vrot.slane %v588, 5
          %v591 = vsel %vm375, %v586, %v590
          %v593 = vshrl.u32 %v346, 16
          %v595 = vrot.slane %v593, 4
          %v596 = vshll.u32 %v346, 16
          %v598 = vrot.slane %v596, 5
          %v599 = vor.u32 %v595, %v598
          %v600 = vrot.slane %v599, 4
          %v602 = vshll.u32 %v347, 16
          %v604 = vrot.slane %v602, 5
          %v605 = vsel %vm375, %v600, %v604
          %v606 = vshrl.u32 %v347, 16
          %v608 = vrot.slane %v606, 4
          %v609 = vor.u32 %v608, %v604
          %v610 = vrot.slane %v609, 4
          %v612 = vshll.u32 %v348, 16
          %v614 = vrot.slane %v612, 5
          %v615 = vsel %vm375, %v610, %v614
          %v617 = vshrl.u32 %v349, 16
          %v619 = vrot.slane %v617, 4
          %v620 = vshll.u32 %v349, 16
          %v622 = vrot.slane %v620, 5
          %v623 = vor.u32 %v619, %v622
          %v624 = vrot.slane %v623, 4
          %v626 = vshll.u32 %v350, 16
          %v628 = vrot.slane %v626, 5
          %v629 = vsel %vm375, %v624, %v628
          %v630 = vshrl.u32 %v350, 16
          %v632 = vrot.slane %v630, 4
          %v633 = vor.u32 %v632, %v628
          %v634 = vrot.slane %v633, 4
          %v636 = vshll.u32 %v351, 16
          %v638 = vrot.slane %v636, 5
          %v639 = vsel %vm375, %v634, %v638
          %v641 = vshrl.u32 %v352, 16
          %v643 = vrot.slane %v641, 4
          %v644 = vshll.u32 %v352, 16
          %v646 = vrot.slane %v644, 5
          %v647 = vor.u32 %v643, %v646
          %v648 = vrot.slane %v647, 4
          %v650 = vshll.u32 %v353, 16
          %v652 = vrot.slane %v650, 5
          %v653 = vsel %vm375, %v648, %v652
          %v654 = vshrl.u32 %v353, 16
          %v656 = vrot.slane %v654, 4
          %v657 = vor.u32 %v656, %v652
          %v658 = vrot.slane %v657, 4
          %v660 = vshll.u32 %v354, 16
          %v662 = vrot.slane %v660, 5
          %v663 = vsel %vm375, %v658, %v662
          %v665 = vshrl.u32 %v355, 16
          %v667 = vrot.slane %v665, 4
          %v668 = vshll.u32 %v355, 16
          %v670 = vrot.slane %v668, 5
          %v671 = vor.u32 %v667, %v670
          %v672 = vrot.slane %v671, 4
          %v674 = vshll.u32 %v356, 16
          %v676 = vrot.slane %v674, 5
          %v677 = vsel %vm375, %v672, %v676
          %v678 = vshrl.u32 %v356, 16
          %v680 = vrot.slane %v678, 4
          %v681 = vor.u32 %v680, %v676
          %v682 = vrot.slane %v681, 4
          %v684 = vshll.u32 %v357, 16
          %v686 = vrot.slane %v684, 5
          %v687 = vsel %vm375, %v682, %v686
          %v689 = vshrl.u32 %v358, 16
          %v691 = vrot.slane %v689, 4
          %v692 = vshll.u32 %v358, 16
          %v694 = vrot.slane %v692, 5
          %v695 = vor.u32 %v691, %v694
          %v696 = vrot.slane %v695, 4
          %v698 = vshll.u32 %v359, 16
          %v700 = vrot.slane %v698, 5
          %v701 = vsel %vm375, %v696, %v700
          %v702 = vshrl.u32 %v359, 16
          %v704 = vrot.slane %v702, 4
          %v705 = vor.u32 %v704, %v700
          %v706 = vrot.slane %v705, 4
          %v708 = vshll.u32 %v360, 16
          %v710 = vrot.slane %v708, 5
          %v711 = vsel %vm375, %v706, %v710
          %v713 = vshrl.u32 %v361, 16
          %v715 = vrot.slane %v713, 4
          %v716 = vshll.u32 %v361, 16
          %v718 = vrot.slane %v716, 5
          %v719 = vor.u32 %v715, %v718
          %v720 = vrot.slane %v719, 4
          %v722 = vshll.u32 %v362, 16
          %v724 = vrot.slane %v722, 5
          %v725 = vsel %vm375, %v720, %v724
          %v726 = vshrl.u32 %v362, 16
          %v728 = vrot.slane %v726, 4
          %v729 = vor.u32 %v728, %v724
          %v730 = vrot.slane %v729, 4
          %v732 = vshll.u32 %v363, 16
          %v734 = vrot.slane %v732, 5
          %v735 = vsel %vm375, %v730, %v734
          %v737 = vshrl.u32 %v364, 16
          %v739 = vrot.slane %v737, 4
          %v740 = vshll.u32 %v364, 16
          %v742 = vrot.slane %v740, 5
          %v743 = vor.u32 %v739, %v742
          %v744 = vrot.slane %v743, 4
          %v746 = vshll.u32 %v365, 16
          %v748 = vrot.slane %v746, 5
          %v749 = vsel %vm375, %v744, %v748
          %v750 = vshrl.u32 %v365, 16
          %v752 = vrot.slane %v750, 4
          %v753 = vor.u32 %v752, %v748
          %v754 = vrot.slane %v753, 4
          %v756 = vshll.u32 %v366, 16
          %v758 = vrot.slane %v756, 5
          %v759 = vsel %vm375, %v754, %v758
          %v761 = vshrl.u32 %v367, 16
          %v763 = vrot.slane %v761, 4
          %v764 = vshll.u32 %v367, 16
          %v766 = vrot.slane %v764, 5
          %v767 = vor.u32 %v763, %v766
          %v768 = vrot.slane %v767, 4
          %v770 = vshll.u32 %v368, 16
          %v772 = vrot.slane %v770, 5
          %v773 = vsel %vm375, %v768, %v772
          %v774 = vshrl.u32 %v368, 16
          %v776 = vrot.slane %v774, 4
          %v777 = vor.u32 %v776, %v772
          %v778 = vrot.slane %v777, 4
          %v780 = vshll.u32 %v369, 16
          %v782 = vrot.slane %v780, 5
          %v783 = vsel %vm375, %v778, %v782
          %v785 = vshrl.u32 %v370, 16
          %v787 = vrot.slane %v785, 4
          %v788 = vshll.u32 %v370, 16
          %v790 = vrot.slane %v788, 5
          %v791 = vor.u32 %v787, %v790
          %v792 = vrot.slane %v791, 4
          %v794 = vshll.u32 %v371, 16
          %v796 = vrot.slane %v794, 5
          %v797 = vsel %vm375, %v792, %v796
          %v798 = vshrl.u32 %v371, 16
          %v800 = vrot.slane %v798, 4
          %v801 = vor.u32 %v800, %v796
          %v802 = vrot.slane %v801, 4
          %v804 = vshll.u32 %v372, 16
          %v806 = vrot.slane %v804, 5
          %v807 = vsel %vm375, %v802, %v806
          %vm856 = vcmask 1042432
          %vm857 = vcmask 1046532
          %vm858 = vmor %vm856, %vm857
          %v859 = vrot.slane %v319, 5
          %v860 = vrot.slane %v859, 4
          %v861 = vrot.slane %v320, 5
          %v862 = vsel %vm858, %v860, %v861
          %v863 = vrot.slane %v861, 4
          %v864 = vrot.slane %v321, 5
          %v865 = vsel %vm858, %v863, %v864
          %v866 = vrot.slane %v322, 5
          %v867 = vrot.slane %v866, 4
          %v868 = vrot.slane %v323, 5
          %v869 = vsel %vm858, %v867, %v868
          %v870 = vrot.slane %v868, 4
          %v871 = vrot.slane %v324, 5
          %v872 = vsel %vm858, %v870, %v871
          %v873 = vrot.slane %v325, 5
          %v874 = vrot.slane %v873, 4
          %v875 = vrot.slane %v326, 5
          %v876 = vsel %vm858, %v874, %v875
          %v877 = vrot.slane %v875, 4
          %v878 = vrot.slane %v327, 5
          %v879 = vsel %vm858, %v877, %v878
          %v880 = vrot.slane %v328, 5
          %v881 = vrot.slane %v880, 4
          %v882 = vrot.slane %v329, 5
          %v883 = vsel %vm858, %v881, %v882
          %v884 = vrot.slane %v882, 4
          %v885 = vrot.slane %v330, 5
          %v886 = vsel %vm858, %v884, %v885
          %v887 = vrot.slane %v331, 5
          %v888 = vrot.slane %v887, 4
          %v889 = vrot.slane %v332, 5
          %v890 = vsel %vm858, %v888, %v889
          %v891 = vrot.slane %v889, 4
          %v892 = vrot.slane %v333, 5
          %v893 = vsel %vm858, %v891, %v892
          %v894 = vrot.slane %v334, 5
          %v895 = vrot.slane %v894, 4
          %v896 = vrot.slane %v335, 5
          %v897 = vsel %vm858, %v895, %v896
          %v898 = vrot.slane %v896, 4
          %v899 = vrot.slane %v336, 5
          %v900 = vsel %vm858, %v898, %v899
          %v901 = vrot.slane %v337, 5
          %v902 = vrot.slane %v901, 4
          %v903 = vrot.slane %v338, 5
          %v904 = vsel %vm858, %v902, %v903
          %v905 = vrot.slane %v903, 4
          %v906 = vrot.slane %v339, 5
          %v907 = vsel %vm858, %v905, %v906
          %v908 = vrot.slane %v340, 5
          %v909 = vrot.slane %v908, 4
          %v910 = vrot.slane %v341, 5
          %v911 = vsel %vm858, %v909, %v910
          %v912 = vrot.slane %v910, 4
          %v913 = vrot.slane %v342, 5
          %v914 = vsel %vm858, %v912, %v913
          %v915 = vrot.slane %v343, 5
          %v916 = vrot.slane %v915, 4
          %v917 = vrot.slane %v344, 5
          %v918 = vsel %vm858, %v916, %v917
          %v919 = vrot.slane %v917, 4
          %v920 = vrot.slane %v345, 5
          %v921 = vsel %vm858, %v919, %v920
          %v922 = vrot.slane %v346, 5
          %v923 = vrot.slane %v922, 4
          %v924 = vrot.slane %v347, 5
          %v925 = vsel %vm858, %v923, %v924
          %v926 = vrot.slane %v924, 4
          %v927 = vrot.slane %v348, 5
          %v928 = vsel %vm858, %v926, %v927
          %v929 = vrot.slane %v349, 5
          %v930 = vrot.slane %v929, 4
          %v931 = vrot.slane %v350, 5
          %v932 = vsel %vm858, %v930, %v931
          %v933 = vrot.slane %v931, 4
          %v934 = vrot.slane %v351, 5
          %v935 = vsel %vm858, %v933, %v934
          %v936 = vrot.slane %v352, 5
          %v937 = vrot.slane %v936, 4
          %v938 = vrot.slane %v353, 5
          %v939 = vsel %vm858, %v937, %v938
          %v940 = vrot.slane %v938, 4
          %v941 = vrot.slane %v354, 5
          %v942 = vsel %vm858, %v940, %v941
          %v943 = vrot.slane %v355, 5
          %v944 = vrot.slane %v943, 4
          %v945 = vrot.slane %v356, 5
          %v946 = vsel %vm858, %v944, %v945
          %v947 = vrot.slane %v945, 4
          %v948 = vrot.slane %v357, 5
          %v949 = vsel %vm858, %v947, %v948
          %v950 = vrot.slane %v358, 5
          %v951 = vrot.slane %v950, 4
          %v952 = vrot.slane %v359, 5
          %v953 = vsel %vm858, %v951, %v952
          %v954 = vrot.slane %v952, 4
          %v955 = vrot.slane %v360, 5
          %v956 = vsel %vm858, %v954, %v955
          %v957 = vrot.slane %v361, 5
          %v958 = vrot.slane %v957, 4
          %v959 = vrot.slane %v362, 5
          %v960 = vsel %vm858, %v958, %v959
          %v961 = vrot.slane %v959, 4
          %v962 = vrot.slane %v363, 5
          %v963 = vsel %vm858, %v961, %v962
          %v964 = vrot.slane %v364, 5
          %v965 = vrot.slane %v964, 4
          %v966 = vrot.slane %v365, 5
          %v967 = vsel %vm858, %v965, %v966
          %v968 = vrot.slane %v966, 4
          %v969 = vrot.slane %v366, 5
          %v970 = vsel %vm858, %v968, %v969
          %v974 = vrot.slane %v367, 5
          %v975 = vrot.slane %v974, 4
          %v976 = vrot.slane %v368, 5
          %v977 = vsel %vm858, %v975, %v976
          %v978 = vrot.slane %v976, 4
          %v979 = vrot.slane %v369, 5
          %v980 = vsel %vm858, %v978, %v979
          %v984 = vrot.slane %v370, 5
          %v985 = vrot.slane %v984, 4
          %v986 = vrot.slane %v371, 5
          %v987 = vsel %vm858, %v985, %v986
          %v988 = vrot.slane %v986, 4
          %v989 = vrot.slane %v372, 5
          %v990 = vsel %vm858, %v988, %v989
          %v991 = vunpack.c.l.b16 %v319
          %v992 = vunpack.c.l.b16 %v320
          %v993 = vunpack.c.l.b16 %v322
          %v994 = vunpack.c.l.b16 %v323
          %v995 = vunpack.c.l.b16 %v325
          %v996 = vunpack.c.l.b16 %v326
          %v997 = vunpack.c.l.b16 %v328
          %v998 = vunpack.c.l.b16 %v329
          %v999 = vunpack.c.l.b16 %v331
          %v1000 = vunpack.c.l.b16 %v332
          %v1001 = vunpack.c.l.b16 %v334
          %v1002 = vunpack.c.l.b16 %v335
          %v1003 = vunpack.c.l.b16 %v337
          %v1004 = vunpack.c.l.b16 %v338
          %v1005 = vunpack.c.l.b16 %v340
          %v1006 = vunpack.c.l.b16 %v341
          %v1007 = vunpack.c.l.b16 %v343
          %v1008 = vunpack.c.l.b16 %v344
          %v1009 = vunpack.c.l.b16 %v346
          %v1010 = vunpack.c.l.b16 %v347
          %v1011 = vunpack.c.l.b16 %v349
          %v1012 = vunpack.c.l.b16 %v350
          %v1013 = vunpack.c.l.b16 %v352
          %v1014 = vunpack.c.l.b16 %v353
          %v1015 = vunpack.c.l.b16 %v355
          %v1016 = vunpack.c.l.b16 %v356
          %v1017 = vunpack.c.l.b16 %v358
          %v1018 = vunpack.c.l.b16 %v359
          %v1019 = vunpack.c.l.b16 %v361
          %v1020 = vunpack.c.l.b16 %v362
          %v1021 = vunpack.c.l.b16 %v364
          %v1022 = vunpack.c.l.b16 %v365
          %v1023 = vpack.c.b16 %v992, %v991
          %v1024 = vpack.c.b16 %v994, %v993
          %v1025 = vpack.c.b16 %v996, %v995
          %v1026 = vpack.c.b16 %v998, %v997
          %v1027 = vpack.c.b16 %v1000, %v999
          %v1028 = vpack.c.b16 %v1002, %v1001
          %v1029 = vpack.c.b16 %v1004, %v1003
          %v1030 = vpack.c.b16 %v1006, %v1005
          %v1031 = vpack.c.b16 %v1008, %v1007
          %v1032 = vpack.c.b16 %v1010, %v1009
          %v1033 = vpack.c.b16 %v1012, %v1011
          %v1034 = vpack.c.b16 %v1014, %v1013
          %v1035 = vpack.c.b16 %v1016, %v1015
          %v1036 = vpack.c.b16 %v1018, %v1017
          %v1037 = vpack.c.b16 %v1020, %v1019
          %v1038 = vpack.c.b16 %v1022, %v1021
          %v1039 = vunpack.c.l.b16 %v367
          %v1040 = vunpack.c.l.b16 %v368
          %v1041 = vpack.c.b16 %v1040, %v1039
          %1042 = vrot.lane.b32.xlu0 %v1024, 4
          %v1043 = vpop.permute.xlu0 %1042
          %1044 = vrot.lane.b32.xlu0 %v1025, 4
          %v1045 = vpop.permute.xlu0 %1044
          %1046 = vrot.lane.b32.xlu0 %v1026, 4
          %v1047 = vpop.permute.xlu0 %1046
          %1048 = vrot.lane.b32.xlu0 %v1027, 4
          %v1049 = vpop.permute.xlu0 %1048
          %1050 = vrot.lane.b32.xlu0 %v1028, 4
          %v1051 = vpop.permute.xlu0 %1050
          %1052 = vrot.lane.b32.xlu0 %v1029, 4
          %v1053 = vpop.permute.xlu0 %1052
          %1054 = vrot.lane.b32.xlu0 %v1030, 4
          %v1055 = vpop.permute.xlu0 %1054
          %1056 = vrot.lane.b32.xlu0 %v1031, 4
          %v1057 = vpop.permute.xlu0 %1056
          %1058 = vrot.lane.b32.xlu0 %v1032, 4
          %v1059 = vpop.permute.xlu0 %1058
          %1060 = vrot.lane.b32.xlu0 %v1033, 4
          %v1061 = vpop.permute.xlu0 %1060
          %1062 = vrot.lane.b32.xlu0 %v1034, 4
          %v1063 = vpop.permute.xlu0 %1062
          %1064 = vrot.lane.b32.xlu0 %v1035, 4
          %v1065 = vpop.permute.xlu0 %1064
          %1066 = vrot.lane.b32.xlu0 %v1036, 4
          %v1067 = vpop.permute.xlu0 %1066
          %1068 = vrot.lane.b32.xlu0 %v1037, 4
          %v1069 = vpop.permute.xlu0 %1068
          %1070 = vrot.lane.b32.xlu0 %v1038, 4
          %v1071 = vpop.permute.xlu0 %1070
          %1072 = vrot.lane.b32.xlu0 %v1041, 4
          %v1073 = vpop.permute.xlu0 %1072
          %v1074 = vunpack.c.l.b16 %v370
          %v1075 = vunpack.c.l.b16 %v371
          %v1076 = vpack.c.b16 %v1075, %v1074
          %1077 = vrot.lane.b32.xlu0 %v1025, 8
          %v1078 = vpop.permute.xlu0 %1077
          %1079 = vrot.lane.b32.xlu0 %v1026, 8
          %v1080 = vpop.permute.xlu0 %1079
          %1081 = vrot.lane.b32.xlu0 %v1027, 8
          %v1082 = vpop.permute.xlu0 %1081
          %1083 = vrot.lane.b32.xlu0 %v1028, 8
          %v1084 = vpop.permute.xlu0 %1083
          %1085 = vrot.lane.b32.xlu0 %v1029, 8
          %v1086 = vpop.permute.xlu0 %1085
          %1087 = vrot.lane.b32.xlu0 %v1030, 8
          %v1088 = vpop.permute.xlu0 %1087
          %1089 = vrot.lane.b32.xlu0 %v1031, 8
          %v1090 = vpop.permute.xlu0 %1089
          %1091 = vrot.lane.b32.xlu0 %v1032, 8
          %v1092 = vpop.permute.xlu0 %1091
          %1093 = vrot.lane.b32.xlu0 %v1033, 8
          %v1094 = vpop.permute.xlu0 %1093
          %1095 = vrot.lane.b32.xlu0 %v1034, 8
          %v1096 = vpop.permute.xlu0 %1095
          %1097 = vrot.lane.b32.xlu0 %v1035, 8
          %v1098 = vpop.permute.xlu0 %1097
          %1099 = vrot.lane.b32.xlu0 %v1036, 8
          %v1100 = vpop.permute.xlu0 %1099
          %1101 = vrot.lane.b32.xlu0 %v1037, 8
          %v1102 = vpop.permute.xlu0 %1101
          %1103 = vrot.lane.b32.xlu0 %v1038, 8
          %v1104 = vpop.permute.xlu0 %1103
          %1105 = vrot.lane.b32.xlu0 %v1041, 8
          %v1106 = vpop.permute.xlu0 %1105
          %1107 = vrot.lane.b32.xlu0 %v1076, 8
          %v1108 = vpop.permute.xlu0 %1107
          %v1109 = vunpack.c.l.b16 %v389
          %v1110 = vunpack.c.l.b16 %v399
          %v1111 = vunpack.c.l.b16 %v413
          %v1112 = vunpack.c.l.b16 %v423
          %v1113 = vunpack.c.l.b16 %v437
          %v1114 = vunpack.c.l.b16 %v447
          %v1115 = vunpack.c.l.b16 %v461
          %v1116 = vunpack.c.l.b16 %v471
          %v1117 = vunpack.c.l.b16 %v485
          %v1118 = vunpack.c.l.b16 %v495
          %v1119 = vunpack.c.l.b16 %v509
          %v1120 = vunpack.c.l.b16 %v519
          %v1121 = vunpack.c.l.b16 %v533
          %v1122 = vunpack.c.l.b16 %v543
          %v1123 = vunpack.c.l.b16 %v557
          %v1124 = vunpack.c.l.b16 %v567
          %v1125 = vunpack.c.l.b16 %v581
          %v1126 = vunpack.c.l.b16 %v591
          %v1127 = vunpack.c.l.b16 %v605
          %v1128 = vunpack.c.l.b16 %v615
          %v1129 = vunpack.c.l.b16 %v629
          %v1130 = vunpack.c.l.b16 %v639
          %v1131 = vunpack.c.l.b16 %v653
          %v1132 = vunpack.c.l.b16 %v663
          %v1133 = vunpack.c.l.b16 %v677
          %v1134 = vunpack.c.l.b16 %v687
          %v1135 = vunpack.c.l.b16 %v701
          %v1136 = vunpack.c.l.b16 %v711
          %v1137 = vunpack.c.l.b16 %v725
          %v1138 = vunpack.c.l.b16 %v735
          %v1139 = vunpack.c.l.b16 %v749
          %v1140 = vunpack.c.l.b16 %v759
          %v1141 = vpack.c.b16 %v1110, %v1109
          %v1142 = vpack.c.b16 %v1112, %v1111
          %v1143 = vpack.c.b16 %v1114, %v1113
          %v1144 = vpack.c.b16 %v1116, %v1115
          %v1145 = vpack.c.b16 %v1118, %v1117
          %v1146 = vpack.c.b16 %v1120, %v1119
          %v1147 = vpack.c.b16 %v1122, %v1121
          %v1148 = vpack.c.b16 %v1124, %v1123
          %v1149 = vpack.c.b16 %v1126, %v1125
          %v1150 = vpack.c.b16 %v1128, %v1127
          %v1151 = vpack.c.b16 %v1130, %v1129
          %v1152 = vpack.c.b16 %v1132, %v1131
          %v1153 = vpack.c.b16 %v1134, %v1133
          %v1154 = vpack.c.b16 %v1136, %v1135
          %v1155 = vpack.c.b16 %v1138, %v1137
          %v1156 = vpack.c.b16 %v1140, %v1139
          %1157 = vrot.lane.b32.xlu0 %v1141, 12
          %v1158 = vpop.permute.xlu0 %1157
          %1159 = vrot.lane.b32.xlu0 %v1142, 12
          %v1160 = vpop.permute.xlu0 %1159
          %1161 = vrot.lane.b32.xlu0 %v1143, 12
          %v1162 = vpop.permute.xlu0 %1161
          %1163 = vrot.lane.b32.xlu0 %v1144, 12
          %v1164 = vpop.permute.xlu0 %1163
          %1165 = vrot.lane.b32.xlu0 %v1145, 12
          %v1166 = vpop.permute.xlu0 %1165
          %1167 = vrot.lane.b32.xlu0 %v1146, 12
          %v1168 = vpop.permute.xlu0 %1167
          %1169 = vrot.lane.b32.xlu0 %v1147, 12
          %v1170 = vpop.permute.xlu0 %1169
          %1171 = vrot.lane.b32.xlu0 %v1148, 12
          %v1172 = vpop.permute.xlu0 %1171
          %1173 = vrot.lane.b32.xlu0 %v1149, 12
          %v1174 = vpop.permute.xlu0 %1173
          %1175 = vrot.lane.b32.xlu0 %v1150, 12
          %v1176 = vpop.permute.xlu0 %1175
          %1177 = vrot.lane.b32.xlu0 %v1151, 12
          %v1178 = vpop.permute.xlu0 %1177
          %1179 = vrot.lane.b32.xlu0 %v1152, 12
          %v1180 = vpop.permute.xlu0 %1179
          %1181 = vrot.lane.b32.xlu0 %v1153, 12
          %v1182 = vpop.permute.xlu0 %1181
          %1183 = vrot.lane.b32.xlu0 %v1154, 12
          %v1184 = vpop.permute.xlu0 %1183
          %1185 = vrot.lane.b32.xlu0 %v1155, 12
          %v1186 = vpop.permute.xlu0 %1185
          %1187 = vrot.lane.b32.xlu0 %v1156, 12
          %v1188 = vpop.permute.xlu0 %1187
          %v1189 = vunpack.c.l.b16 %v773
          %v1190 = vunpack.c.l.b16 %v783
          %v1191 = vpack.c.b16 %v1190, %v1189
          %1192 = vrot.lane.b32.xlu0 %v1142, 16
          %v1193 = vpop.permute.xlu0 %1192
          %1194 = vrot.lane.b32.xlu0 %v1143, 16
          %v1195 = vpop.permute.xlu0 %1194
          %1196 = vrot.lane.b32.xlu0 %v1144, 16
          %v1197 = vpop.permute.xlu0 %1196
          %1198 = vrot.lane.b32.xlu0 %v1145, 16
          %v1199 = vpop.permute.xlu0 %1198
          %1200 = vrot.lane.b32.xlu0 %v1146, 16
          %v1201 = vpop.permute.xlu0 %1200
          %1202 = vrot.lane.b32.xlu0 %v1147, 16
          %v1203 = vpop.permute.xlu0 %1202
          %1204 = vrot.lane.b32.xlu0 %v1148, 16
          %v1205 = vpop.permute.xlu0 %1204
          %1206 = vrot.lane.b32.xlu0 %v1149, 16
          %v1207 = vpop.permute.xlu0 %1206
          %1208 = vrot.lane.b32.xlu0 %v1150, 16
          %v1209 = vpop.permute.xlu0 %1208
          %1210 = vrot.lane.b32.xlu0 %v1151, 16
          %v1211 = vpop.permute.xlu0 %1210
          %1212 = vrot.lane.b32.xlu0 %v1152, 16
          %v1213 = vpop.permute.xlu0 %1212
          %1214 = vrot.lane.b32.xlu0 %v1153, 16
          %v1215 = vpop.permute.xlu0 %1214
          %1216 = vrot.lane.b32.xlu0 %v1154, 16
          %v1217 = vpop.permute.xlu0 %1216
          %1218 = vrot.lane.b32.xlu0 %v1155, 16
          %v1219 = vpop.permute.xlu0 %1218
          %1220 = vrot.lane.b32.xlu0 %v1156, 16
          %v1221 = vpop.permute.xlu0 %1220
          %1222 = vrot.lane.b32.xlu0 %v1191, 16
          %v1223 = vpop.permute.xlu0 %1222
          %v1224 = vunpack.c.l.b16 %v797
          %v1225 = vunpack.c.l.b16 %v807
          %v1226 = vpack.c.b16 %v1225, %v1224
          %1227 = vrot.lane.b32.xlu0 %v1143, 20
          %v1228 = vpop.permute.xlu0 %1227
          %1229 = vrot.lane.b32.xlu0 %v1144, 20
          %v1230 = vpop.permute.xlu0 %1229
          %1231 = vrot.lane.b32.xlu0 %v1145, 20
          %v1232 = vpop.permute.xlu0 %1231
          %1233 = vrot.lane.b32.xlu0 %v1146, 20
          %v1234 = vpop.permute.xlu0 %1233
          %1235 = vrot.lane.b32.xlu0 %v1147, 20
          %v1236 = vpop.permute.xlu0 %1235
          %1237 = vrot.lane.b32.xlu0 %v1148, 20
          %v1238 = vpop.permute.xlu0 %1237
          %1239 = vrot.lane.b32.xlu0 %v1149, 20
          %v1240 = vpop.permute.xlu0 %1239
          %1241 = vrot.lane.b32.xlu0 %v1150, 20
          %v1242 = vpop.permute.xlu0 %1241
          %1243 = vrot.lane.b32.xlu0 %v1151, 20
          %v1244 = vpop.permute.xlu0 %1243
          %1245 = vrot.lane.b32.xlu0 %v1152, 20
          %v1246 = vpop.permute.xlu0 %1245
          %1247 = vrot.lane.b32.xlu0 %v1153, 20
          %v1248 = vpop.permute.xlu0 %1247
          %1249 = vrot.lane.b32.xlu0 %v1154, 20
          %v1250 = vpop.permute.xlu0 %1249
          %1251 = vrot.lane.b32.xlu0 %v1155, 20
          %v1252 = vpop.permute.xlu0 %1251
          %1253 = vrot.lane.b32.xlu0 %v1156, 20
          %v1254 = vpop.permute.xlu0 %1253
          %1255 = vrot.lane.b32.xlu0 %v1191, 20
          %v1256 = vpop.permute.xlu0 %1255
          %1257 = vrot.lane.b32.xlu0 %v1226, 20
          %v1258 = vpop.permute.xlu0 %1257
          %v1259 = vunpack.c.l.b16 %v862
          %v1260 = vunpack.c.l.b16 %v865
          %v1261 = vunpack.c.l.b16 %v869
          %v1262 = vunpack.c.l.b16 %v872
          %v1263 = vunpack.c.l.b16 %v876
          %v1264 = vunpack.c.l.b16 %v879
          %v1265 = vunpack.c.l.b16 %v883
          %v1266 = vunpack.c.l.b16 %v886
          %v1267 = vunpack.c.l.b16 %v890
          %v1268 = vunpack.c.l.b16 %v893
          %v1269 = vunpack.c.l.b16 %v897
          %v1270 = vunpack.c.l.b16 %v900
          %v1271 = vunpack.c.l.b16 %v904
          %v1272 = vunpack.c.l.b16 %v907
          %v1273 = vunpack.c.l.b16 %v911
          %v1274 = vunpack.c.l.b16 %v914
          %v1275 = vunpack.c.l.b16 %v918
          %v1276 = vunpack.c.l.b16 %v921
          %v1277 = vunpack.c.l.b16 %v925
          %v1278 = vunpack.c.l.b16 %v928
          %v1279 = vunpack.c.l.b16 %v932
          %v1280 = vunpack.c.l.b16 %v935
          %v1281 = vunpack.c.l.b16 %v939
          %v1282 = vunpack.c.l.b16 %v942
          %v1283 = vunpack.c.l.b16 %v946
          %v1284 = vunpack.c.l.b16 %v949
          %v1285 = vunpack.c.l.b16 %v953
          %v1286 = vunpack.c.l.b16 %v956
          %v1287 = vunpack.c.l.b16 %v960
          %v1288 = vunpack.c.l.b16 %v963
          %v1289 = vunpack.c.l.b16 %v967
          %v1290 = vunpack.c.l.b16 %v970
          %v1291 = vpack.c.b16 %v1260, %v1259
          %v1292 = vpack.c.b16 %v1262, %v1261
          %v1293 = vpack.c.b16 %v1264, %v1263
          %v1294 = vpack.c.b16 %v1266, %v1265
          %v1295 = vpack.c.b16 %v1268, %v1267
          %v1296 = vpack.c.b16 %v1270, %v1269
          %v1297 = vpack.c.b16 %v1272, %v1271
          %v1298 = vpack.c.b16 %v1274, %v1273
          %v1299 = vpack.c.b16 %v1276, %v1275
          %v1300 = vpack.c.b16 %v1278, %v1277
          %v1301 = vpack.c.b16 %v1280, %v1279
          %v1302 = vpack.c.b16 %v1282, %v1281
          %v1303 = vpack.c.b16 %v1284, %v1283
          %v1304 = vpack.c.b16 %v1286, %v1285
          %v1305 = vpack.c.b16 %v1288, %v1287
          %v1306 = vpack.c.b16 %v1290, %v1289
          %1307 = vrot.lane.b32.xlu0 %v1291, 24
          %v1308 = vpop.permute.xlu0 %1307
          %1309 = vrot.lane.b32.xlu0 %v1292, 24
          %v1310 = vpop.permute.xlu0 %1309
          %1311 = vrot.lane.b32.xlu0 %v1293, 24
          %v1312 = vpop.permute.xlu0 %1311
          %1313 = vrot.lane.b32.xlu0 %v1294, 24
          %v1314 = vpop.permute.xlu0 %1313
          %1315 = vrot.lane.b32.xlu0 %v1295, 24
          %v1316 = vpop.permute.xlu0 %1315
          %1317 = vrot.lane.b32.xlu0 %v1296, 24
          %v1318 = vpop.permute.xlu0 %1317
          %1319 = vrot.lane.b32.xlu0 %v1297, 24
          %v1320 = vpop.permute.xlu0 %1319
          %1321 = vrot.lane.b32.xlu0 %v1298, 24
          %v1322 = vpop.permute.xlu0 %1321
          %1323 = vrot.lane.b32.xlu0 %v1299, 24
          %v1324 = vpop.permute.xlu0 %1323
          %1325 = vrot.lane.b32.xlu0 %v1300, 24
          %v1326 = vpop.permute.xlu0 %1325
          %1327 = vrot.lane.b32.xlu0 %v1301, 24
          %v1328 = vpop.permute.xlu0 %1327
          %1329 = vrot.lane.b32.xlu0 %v1302, 24
          %v1330 = vpop.permute.xlu0 %1329
          %1331 = vrot.lane.b32.xlu0 %v1303, 24
          %v1332 = vpop.permute.xlu0 %1331
          %1333 = vrot.lane.b32.xlu0 %v1304, 24
          %v1334 = vpop.permute.xlu0 %1333
          %1335 = vrot.lane.b32.xlu0 %v1305, 24
          %v1336 = vpop.permute.xlu0 %1335
          %1337 = vrot.lane.b32.xlu0 %v1306, 24
          %v1338 = vpop.permute.xlu0 %1337
          %v1339 = vunpack.c.l.b16 %v977
          %v1340 = vunpack.c.l.b16 %v980
          %v1341 = vpack.c.b16 %v1340, %v1339
          %1342 = vrot.lane.b32.xlu0 %v1292, 28
          %v1343 = vpop.permute.xlu0 %1342
          %1344 = vrot.lane.b32.xlu0 %v1293, 28
          %v1345 = vpop.permute.xlu0 %1344
          %1346 = vrot.lane.b32.xlu0 %v1294, 28
          %v1347 = vpop.permute.xlu0 %1346
          %1348 = vrot.lane.b32.xlu0 %v1295, 28
          %v1349 = vpop.permute.xlu0 %1348
          %1350 = vrot.lane.b32.xlu0 %v1296, 28
          %v1351 = vpop.permute.xlu0 %1350
          %1352 = vrot.lane.b32.xlu0 %v1297, 28
          %v1353 = vpop.permute.xlu0 %1352
          %1354 = vrot.lane.b32.xlu0 %v1298, 28
          %v1355 = vpop.permute.xlu0 %1354
          %1356 = vrot.lane.b32.xlu0 %v1299, 28
          %v1357 = vpop.permute.xlu0 %1356
          %1358 = vrot.lane.b32.xlu0 %v1300, 28
          %v1359 = vpop.permute.xlu0 %1358
          %1360 = vrot.lane.b32.xlu0 %v1301, 28
          %v1361 = vpop.permute.xlu0 %1360
          %1362 = vrot.lane.b32.xlu0 %v1302, 28
          %v1363 = vpop.permute.xlu0 %1362
          %1364 = vrot.lane.b32.xlu0 %v1303, 28
          %v1365 = vpop.permute.xlu0 %1364
          %1366 = vrot.lane.b32.xlu0 %v1304, 28
          %v1367 = vpop.permute.xlu0 %1366
          %1368 = vrot.lane.b32.xlu0 %v1305, 28
          %v1369 = vpop.permute.xlu0 %1368
          %1370 = vrot.lane.b32.xlu0 %v1306, 28
          %v1371 = vpop.permute.xlu0 %1370
          %1372 = vrot.lane.b32.xlu0 %v1341, 28
          %v1373 = vpop.permute.xlu0 %1372
          %v1374 = vunpack.c.l.b16 %v987
          %v1375 = vunpack.c.l.b16 %v990
          %v1376 = vpack.c.b16 %v1375, %v1374
          %1377 = vrot.lane.b32.xlu0 %v1293, 32
          %v1378 = vpop.permute.xlu0 %1377
          %1379 = vrot.lane.b32.xlu0 %v1294, 32
          %v1380 = vpop.permute.xlu0 %1379
          %1381 = vrot.lane.b32.xlu0 %v1295, 32
          %v1382 = vpop.permute.xlu0 %1381
          %1383 = vrot.lane.b32.xlu0 %v1296, 32
          %v1384 = vpop.permute.xlu0 %1383
          %1385 = vrot.lane.b32.xlu0 %v1297, 32
          %v1386 = vpop.permute.xlu0 %1385
          %1387 = vrot.lane.b32.xlu0 %v1298, 32
          %v1388 = vpop.permute.xlu0 %1387
          %1389 = vrot.lane.b32.xlu0 %v1299, 32
          %v1390 = vpop.permute.xlu0 %1389
          %1391 = vrot.lane.b32.xlu0 %v1300, 32
          %v1392 = vpop.permute.xlu0 %1391
          %1393 = vrot.lane.b32.xlu0 %v1301, 32
          %v1394 = vpop.permute.xlu0 %1393
          %1395 = vrot.lane.b32.xlu0 %v1302, 32
          %v1396 = vpop.permute.xlu0 %1395
          %1397 = vrot.lane.b32.xlu0 %v1303, 32
          %v1398 = vpop.permute.xlu0 %1397
          %1399 = vrot.lane.b32.xlu0 %v1304, 32
          %v1400 = vpop.permute.xlu0 %1399
          %1401 = vrot.lane.b32.xlu0 %v1305, 32
          %v1402 = vpop.permute.xlu0 %1401
          %1403 = vrot.lane.b32.xlu0 %v1306, 32
          %v1404 = vpop.permute.xlu0 %1403
          %1405 = vrot.lane.b32.xlu0 %v1341, 32
          %v1406 = vpop.permute.xlu0 %1405
          %1407 = vrot.lane.b32.xlu0 %v1376, 32
          %v1408 = vpop.permute.xlu0 %1407
          %vm1409 = vcmask 31744
          %v1412 = vsel %vm1409, %v1023, %v1043
          %v1415 = vsel %vm1409, %v1024, %v1045
          %v1418 = vsel %vm1409, %v1025, %v1047
          %v1421 = vsel %vm1409, %v1026, %v1049
          %v1424 = vsel %vm1409, %v1027, %v1051
          %v1427 = vsel %vm1409, %v1028, %v1053
          %v1430 = vsel %vm1409, %v1029, %v1055
          %v1433 = vsel %vm1409, %v1030, %v1057
          %v1436 = vsel %vm1409, %v1031, %v1059
          %v1439 = vsel %vm1409, %v1032, %v1061
          %v1442 = vsel %vm1409, %v1033, %v1063
          %v1445 = vsel %vm1409, %v1034, %v1065
          %v1448 = vsel %vm1409, %v1035, %v1067
          %v1451 = vsel %vm1409, %v1036, %v1069
          %v1454 = vsel %vm1409, %v1037, %v1071
          %v1457 = vsel %vm1409, %v1038, %v1073
          %vm1458 = vcmask 64512
          %v1460 = vsel %vm1458, %v1412, %v1078
          %v1462 = vsel %vm1458, %v1415, %v1080
          %v1464 = vsel %vm1458, %v1418, %v1082
          %v1466 = vsel %vm1458, %v1421, %v1084
          %v1468 = vsel %vm1458, %v1424, %v1086
          %v1470 = vsel %vm1458, %v1427, %v1088
          %v1472 = vsel %vm1458, %v1430, %v1090
          %v1474 = vsel %vm1458, %v1433, %v1092
          %v1476 = vsel %vm1458, %v1436, %v1094
          %v1478 = vsel %vm1458, %v1439, %v1096
          %v1480 = vsel %vm1458, %v1442, %v1098
          %v1482 = vsel %vm1458, %v1445, %v1100
          %v1484 = vsel %vm1458, %v1448, %v1102
          %v1486 = vsel %vm1458, %v1451, %v1104
          %v1488 = vsel %vm1458, %v1454, %v1106
          %v1490 = vsel %vm1458, %v1457, %v1108
          %vm1491 = vcmask 97280
          %v1493 = vsel %vm1491, %v1460, %v1158
          %v1495 = vsel %vm1491, %v1462, %v1160
          %v1497 = vsel %vm1491, %v1464, %v1162
          %v1499 = vsel %vm1491, %v1466, %v1164
          %v1501 = vsel %vm1491, %v1468, %v1166
          %v1503 = vsel %vm1491, %v1470, %v1168
          %v1505 = vsel %vm1491, %v1472, %v1170
          %v1507 = vsel %vm1491, %v1474, %v1172
          %v1509 = vsel %vm1491, %v1476, %v1174
          %v1511 = vsel %vm1491, %v1478, %v1176
          %v1513 = vsel %vm1491, %v1480, %v1178
          %v1515 = vsel %vm1491, %v1482, %v1180
          %v1517 = vsel %vm1491, %v1484, %v1182
          %v1519 = vsel %vm1491, %v1486, %v1184
          %v1521 = vsel %vm1491, %v1488, %v1186
          %v1523 = vsel %vm1491, %v1490, %v1188
          %vm1524 = vcmask 130048
          %v1526 = vsel %vm1524, %v1493, %v1193
          %v1528 = vsel %vm1524, %v1495, %v1195
          %v1530 = vsel %vm1524, %v1497, %v1197
          %v1532 = vsel %vm1524, %v1499, %v1199
          %v1534 = vsel %vm1524, %v1501, %v1201
          %v1536 = vsel %vm1524, %v1503, %v1203
          %v1538 = vsel %vm1524, %v1505, %v1205
          %v1540 = vsel %vm1524, %v1507, %v1207
          %v1542 = vsel %vm1524, %v1509, %v1209
          %v1544 = vsel %vm1524, %v1511, %v1211
          %v1546 = vsel %vm1524, %v1513, %v1213
          %v1548 = vsel %vm1524, %v1515, %v1215
          %v1550 = vsel %vm1524, %v1517, %v1217
          %v1552 = vsel %vm1524, %v1519, %v1219
          %v1554 = vsel %vm1524, %v1521, %v1221
          %v1556 = vsel %vm1524, %v1523, %v1223
          %vm1557 = vcmask 162816
          %v1559 = vsel %vm1557, %v1526, %v1228
          %v1561 = vsel %vm1557, %v1528, %v1230
          %v1563 = vsel %vm1557, %v1530, %v1232
          %v1565 = vsel %vm1557, %v1532, %v1234
          %v1567 = vsel %vm1557, %v1534, %v1236
          %v1569 = vsel %vm1557, %v1536, %v1238
          %v1571 = vsel %vm1557, %v1538, %v1240
          %v1573 = vsel %vm1557, %v1540, %v1242
          %v1575 = vsel %vm1557, %v1542, %v1244
          %v1577 = vsel %vm1557, %v1544, %v1246
          %v1579 = vsel %vm1557, %v1546, %v1248
          %v1581 = vsel %vm1557, %v1548, %v1250
          %v1583 = vsel %vm1557, %v1550, %v1252
          %v1585 = vsel %vm1557, %v1552, %v1254
          %v1587 = vsel %vm1557, %v1554, %v1256
          %v1589 = vsel %vm1557, %v1556, %v1258
          %vm1590 = vcmask 195584
          %v1592 = vsel %vm1590, %v1559, %v1308
          %v1594 = vsel %vm1590, %v1561, %v1310
          %v1596 = vsel %vm1590, %v1563, %v1312
          %v1598 = vsel %vm1590, %v1565, %v1314
          %v1600 = vsel %vm1590, %v1567, %v1316
          %v1602 = vsel %vm1590, %v1569, %v1318
          %v1604 = vsel %vm1590, %v1571, %v1320
          %v1606 = vsel %vm1590, %v1573, %v1322
          %v1608 = vsel %vm1590, %v1575, %v1324
          %v1610 = vsel %vm1590, %v1577, %v1326
          %v1612 = vsel %vm1590, %v1579, %v1328
          %v1614 = vsel %vm1590, %v1581, %v1330
          %v1616 = vsel %vm1590, %v1583, %v1332
          %v1618 = vsel %vm1590, %v1585, %v1334
          %v1620 = vsel %vm1590, %v1587, %v1336
          %v1622 = vsel %vm1590, %v1589, %v1338
          %vm1623 = vcmask 228352
          %v1625 = vsel %vm1623, %v1592, %v1343
          %v1627 = vsel %vm1623, %v1594, %v1345
          %v1629 = vsel %vm1623, %v1596, %v1347
          %v1631 = vsel %vm1623, %v1598, %v1349
          %v1633 = vsel %vm1623, %v1600, %v1351
          %v1635 = vsel %vm1623, %v1602, %v1353
          %v1637 = vsel %vm1623, %v1604, %v1355
          %v1639 = vsel %vm1623, %v1606, %v1357
          %v1641 = vsel %vm1623, %v1608, %v1359
          %v1643 = vsel %vm1623, %v1610, %v1361
          %v1645 = vsel %vm1623, %v1612, %v1363
          %v1647 = vsel %vm1623, %v1614, %v1365
          %v1649 = vsel %vm1623, %v1616, %v1367
          %v1651 = vsel %vm1623, %v1618, %v1369
          %v1653 = vsel %vm1623, %v1620, %v1371
          %v1655 = vsel %vm1623, %v1622, %v1373
          %vm1656 = vcmask 261120
          %v1658 = vsel %vm1656, %v1625, %v1378
          %v1660 = vsel %vm1656, %v1627, %v1380
          %v1662 = vsel %vm1656, %v1629, %v1382
          %v1664 = vsel %vm1656, %v1631, %v1384
          %v1666 = vsel %vm1656, %v1633, %v1386
          %v1668 = vsel %vm1656, %v1635, %v1388
          %v1670 = vsel %vm1656, %v1637, %v1390
          %v1672 = vsel %vm1656, %v1639, %v1392
          %v1674 = vsel %vm1656, %v1641, %v1394
          %v1676 = vsel %vm1656, %v1643, %v1396
          %v1678 = vsel %vm1656, %v1645, %v1398
          %v1680 = vsel %vm1656, %v1647, %v1400
          %v1682 = vsel %vm1656, %v1649, %v1402
          %v1684 = vsel %vm1656, %v1651, %v1404
          %v1686 = vsel %vm1656, %v1653, %v1406
          %v1688 = vsel %vm1656, %v1655, %v1408
          %v1689 = vld [vmem:[%s1] sm:$0xf]
          %v1690 = vld [vmem:[%s1 + $0x4] sm:$0xf]
          %v1691 = vld [vmem:[%s1 + $0x8] sm:$0xf]
          %v1692 = vld [vmem:[%s1 + $0xc] sm:$0xf]
          %v1693 = vld [vmem:[%s1 + $0x10] sm:$0x3]
          %v1694 = vld [vmem:[%s2] sm:$0x1]
          %v1696 = vlaneseq
          %v1697 = vshrl.u32 %v1696, 7
          %v1698 = vsub.s32 0, %v1697
          %v1699 = vrot.slane %v1694, %v1698
          %v1706 = vunpack.c.l.b16 %v1689
          %v1707 = vunpack.c.l.b16 %v1690
          %v1708 = vunpack.c.l.b16 %v1691
          %v1709 = vunpack.c.l.b16 %v1692
          %v1710 = vunpack.c.l.b16 %v1693
          %v1711 = vpack.c.b16 %v1707, %v1706
          %v1712 = vpack.c.b16 %v1709, %v1708
          %v1713 = vpack.c.b16 %v1710, %v1710
          %vm1716 = vcmask 293888
          %v1717 = vsel %vm1716, %v1658, 0
          %v1719 = vsel %vm1716, %v1660, 0
          %v1721 = vsel %vm1716, %v1662, 0
          %v1723 = vsel %vm1716, %v1664, 0
          %v1725 = vsel %vm1716, %v1666, 0
          %v1727 = vsel %vm1716, %v1668, 0
          %v1729 = vsel %vm1716, %v1670, 0
          %v1731 = vsel %vm1716, %v1672, 0
          %v1733 = vsel %vm1716, %v1674, 0
          %v1735 = vsel %vm1716, %v1676, 0
          %v1737 = vsel %vm1716, %v1678, 0
          %v1739 = vsel %vm1716, %v1680, 0
          %v1741 = vsel %vm1716, %v1682, 0
          %v1743 = vsel %vm1716, %v1684, 0
          %v1745 = vsel %vm1716, %v1686, 0
          %v1747 = vsel %vm1716, %v1688, 0
          %vm1749 = vcmask 1041408
          %v1751 = vsel %vm1749, %v1713, 0
          %1753 = vmatprep.subr.bf16.mxu0 0
          %1754 = vmatpush1.bf16.msra.mxu0 %v1711
          %1755 = vmatprep.subr.bf16.mxu0 0
          %1756 = vmatpush1.bf16.msra.mxu0 %v1712
          %1757 = vmatprep.subr.bf16.mxu0 0
          %1758 = vmatpush1.bf16.msra.mxu0 %v1751
          %1759 = vmatprep.subr.bf16.mxu0 0
          %1760 = vmatpush1.bf16.msra.mxu0 0
          %1761 = vmatprep.subr.bf16.mxu0 0
          %1762 = vmatpush1.bf16.msra.mxu0 0
          %1763 = vmatprep.subr.bf16.mxu0 0
          %1764 = vmatpush1.bf16.msra.mxu0 0
          %1765 = vmatprep.subr.bf16.mxu0 0
          %1766 = vmatpush1.bf16.msra.mxu0 0
          %1767 = vmatprep.subr.bf16.mxu0 0
          %1768 = vmatpush1.bf16.msra.mxu0 0
          %1769 = vmatprep.subr.bf16.mxu0 0
          %1770 = vmatpush1.bf16.msra.mxu0 0
          %1771 = vmatprep.subr.bf16.mxu0 0
          %1772 = vmatpush1.bf16.msra.mxu0 0
          %1773 = vmatprep.subr.bf16.mxu0 0
          %1774 = vmatpush1.bf16.msra.mxu0 0
          %1775 = vmatprep.subr.bf16.mxu0 0
          %1776 = vmatpush1.bf16.msra.mxu0 0
          %1777 = vmatprep.subr.bf16.mxu0 0
          %1778 = vmatpush1.bf16.msra.mxu0 0
          %1779 = vmatprep.subr.bf16.mxu0 0
          %1780 = vmatpush1.bf16.msra.mxu0 0
          %1781 = vmatprep.subr.bf16.mxu0 0
          %1782 = vmatpush1.bf16.msra.mxu0 0
          %1783 = vmatprep.subr.bf16.mxu0 0
          %1784 = vmatpush1.bf16.msra.mxu0 0
          %1785 = vmatprep.mubr.bf16.mxu0 0
          %1786 = vmatmul.mubr.bf16.gmra.mrb[0].mxu0 %v1717
          %v1787 = vpop.f32.mrb[0].mxu0
          %v1788 = vadd.f32 %v1699, %v1787
          %v1789 = vpop.f32.mrb[0].mxu0
          %v1790 = vpop.f32.mrb[0].mxu0
          %v1791 = vadd.f32 %v1699, %v1790
          %v1792 = vpop.f32.mrb[0].mxu0
          %1793 = vmatprep.mubr.bf16.mxu0 0
          %1794 = vmatmul.mubr.bf16.gmra.mrb[0].mxu0 %v1719
          %v1795 = vpop.f32.mrb[0].mxu0
          %v1796 = vadd.f32 %v1699, %v1795
          %v1797 = vpop.f32.mrb[0].mxu0
          %v1798 = vpop.f32.mrb[0].mxu0
          %v1799 = vadd.f32 %v1699, %v1798
          %v1800 = vpop.f32.mrb[0].mxu0
          %1801 = vmatprep.mubr.bf16.mxu0 0
          %1802 = vmatmul.mubr.bf16.gmra.mrb[0].mxu0 %v1721
          %v1803 = vpop.f32.mrb[0].mxu0
          %v1804 = vadd.f32 %v1699, %v1803
          %v1805 = vpop.f32.mrb[0].mxu0
          %v1806 = vpop.f32.mrb[0].mxu0
          %v1807 = vadd.f32 %v1699, %v1806
          %v1808 = vpop.f32.mrb[0].mxu0
          %1809 = vmatprep.mubr.bf16.mxu0 0
          %1810 = vmatmul.mubr.bf16.gmra.mrb[0].mxu0 %v1723
          %v1811 = vpop.f32.mrb[0].mxu0
          %v1812 = vadd.f32 %v1699, %v1811
          %v1813 = vpop.f32.mrb[0].mxu0
          %v1814 = vpop.f32.mrb[0].mxu0
          %v1815 = vadd.f32 %v1699, %v1814
          %v1816 = vpop.f32.mrb[0].mxu0
          %1817 = vmatprep.mubr.bf16.mxu0 0
          %1818 = vmatmul.mubr.bf16.gmra.mrb[0].mxu0 %v1725
          %v1819 = vpop.f32.mrb[0].mxu0
          %v1820 = vadd.f32 %v1699, %v1819
          %v1821 = vpop.f32.mrb[0].mxu0
          %v1822 = vpop.f32.mrb[0].mxu0
          %v1823 = vadd.f32 %v1699, %v1822
          %v1824 = vpop.f32.mrb[0].mxu0
          %1825 = vmatprep.mubr.bf16.mxu0 0
          %1826 = vmatmul.mubr.bf16.gmra.mrb[0].mxu0 %v1727
          %v1827 = vpop.f32.mrb[0].mxu0
          %v1828 = vadd.f32 %v1699, %v1827
          %v1829 = vpop.f32.mrb[0].mxu0
          %v1830 = vpop.f32.mrb[0].mxu0
          %v1831 = vadd.f32 %v1699, %v1830
          %v1832 = vpop.f32.mrb[0].mxu0
          %1833 = vmatprep.mubr.bf16.mxu0 0
          %1834 = vmatmul.mubr.bf16.gmra.mrb[0].mxu0 %v1729
          %v1835 = vpop.f32.mrb[0].mxu0
          %v1836 = vadd.f32 %v1699, %v1835
          %v1837 = vpop.f32.mrb[0].mxu0
          %v1838 = vpop.f32.mrb[0].mxu0
          %v1839 = vadd.f32 %v1699, %v1838
          %v1840 = vpop.f32.mrb[0].mxu0
          %1841 = vmatprep.mubr.bf16.mxu0 0
          %1842 = vmatmul.mubr.bf16.gmra.mrb[0].mxu0 %v1731
          %v1843 = vpop.f32.mrb[0].mxu0
          %v1844 = vadd.f32 %v1699, %v1843
          %v1845 = vpop.f32.mrb[0].mxu0
          %v1846 = vpop.f32.mrb[0].mxu0
          %v1847 = vadd.f32 %v1699, %v1846
          %v1848 = vpop.f32.mrb[0].mxu0
          %1849 = vmatprep.mubr.bf16.mxu0 0
          %1850 = vmatmul.mubr.bf16.gmra.mrb[0].mxu0 %v1733
          %v1851 = vpop.f32.mrb[0].mxu0
          %v1852 = vadd.f32 %v1699, %v1851
          %v1853 = vpop.f32.mrb[0].mxu0
          %v1854 = vpop.f32.mrb[0].mxu0
          %v1855 = vadd.f32 %v1699, %v1854
          %v1856 = vpop.f32.mrb[0].mxu0
          %1857 = vmatprep.mubr.bf16.mxu0 0
          %1858 = vmatmul.mubr.bf16.gmra.mrb[0].mxu0 %v1735
          %v1859 = vpop.f32.mrb[0].mxu0
          %v1860 = vadd.f32 %v1699, %v1859
          %v1861 = vpop.f32.mrb[0].mxu0
          %v1862 = vpop.f32.mrb[0].mxu0
          %v1863 = vadd.f32 %v1699, %v1862
          %v1864 = vpop.f32.mrb[0].mxu0
          %1865 = vmatprep.mubr.bf16.mxu0 0
          %1866 = vmatmul.mubr.bf16.gmra.mrb[0].mxu0 %v1737
          %v1867 = vpop.f32.mrb[0].mxu0
          %v1868 = vadd.f32 %v1699, %v1867
          %v1869 = vpop.f32.mrb[0].mxu0
          %v1870 = vpop.f32.mrb[0].mxu0
          %v1871 = vadd.f32 %v1699, %v1870
          %v1872 = vpop.f32.mrb[0].mxu0
          %1873 = vmatprep.mubr.bf16.mxu0 0
          %1874 = vmatmul.mubr.bf16.gmra.mrb[0].mxu0 %v1739
          %v1875 = vpop.f32.mrb[0].mxu0
          %v1876 = vadd.f32 %v1699, %v1875
          %v1877 = vpop.f32.mrb[0].mxu0
          %v1878 = vpop.f32.mrb[0].mxu0
          %v1879 = vadd.f32 %v1699, %v1878
          %v1880 = vpop.f32.mrb[0].mxu0
          %1881 = vmatprep.mubr.bf16.mxu0 0
          %1882 = vmatmul.mubr.bf16.gmra.mrb[0].mxu0 %v1741
          %v1883 = vpop.f32.mrb[0].mxu0
          %v1884 = vadd.f32 %v1699, %v1883
          %v1885 = vpop.f32.mrb[0].mxu0
          %v1886 = vpop.f32.mrb[0].mxu0
          %v1887 = vadd.f32 %v1699, %v1886
          %v1888 = vpop.f32.mrb[0].mxu0
          %1889 = vmatprep.mubr.bf16.mxu0 0
          %1890 = vmatmul.mubr.bf16.gmra.mrb[0].mxu0 %v1743
          %v1891 = vpop.f32.mrb[0].mxu0
          %v1892 = vadd.f32 %v1699, %v1891
          %v1893 = vpop.f32.mrb[0].mxu0
          %v1894 = vpop.f32.mrb[0].mxu0
          %v1895 = vadd.f32 %v1699, %v1894
          %v1896 = vpop.f32.mrb[0].mxu0
          %1897 = vmatprep.mubr.bf16.mxu0 0
          %1898 = vmatmul.mubr.bf16.gmra.mrb[0].mxu0 %v1745
          %v1899 = vpop.f32.mrb[0].mxu0
          %v1900 = vadd.f32 %v1699, %v1899
          %v1901 = vpop.f32.mrb[0].mxu0
          %v1902 = vpop.f32.mrb[0].mxu0
          %v1903 = vadd.f32 %v1699, %v1902
          %v1904 = vpop.f32.mrb[0].mxu0
          %1905 = vmatprep.mubr.bf16.mxu0 0
          %1906 = vmatmul.mubr.bf16.gmra.mrb[0].mxu0 %v1747
          %v1907 = vpop.f32.mrb[0].mxu0
          %v1908 = vadd.f32 %v1699, %v1907
          %v1909 = vpop.f32.mrb[0].mxu0
          %v1910 = vpop.f32.mrb[0].mxu0
          %v1911 = vadd.f32 %v1699, %v1910
          %v1912 = vpop.f32.mrb[0].mxu0
          %1913 = vdwg.mxu0
          %v1914 = vmax.f32 %v1788, 0.0
          %v1915 = vmax.f32 %v1791, 0.0
          %v1916 = vmax.f32 %v1796, 0.0
          %v1917 = vmax.f32 %v1799, 0.0
          %v1918 = vmax.f32 %v1804, 0.0
          %v1919 = vmax.f32 %v1807, 0.0
          %v1920 = vmax.f32 %v1812, 0.0
          %v1921 = vmax.f32 %v1815, 0.0
          %v1922 = vmax.f32 %v1820, 0.0
          %v1923 = vmax.f32 %v1823, 0.0
          %v1924 = vmax.f32 %v1828, 0.0
          %v1925 = vmax.f32 %v1831, 0.0
          %v1926 = vmax.f32 %v1836, 0.0
          %v1927 = vmax.f32 %v1839, 0.0
          %v1928 = vmax.f32 %v1844, 0.0
          %v1929 = vmax.f32 %v1847, 0.0
          %v1930 = vmax.f32 %v1852, 0.0
          %v1931 = vmax.f32 %v1855, 0.0
          %v1932 = vmax.f32 %v1860, 0.0
          %v1933 = vmax.f32 %v1863, 0.0
          %v1934 = vmax.f32 %v1868, 0.0
          %v1935 = vmax.f32 %v1871, 0.0
          %v1936 = vmax.f32 %v1876, 0.0
          %v1937 = vmax.f32 %v1879, 0.0
          %v1938 = vmax.f32 %v1884, 0.0
          %v1939 = vmax.f32 %v1887, 0.0
          %v1940 = vmax.f32 %v1892, 0.0
          %v1941 = vmax.f32 %v1895, 0.0
          %v1942 = vmax.f32 %v1900, 0.0
          %v1943 = vmax.f32 %v1903, 0.0
          %v1944 = vmax.f32 %v1908, 0.0
          %v1945 = vmax.f32 %v1911, 0.0
          %v1946 = vpack.c.bf16 %v1915, %v1914
          %v1947 = vpack.c.bf16 %v1917, %v1916
          %v1948 = vpack.c.bf16 %v1919, %v1918
          %v1949 = vpack.c.bf16 %v1921, %v1920
          %v1950 = vpack.c.bf16 %v1923, %v1922
          %v1951 = vpack.c.bf16 %v1925, %v1924
          %v1952 = vpack.c.bf16 %v1927, %v1926
          %v1953 = vpack.c.bf16 %v1929, %v1928
          %v1954 = vpack.c.bf16 %v1931, %v1930
          %v1955 = vpack.c.bf16 %v1933, %v1932
          %v1956 = vpack.c.bf16 %v1935, %v1934
          %v1957 = vpack.c.bf16 %v1937, %v1936
          %v1958 = vpack.c.bf16 %v1939, %v1938
          %v1959 = vpack.c.bf16 %v1941, %v1940
          %v1960 = vpack.c.bf16 %v1943, %v1942
          %v1961 = vpack.c.bf16 %v1945, %v1944
          %v1962 = vld [vmem:[%s3] sm:$0xf]
          %v1963 = vld [vmem:[%s3 + $0x4] sm:$0xf]
          %v1964 = vld [vmem:[%s3 + $0x8] sm:$0xf]
          %v1965 = vld [vmem:[%s3 + $0xc] sm:$0xf]
          %v1966 = vld [vmem:[%s3 + $0x10] sm:$0xf]
          %v1967 = vld [vmem:[%s3 + $0x14] sm:$0xf]
          %v1968 = vld [vmem:[%s3 + $0x18] sm:$0xf]
          %v1969 = vld [vmem:[%s3 + $0x1c] sm:$0xf]
          %v1978 = vunpack.c.l.b16 %v1962
          %v1979 = vunpack.c.l.b16 %v1963
          %v1980 = vunpack.c.l.b16 %v1964
          %v1981 = vunpack.c.l.b16 %v1965
          %v1982 = vunpack.c.l.b16 %v1966
          %v1983 = vunpack.c.l.b16 %v1967
          %v1984 = vunpack.c.l.b16 %v1968
          %v1985 = vunpack.c.l.b16 %v1969
          %v1986 = vpack.c.b16 %v1979, %v1978
          %v1987 = vpack.c.b16 %v1981, %v1980
          %v1988 = vpack.c.b16 %v1983, %v1982
          %v1989 = vpack.c.b16 %v1985, %v1984
          %vm1994 = vcmask 523264
          %v1996 = vsel %vm1994, %v1946, 0
          %v1999 = vsel %vm1994, %v1947, 0
          %v2002 = vsel %vm1994, %v1948, 0
          %v2005 = vsel %vm1994, %v1949, 0
          %v2008 = vsel %vm1994, %v1950, 0
          %v2011 = vsel %vm1994, %v1951, 0
          %v2014 = vsel %vm1994, %v1952, 0
          %v2017 = vsel %vm1994, %v1953, 0
          %v2020 = vsel %vm1994, %v1954, 0
          %v2023 = vsel %vm1994, %v1955, 0
          %v2026 = vsel %vm1994, %v1956, 0
          %v2029 = vsel %vm1994, %v1957, 0
          %v2032 = vsel %vm1994, %v1958, 0
          %v2035 = vsel %vm1994, %v1959, 0
          %v2038 = vsel %vm1994, %v1960, 0
          %v2041 = vsel %vm1994, %v1961, 0
          %2043 = vmatprep.subr.bf16.mxu0 0
          %2044 = vmatpush1.bf16.msra.mxu0 %v1986
          %2045 = vmatprep.subr.bf16.mxu0 0
          %2046 = vmatpush1.bf16.msra.mxu0 %v1987
          %2047 = vmatprep.subr.bf16.mxu0 0
          %2048 = vmatpush1.bf16.msra.mxu0 %v1988
          %2049 = vmatprep.subr.bf16.mxu0 0
          %2050 = vmatpush1.bf16.msra.mxu0 %v1989
          %2051 = vmatprep.subr.bf16.mxu0 0
          %2052 = vmatpush1.bf16.msra.mxu0 0
          %2053 = vmatprep.subr.bf16.mxu0 0
          %2054 = vmatpush1.bf16.msra.mxu0 0
          %2055 = vmatprep.subr.bf16.mxu0 0
          %2056 = vmatpush1.bf16.msra.mxu0 0
          %2057 = vmatprep.subr.bf16.mxu0 0
          %2058 = vmatpush1.bf16.msra.mxu0 0
          %2059 = vmatprep.subr.bf16.mxu0 0
          %2060 = vmatpush1.bf16.msra.mxu0 0
          %2061 = vmatprep.subr.bf16.mxu0 0
          %2062 = vmatpush1.bf16.msra.mxu0 0
          %2063 = vmatprep.subr.bf16.mxu0 0
          %2064 = vmatpush1.bf16.msra.mxu0 0
          %2065 = vmatprep.subr.bf16.mxu0 0
          %2066 = vmatpush1.bf16.msra.mxu0 0
          %2067 = vmatprep.subr.bf16.mxu0 0
          %2068 = vmatpush1.bf16.msra.mxu0 0
          %2069 = vmatprep.subr.bf16.mxu0 0
          %2070 = vmatpush1.bf16.msra.mxu0 0
          %2071 = vmatprep.subr.bf16.mxu0 0
          %2072 = vmatpush1.bf16.msra.mxu0 0
          %2073 = vmatprep.subr.bf16.mxu0 0
          %2074 = vmatpush1.bf16.msra.mxu0 0
          %2075 = vmatprep.mubr.bf16.mxu0 0
          %2076 = vmatmul.mubr.bf16.gmra.mrb[0].mxu0 %v1996
          %v2077 = vpop.f32.mrb[0].mxu0
          %v2078 = vadd.f32 0.0, %v2077
          %v2079 = vpop.f32.mrb[0].mxu0
          %v2080 = vpop.f32.mrb[0].mxu0
          %v2081 = vadd.f32 0.0, %v2080
          %v2082 = vpop.f32.mrb[0].mxu0
          %2083 = vmatprep.mubr.bf16.mxu0 0
          %2084 = vmatmul.mubr.bf16.gmra.mrb[0].mxu0 %v1999
          %v2085 = vpop.f32.mrb[0].mxu0
          %v2086 = vadd.f32 0.0, %v2085
          %v2087 = vpop.f32.mrb[0].mxu0
          %v2088 = vpop.f32.mrb[0].mxu0
          %v2089 = vadd.f32 0.0, %v2088
          %v2090 = vpop.f32.mrb[0].mxu0
          %2091 = vmatprep.mubr.bf16.mxu0 0
          %2092 = vmatmul.mubr.bf16.gmra.mrb[0].mxu0 %v2002
          %v2093 = vpop.f32.mrb[0].mxu0
          %v2094 = vadd.f32 0.0, %v2093
          %v2095 = vpop.f32.mrb[0].mxu0
          %v2096 = vpop.f32.mrb[0].mxu0
          %v2097 = vadd.f32 0.0, %v2096
          %v2098 = vpop.f32.mrb[0].mxu0
          %2099 = vmatprep.mubr.bf16.mxu0 0
          %2100 = vmatmul.mubr.bf16.gmra.mrb[0].mxu0 %v2005
          %v2101 = vpop.f32.mrb[0].mxu0
          %v2102 = vadd.f32 0.0, %v2101
          %v2103 = vpop.f32.mrb[0].mxu0
          %v2104 = vpop.f32.mrb[0].mxu0
          %v2105 = vadd.f32 0.0, %v2104
          %v2106 = vpop.f32.mrb[0].mxu0
          %2107 = vmatprep.mubr.bf16.mxu0 0
          %2108 = vmatmul.mubr.bf16.gmra.mrb[0].mxu0 %v2008
          %v2109 = vpop.f32.mrb[0].mxu0
          %v2110 = vadd.f32 0.0, %v2109
          %v2111 = vpop.f32.mrb[0].mxu0
          %v2112 = vpop.f32.mrb[0].mxu0
          %v2113 = vadd.f32 0.0, %v2112
          %v2114 = vpop.f32.mrb[0].mxu0
          %2115 = vmatprep.mubr.bf16.mxu0 0
          %2116 = vmatmul.mubr.bf16.gmra.mrb[0].mxu0 %v2011
          %v2117 = vpop.f32.mrb[0].mxu0
          %v2118 = vadd.f32 0.0, %v2117
          %v2119 = vpop.f32.mrb[0].mxu0
          %v2120 = vpop.f32.mrb[0].mxu0
          %v2121 = vadd.f32 0.0, %v2120
          %v2122 = vpop.f32.mrb[0].mxu0
          %2123 = vmatprep.mubr.bf16.mxu0 0
          %2124 = vmatmul.mubr.bf16.gmra.mrb[0].mxu0 %v2014
          %v2125 = vpop.f32.mrb[0].mxu0
          %v2126 = vadd.f32 0.0, %v2125
          %v2127 = vpop.f32.mrb[0].mxu0
          %v2128 = vpop.f32.mrb[0].mxu0
          %v2129 = vadd.f32 0.0, %v2128
          %v2130 = vpop.f32.mrb[0].mxu0
          %2131 = vmatprep.mubr.bf16.mxu0 0
          %2132 = vmatmul.mubr.bf16.gmra.mrb[0].mxu0 %v2017
          %v2133 = vpop.f32.mrb[0].mxu0
          %v2134 = vadd.f32 0.0, %v2133
          %v2135 = vpop.f32.mrb[0].mxu0
          %v2136 = vpop.f32.mrb[0].mxu0
          %v2137 = vadd.f32 0.0, %v2136
          %v2138 = vpop.f32.mrb[0].mxu0
          %2139 = vmatprep.mubr.bf16.mxu0 0
          %2140 = vmatmul.mubr.bf16.gmra.mrb[0].mxu0 %v2020
          %v2141 = vpop.f32.mrb[0].mxu0
          %v2142 = vadd.f32 0.0, %v2141
          %v2143 = vpop.f32.mrb[0].mxu0
          %v2144 = vpop.f32.mrb[0].mxu0
          %v2145 = vadd.f32 0.0, %v2144
          %v2146 = vpop.f32.mrb[0].mxu0
          %2147 = vmatprep.mubr.bf16.mxu0 0
          %2148 = vmatmul.mubr.bf16.gmra.mrb[0].mxu0 %v2023
          %v2149 = vpop.f32.mrb[0].mxu0
          %v2150 = vadd.f32 0.0, %v2149
          %v2151 = vpop.f32.mrb[0].mxu0
          %v2152 = vpop.f32.mrb[0].mxu0
          %v2153 = vadd.f32 0.0, %v2152
          %v2154 = vpop.f32.mrb[0].mxu0
          %2155 = vmatprep.mubr.bf16.mxu0 0
          %2156 = vmatmul.mubr.bf16.gmra.mrb[0].mxu0 %v2026
          %v2157 = vpop.f32.mrb[0].mxu0
          %v2158 = vadd.f32 0.0, %v2157
          %v2159 = vpop.f32.mrb[0].mxu0
          %v2160 = vpop.f32.mrb[0].mxu0
          %v2161 = vadd.f32 0.0, %v2160
          %v2162 = vpop.f32.mrb[0].mxu0
          %2163 = vmatprep.mubr.bf16.mxu0 0
          %2164 = vmatmul.mubr.bf16.gmra.mrb[0].mxu0 %v2029
          %v2165 = vpop.f32.mrb[0].mxu0
          %v2166 = vadd.f32 0.0, %v2165
          %v2167 = vpop.f32.mrb[0].mxu0
          %v2168 = vpop.f32.mrb[0].mxu0
          %v2169 = vadd.f32 0.0, %v2168
          %v2170 = vpop.f32.mrb[0].mxu0
          %2171 = vmatprep.mubr.bf16.mxu0 0
          %2172 = vmatmul.mubr.bf16.gmra.mrb[0].mxu0 %v2032
          %v2173 = vpop.f32.mrb[0].mxu0
          %v2174 = vadd.f32 0.0, %v2173
          %v2175 = vpop.f32.mrb[0].mxu0
          %v2176 = vpop.f32.mrb[0].mxu0
          %v2177 = vadd.f32 0.0, %v2176
          %v2178 = vpop.f32.mrb[0].mxu0
          %2179 = vmatprep.mubr.bf16.mxu0 0
          %2180 = vmatmul.mubr.bf16.gmra.mrb[0].mxu0 %v2035
          %v2181 = vpop.f32.mrb[0].mxu0
          %v2182 = vadd.f32 0.0, %v2181
          %v2183 = vpop.f32.mrb[0].mxu0
          %v2184 = vpop.f32.mrb[0].mxu0
          %v2185 = vadd.f32 0.0, %v2184
          %v2186 = vpop.f32.mrb[0].mxu0
          %2187 = vmatprep.mubr.bf16.mxu0 0
          %2188 = vmatmul.mubr.bf16.gmra.mrb[0].mxu0 %v2038
          %v2189 = vpop.f32.mrb[0].mxu0
          %v2190 = vadd.f32 0.0, %v2189
          %v2191 = vpop.f32.mrb[0].mxu0
          %v2192 = vpop.f32.mrb[0].mxu0
          %v2193 = vadd.f32 0.0, %v2192
          %v2194 = vpop.f32.mrb[0].mxu0
          %2195 = vmatprep.mubr.bf16.mxu0 0
          %2196 = vmatmul.mubr.bf16.gmra.mrb[0].mxu0 %v2041
          %v2197 = vpop.f32.mrb[0].mxu0
          %v2198 = vadd.f32 0.0, %v2197
          %v2199 = vpop.f32.mrb[0].mxu0
          %v2200 = vpop.f32.mrb[0].mxu0
          %v2201 = vadd.f32 0.0, %v2200
          %v2202 = vpop.f32.mrb[0].mxu0
          %2203 = vdwg.mxu0
          %2204 = vxpose.xlu0.b32.start [1/16] %v2078, 128
          %2205 = vxpose.xlu0.b32.cont [2/16] %v2081, 128
          %2206 = vxpose.xlu0.b32.cont [3/16] 0.0, 128
          %2207 = vxpose.xlu0.b32.cont [4/16] 0.0, 128
          %2208 = vxpose.xlu0.b32.cont [5/16] 0.0, 128
          %2209 = vxpose.xlu0.b32.cont [6/16] 0.0, 128
          %2210 = vxpose.xlu0.b32.cont [7/16] 0.0, 128
          %2211 = vxpose.xlu0.b32.cont [8/16] 0.0, 128
          %2212 = vxpose.xlu0.b32.cont [9/16] 0.0, 128
          %2213 = vxpose.xlu0.b32.cont [10/16] 0.0, 128
          %2214 = vxpose.xlu0.b32.cont [11/16] 0.0, 128
          %2215 = vxpose.xlu0.b32.cont [12/16] 0.0, 128
          %2216 = vxpose.xlu0.b32.cont [13/16] 0.0, 128
          %2217 = vxpose.xlu0.b32.cont [14/16] 0.0, 128
          %2218 = vxpose.xlu0.b32.cont [15/16] 0.0, 128
          %2219 = vxpose.xlu0.b32.end [16/16] 0.0, 128
          %v2220 = vpop.trf.xlu0
          %v2221 = vpop.trf.xlu0
          %v2222 = vpop.trf.xlu0
          %v2223 = vpop.trf.xlu0
          %v2224 = vpop.trf.xlu0
          %v2225 = vpop.trf.xlu0
          %v2226 = vpop.trf.xlu0
          %v2227 = vpop.trf.xlu0
          %v2228 = vpop.trf.xlu0
          %v2229 = vpop.trf.xlu0
          %v2230 = vpop.trf.xlu0
          %v2231 = vpop.trf.xlu0
          %v2232 = vpop.trf.xlu0
          %v2233 = vpop.trf.xlu0
          %v2234 = vpop.trf.xlu0
          %v2235 = vpop.trf.xlu0
          %2236 = vxpose.xlu0.b32.start [1/16] %v2086, 128
          %2237 = vxpose.xlu0.b32.cont [2/16] %v2089, 128
          %2238 = vxpose.xlu0.b32.cont [3/16] 0.0, 128
          %2239 = vxpose.xlu0.b32.cont [4/16] 0.0, 128
          %2240 = vxpose.xlu0.b32.cont [5/16] 0.0, 128
          %2241 = vxpose.xlu0.b32.cont [6/16] 0.0, 128
          %2242 = vxpose.xlu0.b32.cont [7/16] 0.0, 128
          %2243 = vxpose.xlu0.b32.cont [8/16] 0.0, 128
          %2244 = vxpose.xlu0.b32.cont [9/16] 0.0, 128
          %2245 = vxpose.xlu0.b32.cont [10/16] 0.0, 128
          %2246 = vxpose.xlu0.b32.cont [11/16] 0.0, 128
          %2247 = vxpose.xlu0.b32.cont [12/16] 0.0, 128
          %2248 = vxpose.xlu0.b32.cont [13/16] 0.0, 128
          %2249 = vxpose.xlu0.b32.cont [14/16] 0.0, 128
          %2250 = vxpose.xlu0.b32.cont [15/16] 0.0, 128
          %2251 = vxpose.xlu0.b32.end [16/16] 0.0, 128
          %v2252 = vpop.trf.xlu0
          %v2253 = vpop.trf.xlu0
          %v2254 = vpop.trf.xlu0
          %v2255 = vpop.trf.xlu0
          %v2256 = vpop.trf.xlu0
          %v2257 = vpop.trf.xlu0
          %v2258 = vpop.trf.xlu0
          %v2259 = vpop.trf.xlu0
          %v2260 = vpop.trf.xlu0
          %v2261 = vpop.trf.xlu0
          %v2262 = vpop.trf.xlu0
          %v2263 = vpop.trf.xlu0
          %v2264 = vpop.trf.xlu0
          %v2265 = vpop.trf.xlu0
          %v2266 = vpop.trf.xlu0
          %v2267 = vpop.trf.xlu0
          %2268 = vxpose.xlu0.b32.start [1/16] %v2094, 128
          %2269 = vxpose.xlu0.b32.cont [2/16] %v2097, 128
          %2270 = vxpose.xlu0.b32.cont [3/16] 0.0, 128
          %2271 = vxpose.xlu0.b32.cont [4/16] 0.0, 128
          %2272 = vxpose.xlu0.b32.cont [5/16] 0.0, 128
          %2273 = vxpose.xlu0.b32.cont [6/16] 0.0, 128
          %2274 = vxpose.xlu0.b32.cont [7/16] 0.0, 128
          %2275 = vxpose.xlu0.b32.cont [8/16] 0.0, 128
          %2276 = vxpose.xlu0.b32.cont [9/16] 0.0, 128
          %2277 = vxpose.xlu0.b32.cont [10/16] 0.0, 128
          %2278 = vxpose.xlu0.b32.cont [11/16] 0.0, 128
          %2279 = vxpose.xlu0.b32.cont [12/16] 0.0, 128
          %2280 = vxpose.xlu0.b32.cont [13/16] 0.0, 128
          %2281 = vxpose.xlu0.b32.cont [14/16] 0.0, 128
          %2282 = vxpose.xlu0.b32.cont [15/16] 0.0, 128
          %2283 = vxpose.xlu0.b32.end [16/16] 0.0, 128
          %v2284 = vpop.trf.xlu0
          %v2285 = vpop.trf.xlu0
          %v2286 = vpop.trf.xlu0
          %v2287 = vpop.trf.xlu0
          %v2288 = vpop.trf.xlu0
          %v2289 = vpop.trf.xlu0
          %v2290 = vpop.trf.xlu0
          %v2291 = vpop.trf.xlu0
          %v2292 = vpop.trf.xlu0
          %v2293 = vpop.trf.xlu0
          %v2294 = vpop.trf.xlu0
          %v2295 = vpop.trf.xlu0
          %v2296 = vpop.trf.xlu0
          %v2297 = vpop.trf.xlu0
          %v2298 = vpop.trf.xlu0
          %v2299 = vpop.trf.xlu0
          %2300 = vxpose.xlu0.b32.start [1/16] %v2102, 128
          %2301 = vxpose.xlu0.b32.cont [2/16] %v2105, 128
          %2302 = vxpose.xlu0.b32.cont [3/16] 0.0, 128
          %2303 = vxpose.xlu0.b32.cont [4/16] 0.0, 128
          %2304 = vxpose.xlu0.b32.cont [5/16] 0.0, 128
          %2305 = vxpose.xlu0.b32.cont [6/16] 0.0, 128
          %2306 = vxpose.xlu0.b32.cont [7/16] 0.0, 128
          %2307 = vxpose.xlu0.b32.cont [8/16] 0.0, 128
          %2308 = vxpose.xlu0.b32.cont [9/16] 0.0, 128
          %2309 = vxpose.xlu0.b32.cont [10/16] 0.0, 128
          %2310 = vxpose.xlu0.b32.cont [11/16] 0.0, 128
          %2311 = vxpose.xlu0.b32.cont [12/16] 0.0, 128
          %2312 = vxpose.xlu0.b32.cont [13/16] 0.0, 128
          %2313 = vxpose.xlu0.b32.cont [14/16] 0.0, 128
          %2314 = vxpose.xlu0.b32.cont [15/16] 0.0, 128
          %2315 = vxpose.xlu0.b32.end [16/16] 0.0, 128
          %v2316 = vpop.trf.xlu0
          %v2317 = vpop.trf.xlu0
          %v2318 = vpop.trf.xlu0
          %v2319 = vpop.trf.xlu0
          %v2320 = vpop.trf.xlu0
          %v2321 = vpop.trf.xlu0
          %v2322 = vpop.trf.xlu0
          %v2323 = vpop.trf.xlu0
          %v2324 = vpop.trf.xlu0
          %v2325 = vpop.trf.xlu0
          %v2326 = vpop.trf.xlu0
          %v2327 = vpop.trf.xlu0
          %v2328 = vpop.trf.xlu0
          %v2329 = vpop.trf.xlu0
          %v2330 = vpop.trf.xlu0
          %v2331 = vpop.trf.xlu0
          %2332 = vxpose.xlu0.b32.start [1/16] %v2110, 128
          %2333 = vxpose.xlu0.b32.cont [2/16] %v2113, 128
          %2334 = vxpose.xlu0.b32.cont [3/16] 0.0, 128
          %2335 = vxpose.xlu0.b32.cont [4/16] 0.0, 128
          %2336 = vxpose.xlu0.b32.cont [5/16] 0.0, 128
          %2337 = vxpose.xlu0.b32.cont [6/16] 0.0, 128
          %2338 = vxpose.xlu0.b32.cont [7/16] 0.0, 128
          %2339 = vxpose.xlu0.b32.cont [8/16] 0.0, 128
          %2340 = vxpose.xlu0.b32.cont [9/16] 0.0, 128
          %2341 = vxpose.xlu0.b32.cont [10/16] 0.0, 128
          %2342 = vxpose.xlu0.b32.cont [11/16] 0.0, 128
          %2343 = vxpose.xlu0.b32.cont [12/16] 0.0, 128
          %2344 = vxpose.xlu0.b32.cont [13/16] 0.0, 128
          %2345 = vxpose.xlu0.b32.cont [14/16] 0.0, 128
          %2346 = vxpose.xlu0.b32.cont [15/16] 0.0, 128
          %2347 = vxpose.xlu0.b32.end [16/16] 0.0, 128
          %v2348 = vpop.trf.xlu0
          %v2349 = vpop.trf.xlu0
          %v2350 = vpop.trf.xlu0
          %v2351 = vpop.trf.xlu0
          %v2352 = vpop.trf.xlu0
          %v2353 = vpop.trf.xlu0
          %v2354 = vpop.trf.xlu0
          %v2355 = vpop.trf.xlu0
          %v2356 = vpop.trf.xlu0
          %v2357 = vpop.trf.xlu0
          %v2358 = vpop.trf.xlu0
          %v2359 = vpop.trf.xlu0
          %v2360 = vpop.trf.xlu0
          %v2361 = vpop.trf.xlu0
          %v2362 = vpop.trf.xlu0
          %v2363 = vpop.trf.xlu0
          %2364 = vxpose.xlu0.b32.start [1/16] %v2118, 128
          %2365 = vxpose.xlu0.b32.cont [2/16] %v2121, 128
          %2366 = vxpose.xlu0.b32.cont [3/16] 0.0, 128
          %2367 = vxpose.xlu0.b32.cont [4/16] 0.0, 128
          %2368 = vxpose.xlu0.b32.cont [5/16] 0.0, 128
          %2369 = vxpose.xlu0.b32.cont [6/16] 0.0, 128
          %2370 = vxpose.xlu0.b32.cont [7/16] 0.0, 128
          %2371 = vxpose.xlu0.b32.cont [8/16] 0.0, 128
          %2372 = vxpose.xlu0.b32.cont [9/16] 0.0, 128
          %2373 = vxpose.xlu0.b32.cont [10/16] 0.0, 128
          %2374 = vxpose.xlu0.b32.cont [11/16] 0.0, 128
          %2375 = vxpose.xlu0.b32.cont [12/16] 0.0, 128
          %2376 = vxpose.xlu0.b32.cont [13/16] 0.0, 128
          %2377 = vxpose.xlu0.b32.cont [14/16] 0.0, 128
          %2378 = vxpose.xlu0.b32.cont [15/16] 0.0, 128
          %2379 = vxpose.xlu0.b32.end [16/16] 0.0, 128
          %v2380 = vpop.trf.xlu0
          %v2381 = vpop.trf.xlu0
          %v2382 = vpop.trf.xlu0
          %v2383 = vpop.trf.xlu0
          %v2384 = vpop.trf.xlu0
          %v2385 = vpop.trf.xlu0
          %v2386 = vpop.trf.xlu0
          %v2387 = vpop.trf.xlu0
          %v2388 = vpop.trf.xlu0
          %v2389 = vpop.trf.xlu0
          %v2390 = vpop.trf.xlu0
          %v2391 = vpop.trf.xlu0
          %v2392 = vpop.trf.xlu0
          %v2393 = vpop.trf.xlu0
          %v2394 = vpop.trf.xlu0
          %v2395 = vpop.trf.xlu0
          %2396 = vxpose.xlu0.b32.start [1/16] %v2126, 128
          %2397 = vxpose.xlu0.b32.cont [2/16] %v2129, 128
          %2398 = vxpose.xlu0.b32.cont [3/16] 0.0, 128
          %2399 = vxpose.xlu0.b32.cont [4/16] 0.0, 128
          %2400 = vxpose.xlu0.b32.cont [5/16] 0.0, 128
          %2401 = vxpose.xlu0.b32.cont [6/16] 0.0, 128
          %2402 = vxpose.xlu0.b32.cont [7/16] 0.0, 128
          %2403 = vxpose.xlu0.b32.cont [8/16] 0.0, 128
          %2404 = vxpose.xlu0.b32.cont [9/16] 0.0, 128
          %2405 = vxpose.xlu0.b32.cont [10/16] 0.0, 128
          %2406 = vxpose.xlu0.b32.cont [11/16] 0.0, 128
          %2407 = vxpose.xlu0.b32.cont [12/16] 0.0, 128
          %2408 = vxpose.xlu0.b32.cont [13/16] 0.0, 128
          %2409 = vxpose.xlu0.b32.cont [14/16] 0.0, 128
          %2410 = vxpose.xlu0.b32.cont [15/16] 0.0, 128
          %2411 = vxpose.xlu0.b32.end [16/16] 0.0, 128
          %v2412 = vpop.trf.xlu0
          %v2413 = vpop.trf.xlu0
          %v2414 = vpop.trf.xlu0
          %v2415 = vpop.trf.xlu0
          %v2416 = vpop.trf.xlu0
          %v2417 = vpop.trf.xlu0
          %v2418 = vpop.trf.xlu0
          %v2419 = vpop.trf.xlu0
          %v2420 = vpop.trf.xlu0
          %v2421 = vpop.trf.xlu0
          %v2422 = vpop.trf.xlu0
          %v2423 = vpop.trf.xlu0
          %v2424 = vpop.trf.xlu0
          %v2425 = vpop.trf.xlu0
          %v2426 = vpop.trf.xlu0
          %v2427 = vpop.trf.xlu0
          %2428 = vxpose.xlu0.b32.start [1/16] %v2134, 128
          %2429 = vxpose.xlu0.b32.cont [2/16] %v2137, 128
          %2430 = vxpose.xlu0.b32.cont [3/16] 0.0, 128
          %2431 = vxpose.xlu0.b32.cont [4/16] 0.0, 128
          %2432 = vxpose.xlu0.b32.cont [5/16] 0.0, 128
          %2433 = vxpose.xlu0.b32.cont [6/16] 0.0, 128
          %2434 = vxpose.xlu0.b32.cont [7/16] 0.0, 128
          %2435 = vxpose.xlu0.b32.cont [8/16] 0.0, 128
          %2436 = vxpose.xlu0.b32.cont [9/16] 0.0, 128
          %2437 = vxpose.xlu0.b32.cont [10/16] 0.0, 128
          %2438 = vxpose.xlu0.b32.cont [11/16] 0.0, 128
          %2439 = vxpose.xlu0.b32.cont [12/16] 0.0, 128
          %2440 = vxpose.xlu0.b32.cont [13/16] 0.0, 128
          %2441 = vxpose.xlu0.b32.cont [14/16] 0.0, 128
          %2442 = vxpose.xlu0.b32.cont [15/16] 0.0, 128
          %2443 = vxpose.xlu0.b32.end [16/16] 0.0, 128
          %v2444 = vpop.trf.xlu0
          %v2445 = vpop.trf.xlu0
          %v2446 = vpop.trf.xlu0
          %v2447 = vpop.trf.xlu0
          %v2448 = vpop.trf.xlu0
          %v2449 = vpop.trf.xlu0
          %v2450 = vpop.trf.xlu0
          %v2451 = vpop.trf.xlu0
          %v2452 = vpop.trf.xlu0
          %v2453 = vpop.trf.xlu0
          %v2454 = vpop.trf.xlu0
          %v2455 = vpop.trf.xlu0
          %v2456 = vpop.trf.xlu0
          %v2457 = vpop.trf.xlu0
          %v2458 = vpop.trf.xlu0
          %v2459 = vpop.trf.xlu0
          %2460 = vxpose.xlu0.b32.start [1/16] %v2142, 128
          %2461 = vxpose.xlu0.b32.cont [2/16] %v2145, 128
          %2462 = vxpose.xlu0.b32.cont [3/16] 0.0, 128
          %2463 = vxpose.xlu0.b32.cont [4/16] 0.0, 128
          %2464 = vxpose.xlu0.b32.cont [5/16] 0.0, 128
          %2465 = vxpose.xlu0.b32.cont [6/16] 0.0, 128
          %2466 = vxpose.xlu0.b32.cont [7/16] 0.0, 128
          %2467 = vxpose.xlu0.b32.cont [8/16] 0.0, 128
          %2468 = vxpose.xlu0.b32.cont [9/16] 0.0, 128
          %2469 = vxpose.xlu0.b32.cont [10/16] 0.0, 128
          %2470 = vxpose.xlu0.b32.cont [11/16] 0.0, 128
          %2471 = vxpose.xlu0.b32.cont [12/16] 0.0, 128
          %2472 = vxpose.xlu0.b32.cont [13/16] 0.0, 128
          %2473 = vxpose.xlu0.b32.cont [14/16] 0.0, 128
          %2474 = vxpose.xlu0.b32.cont [15/16] 0.0, 128
          %2475 = vxpose.xlu0.b32.end [16/16] 0.0, 128
          %v2476 = vpop.trf.xlu0
          %v2477 = vpop.trf.xlu0
          %v2478 = vpop.trf.xlu0
          %v2479 = vpop.trf.xlu0
          %v2480 = vpop.trf.xlu0
          %v2481 = vpop.trf.xlu0
          %v2482 = vpop.trf.xlu0
          %v2483 = vpop.trf.xlu0
          %v2484 = vpop.trf.xlu0
          %v2485 = vpop.trf.xlu0
          %v2486 = vpop.trf.xlu0
          %v2487 = vpop.trf.xlu0
          %v2488 = vpop.trf.xlu0
          %v2489 = vpop.trf.xlu0
          %v2490 = vpop.trf.xlu0
          %v2491 = vpop.trf.xlu0
          %2492 = vxpose.xlu0.b32.start [1/16] %v2150, 128
          %2493 = vxpose.xlu0.b32.cont [2/16] %v2153, 128
          %2494 = vxpose.xlu0.b32.cont [3/16] 0.0, 128
          %2495 = vxpose.xlu0.b32.cont [4/16] 0.0, 128
          %2496 = vxpose.xlu0.b32.cont [5/16] 0.0, 128
          %2497 = vxpose.xlu0.b32.cont [6/16] 0.0, 128
          %2498 = vxpose.xlu0.b32.cont [7/16] 0.0, 128
          %2499 = vxpose.xlu0.b32.cont [8/16] 0.0, 128
          %2500 = vxpose.xlu0.b32.cont [9/16] 0.0, 128
          %2501 = vxpose.xlu0.b32.cont [10/16] 0.0, 128
          %2502 = vxpose.xlu0.b32.cont [11/16] 0.0, 128
          %2503 = vxpose.xlu0.b32.cont [12/16] 0.0, 128
          %2504 = vxpose.xlu0.b32.cont [13/16] 0.0, 128
          %2505 = vxpose.xlu0.b32.cont [14/16] 0.0, 128
          %2506 = vxpose.xlu0.b32.cont [15/16] 0.0, 128
          %2507 = vxpose.xlu0.b32.end [16/16] 0.0, 128
          %v2508 = vpop.trf.xlu0
          %v2509 = vpop.trf.xlu0
          %v2510 = vpop.trf.xlu0
          %v2511 = vpop.trf.xlu0
          %v2512 = vpop.trf.xlu0
          %v2513 = vpop.trf.xlu0
          %v2514 = vpop.trf.xlu0
          %v2515 = vpop.trf.xlu0
          %v2516 = vpop.trf.xlu0
          %v2517 = vpop.trf.xlu0
          %v2518 = vpop.trf.xlu0
          %v2519 = vpop.trf.xlu0
          %v2520 = vpop.trf.xlu0
          %v2521 = vpop.trf.xlu0
          %v2522 = vpop.trf.xlu0
          %v2523 = vpop.trf.xlu0
          %2524 = vxpose.xlu0.b32.start [1/16] %v2158, 128
          %2525 = vxpose.xlu0.b32.cont [2/16] %v2161, 128
          %2526 = vxpose.xlu0.b32.cont [3/16] 0.0, 128
          %2527 = vxpose.xlu0.b32.cont [4/16] 0.0, 128
          %2528 = vxpose.xlu0.b32.cont [5/16] 0.0, 128
          %2529 = vxpose.xlu0.b32.cont [6/16] 0.0, 128
          %2530 = vxpose.xlu0.b32.cont [7/16] 0.0, 128
          %2531 = vxpose.xlu0.b32.cont [8/16] 0.0, 128
          %2532 = vxpose.xlu0.b32.cont [9/16] 0.0, 128
          %2533 = vxpose.xlu0.b32.cont [10/16] 0.0, 128
          %2534 = vxpose.xlu0.b32.cont [11/16] 0.0, 128
          %2535 = vxpose.xlu0.b32.cont [12/16] 0.0, 128
          %2536 = vxpose.xlu0.b32.cont [13/16] 0.0, 128
          %2537 = vxpose.xlu0.b32.cont [14/16] 0.0, 128
          %2538 = vxpose.xlu0.b32.cont [15/16] 0.0, 128
          %2539 = vxpose.xlu0.b32.end [16/16] 0.0, 128
          %v2540 = vpop.trf.xlu0
          %v2541 = vpop.trf.xlu0
          %v2542 = vpop.trf.xlu0
          %v2543 = vpop.trf.xlu0
          %v2544 = vpop.trf.xlu0
          %v2545 = vpop.trf.xlu0
          %v2546 = vpop.trf.xlu0
          %v2547 = vpop.trf.xlu0
          %v2548 = vpop.trf.xlu0
          %v2549 = vpop.trf.xlu0
          %v2550 = vpop.trf.xlu0
          %v2551 = vpop.trf.xlu0
          %v2552 = vpop.trf.xlu0
          %v2553 = vpop.trf.xlu0
          %v2554 = vpop.trf.xlu0
          %v2555 = vpop.trf.xlu0
          %2556 = vxpose.xlu0.b32.start [1/16] %v2166, 128
          %2557 = vxpose.xlu0.b32.cont [2/16] %v2169, 128
          %2558 = vxpose.xlu0.b32.cont [3/16] 0.0, 128
          %2559 = vxpose.xlu0.b32.cont [4/16] 0.0, 128
          %2560 = vxpose.xlu0.b32.cont [5/16] 0.0, 128
          %2561 = vxpose.xlu0.b32.cont [6/16] 0.0, 128
          %2562 = vxpose.xlu0.b32.cont [7/16] 0.0, 128
          %2563 = vxpose.xlu0.b32.cont [8/16] 0.0, 128
          %2564 = vxpose.xlu0.b32.cont [9/16] 0.0, 128
          %2565 = vxpose.xlu0.b32.cont [10/16] 0.0, 128
          %2566 = vxpose.xlu0.b32.cont [11/16] 0.0, 128
          %2567 = vxpose.xlu0.b32.cont [12/16] 0.0, 128
          %2568 = vxpose.xlu0.b32.cont [13/16] 0.0, 128
          %2569 = vxpose.xlu0.b32.cont [14/16] 0.0, 128
          %2570 = vxpose.xlu0.b32.cont [15/16] 0.0, 128
          %2571 = vxpose.xlu0.b32.end [16/16] 0.0, 128
          %v2572 = vpop.trf.xlu0
          %v2573 = vpop.trf.xlu0
          %v2574 = vpop.trf.xlu0
          %v2575 = vpop.trf.xlu0
          %v2576 = vpop.trf.xlu0
          %v2577 = vpop.trf.xlu0
          %v2578 = vpop.trf.xlu0
          %v2579 = vpop.trf.xlu0
          %v2580 = vpop.trf.xlu0
          %v2581 = vpop.trf.xlu0
          %v2582 = vpop.trf.xlu0
          %v2583 = vpop.trf.xlu0
          %v2584 = vpop.trf.xlu0
          %v2585 = vpop.trf.xlu0
          %v2586 = vpop.trf.xlu0
          %v2587 = vpop.trf.xlu0
          %2588 = vxpose.xlu0.b32.start [1/16] %v2174, 128
          %2589 = vxpose.xlu0.b32.cont [2/16] %v2177, 128
          %2590 = vxpose.xlu0.b32.cont [3/16] 0.0, 128
          %2591 = vxpose.xlu0.b32.cont [4/16] 0.0, 128
          %2592 = vxpose.xlu0.b32.cont [5/16] 0.0, 128
          %2593 = vxpose.xlu0.b32.cont [6/16] 0.0, 128
          %2594 = vxpose.xlu0.b32.cont [7/16] 0.0, 128
          %2595 = vxpose.xlu0.b32.cont [8/16] 0.0, 128
          %2596 = vxpose.xlu0.b32.cont [9/16] 0.0, 128
          %2597 = vxpose.xlu0.b32.cont [10/16] 0.0, 128
          %2598 = vxpose.xlu0.b32.cont [11/16] 0.0, 128
          %2599 = vxpose.xlu0.b32.cont [12/16] 0.0, 128
          %2600 = vxpose.xlu0.b32.cont [13/16] 0.0, 128
          %2601 = vxpose.xlu0.b32.cont [14/16] 0.0, 128
          %2602 = vxpose.xlu0.b32.cont [15/16] 0.0, 128
          %2603 = vxpose.xlu0.b32.end [16/16] 0.0, 128
          %v2604 = vpop.trf.xlu0
          %v2605 = vpop.trf.xlu0
          %v2606 = vpop.trf.xlu0
          %v2607 = vpop.trf.xlu0
          %v2608 = vpop.trf.xlu0
          %v2609 = vpop.trf.xlu0
          %v2610 = vpop.trf.xlu0
          %v2611 = vpop.trf.xlu0
          %v2612 = vpop.trf.xlu0
          %v2613 = vpop.trf.xlu0
          %v2614 = vpop.trf.xlu0
          %v2615 = vpop.trf.xlu0
          %v2616 = vpop.trf.xlu0
          %v2617 = vpop.trf.xlu0
          %v2618 = vpop.trf.xlu0
          %v2619 = vpop.trf.xlu0
          %2620 = vxpose.xlu0.b32.start [1/16] %v2182, 128
          %2621 = vxpose.xlu0.b32.cont [2/16] %v2185, 128
          %2622 = vxpose.xlu0.b32.cont [3/16] 0.0, 128
          %2623 = vxpose.xlu0.b32.cont [4/16] 0.0, 128
          %2624 = vxpose.xlu0.b32.cont [5/16] 0.0, 128
          %2625 = vxpose.xlu0.b32.cont [6/16] 0.0, 128
          %2626 = vxpose.xlu0.b32.cont [7/16] 0.0, 128
          %2627 = vxpose.xlu0.b32.cont [8/16] 0.0, 128
          %2628 = vxpose.xlu0.b32.cont [9/16] 0.0, 128
          %2629 = vxpose.xlu0.b32.cont [10/16] 0.0, 128
          %2630 = vxpose.xlu0.b32.cont [11/16] 0.0, 128
          %2631 = vxpose.xlu0.b32.cont [12/16] 0.0, 128
          %2632 = vxpose.xlu0.b32.cont [13/16] 0.0, 128
          %2633 = vxpose.xlu0.b32.cont [14/16] 0.0, 128
          %2634 = vxpose.xlu0.b32.cont [15/16] 0.0, 128
          %2635 = vxpose.xlu0.b32.end [16/16] 0.0, 128
          %v2636 = vpop.trf.xlu0
          %v2637 = vpop.trf.xlu0
          %v2638 = vpop.trf.xlu0
          %v2639 = vpop.trf.xlu0
          %v2640 = vpop.trf.xlu0
          %v2641 = vpop.trf.xlu0
          %v2642 = vpop.trf.xlu0
          %v2643 = vpop.trf.xlu0
          %v2644 = vpop.trf.xlu0
          %v2645 = vpop.trf.xlu0
          %v2646 = vpop.trf.xlu0
          %v2647 = vpop.trf.xlu0
          %v2648 = vpop.trf.xlu0
          %v2649 = vpop.trf.xlu0
          %v2650 = vpop.trf.xlu0
          %v2651 = vpop.trf.xlu0
          %2652 = vxpose.xlu0.b32.start [1/16] %v2190, 128
          %2653 = vxpose.xlu0.b32.cont [2/16] %v2193, 128
          %2654 = vxpose.xlu0.b32.cont [3/16] 0.0, 128
          %2655 = vxpose.xlu0.b32.cont [4/16] 0.0, 128
          %2656 = vxpose.xlu0.b32.cont [5/16] 0.0, 128
          %2657 = vxpose.xlu0.b32.cont [6/16] 0.0, 128
          %2658 = vxpose.xlu0.b32.cont [7/16] 0.0, 128
          %2659 = vxpose.xlu0.b32.cont [8/16] 0.0, 128
          %2660 = vxpose.xlu0.b32.cont [9/16] 0.0, 128
          %2661 = vxpose.xlu0.b32.cont [10/16] 0.0, 128
          %2662 = vxpose.xlu0.b32.cont [11/16] 0.0, 128
          %2663 = vxpose.xlu0.b32.cont [12/16] 0.0, 128
          %2664 = vxpose.xlu0.b32.cont [13/16] 0.0, 128
          %2665 = vxpose.xlu0.b32.cont [14/16] 0.0, 128
          %2666 = vxpose.xlu0.b32.cont [15/16] 0.0, 128
          %2667 = vxpose.xlu0.b32.end [16/16] 0.0, 128
          %v2668 = vpop.trf.xlu0
          %v2669 = vpop.trf.xlu0
          %v2670 = vpop.trf.xlu0
          %v2671 = vpop.trf.xlu0
          %v2672 = vpop.trf.xlu0
          %v2673 = vpop.trf.xlu0
          %v2674 = vpop.trf.xlu0
          %v2675 = vpop.trf.xlu0
          %v2676 = vpop.trf.xlu0
          %v2677 = vpop.trf.xlu0
          %v2678 = vpop.trf.xlu0
          %v2679 = vpop.trf.xlu0
          %v2680 = vpop.trf.xlu0
          %v2681 = vpop.trf.xlu0
          %v2682 = vpop.trf.xlu0
          %v2683 = vpop.trf.xlu0
          %2684 = vxpose.xlu0.b32.start [1/16] %v2198, 128
          %2685 = vxpose.xlu0.b32.cont [2/16] %v2201, 128
          %2686 = vxpose.xlu0.b32.cont [3/16] 0.0, 128
          %2687 = vxpose.xlu0.b32.cont [4/16] 0.0, 128
          %2688 = vxpose.xlu0.b32.cont [5/16] 0.0, 128
          %2689 = vxpose.xlu0.b32.cont [6/16] 0.0, 128
          %2690 = vxpose.xlu0.b32.cont [7/16] 0.0, 128
          %2691 = vxpose.xlu0.b32.cont [8/16] 0.0, 128
          %2692 = vxpose.xlu0.b32.cont [9/16] 0.0, 128
          %2693 = vxpose.xlu0.b32.cont [10/16] 0.0, 128
          %2694 = vxpose.xlu0.b32.cont [11/16] 0.0, 128
          %2695 = vxpose.xlu0.b32.cont [12/16] 0.0, 128
          %2696 = vxpose.xlu0.b32.cont [13/16] 0.0, 128
          %2697 = vxpose.xlu0.b32.cont [14/16] 0.0, 128
          %2698 = vxpose.xlu0.b32.cont [15/16] 0.0, 128
          %2699 = vxpose.xlu0.b32.end [16/16] 0.0, 128
          %v2700 = vpop.trf.xlu0
          %v2701 = vpop.trf.xlu0
          %v2702 = vpop.trf.xlu0
          %v2703 = vpop.trf.xlu0
          %v2704 = vpop.trf.xlu0
          %v2705 = vpop.trf.xlu0
          %v2706 = vpop.trf.xlu0
          %v2707 = vpop.trf.xlu0
          %v2708 = vpop.trf.xlu0
          %v2709 = vpop.trf.xlu0
          %v2710 = vpop.trf.xlu0
          %v2711 = vpop.trf.xlu0
          %v2712 = vpop.trf.xlu0
          %v2713 = vpop.trf.xlu0
          %v2714 = vpop.trf.xlu0
          %v2715 = vpop.trf.xlu0
          %v2716 = vld [vmem:[%s4] sm:$0xff]
          %v2717 = vld [vmem:[%s4 + $0x8] sm:$0xff]
          %v2718 = vld [vmem:[%s6] sm:$0x1]
          %s2720 = vtos %v2718
          %v2721 = vstv %s2720
          %v2739 = vrot.slane %v2252, 7
          %vm2740 = vcmask 1041409
          %v2741 = vsel %vm2740, %v2739, %v2220
          %v2742 = vrot.slane %v2284, 6
          %vm2743 = vcmask 1042434
          %v2744 = vsel %vm2743, %v2742, %v2741
          %v2745 = vrot.slane %v2316, 5
          %vm2746 = vcmask 1043459
          %v2747 = vsel %vm2746, %v2745, %v2744
          %v2748 = vrot.slane %v2348, 4
          %vm2749 = vcmask 1044484
          %v2750 = vsel %vm2749, %v2748, %v2747
          %v2751 = vrot.slane %v2380, 3
          %vm2752 = vcmask 1045509
          %v2753 = vsel %vm2752, %v2751, %v2750
          %v2754 = vrot.slane %v2412, 2
          %vm2755 = vcmask 1046534
          %v2756 = vsel %vm2755, %v2754, %v2753
          %v2757 = vrot.slane %v2444, 1
          %vm2758 = vcmask 1047559
          %v2759 = vsel %vm2758, %v2757, %v2756
          %v2760 = vrot.slane %v2508, 7
          %v2761 = vsel %vm2740, %v2760, %v2476
          %v2762 = vrot.slane %v2540, 6
          %v2763 = vsel %vm2743, %v2762, %v2761
          %v2764 = vrot.slane %v2572, 5
          %v2765 = vsel %vm2746, %v2764, %v2763
          %v2766 = vrot.slane %v2604, 4
          %v2767 = vsel %vm2749, %v2766, %v2765
          %v2768 = vrot.slane %v2636, 3
          %v2769 = vsel %vm2752, %v2768, %v2767
          %v2770 = vrot.slane %v2668, 2
          %v2771 = vsel %vm2755, %v2770, %v2769
          %v2772 = vrot.slane %v2700, 1
          %v2773 = vsel %vm2758, %v2772, %v2771
          %v2774 = vsel %vm1524, %v2759, 0
          %v2776 = vsel %vm1524, %v2773, 0
          %2778 = vmatprep.subr.mxu0 0.0
          %2779 = vmatpush1.msra.mxu0 %v2716
          %2780 = vmatprep.subr.mxu0 0.0
          %2781 = vmatpush1.msra.mxu0 %v2717
          %2782 = vmatprep.subr.mxu0 0.0
          %2783 = vmatpush1.msra.mxu0 0.0
          %2784 = vmatprep.subr.mxu0 0.0
          %2785 = vmatpush1.msra.mxu0 0.0
          %2786 = vmatprep.subr.mxu0 0.0
          %2787 = vmatpush1.msra.mxu0 0.0
          %2788 = vmatprep.subr.mxu0 0.0
          %2789 = vmatpush1.msra.mxu0 0.0
          %2790 = vmatprep.subr.mxu0 0.0
          %2791 = vmatpush1.msra.mxu0 0.0
          %2792 = vmatprep.subr.mxu0 0.0
          %2793 = vmatpush1.msra.mxu0 0.0
          %2794 = vmatprep.subr.mxu0 0.0
          %2795 = vmatpush1.msra.mxu0 0.0
          %2796 = vmatprep.subr.mxu0 0.0
          %2797 = vmatpush1.msra.mxu0 0.0
          %2798 = vmatprep.subr.mxu0 0.0
          %2799 = vmatpush1.msra.mxu0 0.0
          %2800 = vmatprep.subr.mxu0 0.0
          %2801 = vmatpush1.msra.mxu0 0.0
          %2802 = vmatprep.subr.mxu0 0.0
          %2803 = vmatpush1.msra.mxu0 0.0
          %2804 = vmatprep.subr.mxu0 0.0
          %2805 = vmatpush1.msra.mxu0 0.0
          %2806 = vmatprep.subr.mxu0 0.0
          %2807 = vmatpush1.msra.mxu0 0.0
          %2808 = vmatprep.subr.mxu0 0.0
          %2809 = vmatpush1.msra.mxu0 0.0
          %2810 = vmatprep.subr.mxu0 0.0
          %2811 = vmatpush1.msra.mxu0 0.0
          %2812 = vmatprep.subr.mxu0 0.0
          %2813 = vmatpush1.msra.mxu0 0.0
          %2814 = vmatprep.subr.mxu0 0.0
          %2815 = vmatpush1.msra.mxu0 0.0
          %2816 = vmatprep.subr.mxu0 0.0
          %2817 = vmatpush1.msra.mxu0 0.0
          %2818 = vmatprep.subr.mxu0 0.0
          %2819 = vmatpush1.msra.mxu0 0.0
          %2820 = vmatprep.subr.mxu0 0.0
          %2821 = vmatpush1.msra.mxu0 0.0
          %2822 = vmatprep.subr.mxu0 0.0
          %2823 = vmatpush1.msra.mxu0 0.0
          %2824 = vmatprep.subr.mxu0 0.0
          %2825 = vmatpush1.msra.mxu0 0.0
          %2826 = vmatprep.subr.mxu0 0.0
          %2827 = vmatpush1.msra.mxu0 0.0
          %2828 = vmatprep.subr.mxu0 0.0
          %2829 = vmatpush1.msra.mxu0 0.0
          %2830 = vmatprep.subr.mxu0 0.0
          %2831 = vmatpush1.msra.mxu0 0.0
          %2832 = vmatprep.subr.mxu0 0.0
          %2833 = vmatpush1.msra.mxu0 0.0
          %2834 = vmatprep.subr.mxu0 0.0
          %2835 = vmatpush1.msra.mxu0 0.0
          %2836 = vmatprep.subr.mxu0 0.0
          %2837 = vmatpush1.msra.mxu0 0.0
          %2838 = vmatprep.subr.mxu0 0.0
          %2839 = vmatpush1.msra.mxu0 0.0
          %2840 = vmatprep.subr.mxu0 0.0
          %2841 = vmatpush1.msra.mxu0 0.0
          %2842 = vmatprep.mubr.f32.mxu0 0.0
          %2843 = vmatmul.mubr.f32.gmra.mrb[0].mxu0 %v2774
          %v2844 = vpop.f32.mrb[0].mxu0
          %v2845 = vadd.f32 %v2721, %v2844
          %v2846 = vpop.f32.mrb[0].mxu0
          %2847 = vmatprep.mubr.f32.mxu0 0.0
          %2848 = vmatmul.mubr.f32.gmra.mrb[0].mxu0 %v2776
          %v2849 = vpop.f32.mrb[0].mxu0
          %v2850 = vadd.f32 %v2721, %v2849
          %v2851 = vpop.f32.mrb[0].mxu0
          %2852 = vdwg.mxu0
          %2853 = vst.msk [vmem:[#allocation2] sm:$0xff] %vm1656, %v2845
          %2854 = vst.msk [vmem:[#allocation2 + $0x8] sm:$0xff] %vm1656, %v2850
          %v2855 = vld [vmem:[%s4] sm:$0xff]
          %v2856 = vld [vmem:[%s4 + $0x8] sm:$0xff]
          %v2857 = vld [vmem:[%s6 + $0x1] sm:$0x1]
          %s2859 = vtos %v2857
          %v2860 = vstv %s2859
          %v2862 = vrot.slane %v2220, 1
          %v2863 = vsel %vm2740, %v2252, %v2862
          %v2864 = vrot.slane %v2284, 7
          %v2865 = vsel %vm2743, %v2864, %v2863
          %v2866 = vrot.slane %v2316, 6
          %v2867 = vsel %vm2746, %v2866, %v2865
          %v2868 = vrot.slane %v2348, 5
          %v2869 = vsel %vm2749, %v2868, %v2867
          %v2870 = vrot.slane %v2380, 4
          %v2871 = vsel %vm2752, %v2870, %v2869
          %v2872 = vrot.slane %v2412, 3
          %v2873 = vsel %vm2755, %v2872, %v2871
          %v2874 = vrot.slane %v2444, 2
          %v2875 = vsel %vm2758, %v2874, %v2873
          %v2876 = vrot.slane %v2476, 1
          %v2877 = vsel %vm2740, %v2508, %v2876
          %v2878 = vrot.slane %v2540, 7
          %v2879 = vsel %vm2743, %v2878, %v2877
          %v2880 = vrot.slane %v2572, 6
          %v2881 = vsel %vm2746, %v2880, %v2879
          %v2882 = vrot.slane %v2604, 5
          %v2883 = vsel %vm2749, %v2882, %v2881
          %v2884 = vrot.slane %v2636, 4
          %v2885 = vsel %vm2752, %v2884, %v2883
          %v2886 = vrot.slane %v2668, 3
          %v2887 = vsel %vm2755, %v2886, %v2885
          %v2888 = vrot.slane %v2700, 2
          %v2889 = vsel %vm2758, %v2888, %v2887
          %v2890 = vsel %vm1524, %v2875, 0
          %v2892 = vsel %vm1524, %v2889, 0
          %2894 = vmatprep.subr.mxu0 0.0
          %2895 = vmatpush1.msra.mxu0 %v2855
          %2896 = vmatprep.subr.mxu0 0.0
          %2897 = vmatpush1.msra.mxu0 %v2856
          %2898 = vmatprep.subr.mxu0 0.0
          %2899 = vmatpush1.msra.mxu0 0.0
          %2900 = vmatprep.subr.mxu0 0.0
          %2901 = vmatpush1.msra.mxu0 0.0
          %2902 = vmatprep.subr.mxu0 0.0
          %2903 = vmatpush1.msra.mxu0 0.0
          %2904 = vmatprep.subr.mxu0 0.0
          %2905 = vmatpush1.msra.mxu0 0.0
          %2906 = vmatprep.subr.mxu0 0.0
          %2907 = vmatpush1.msra.mxu0 0.0
          %2908 = vmatprep.subr.mxu0 0.0
          %2909 = vmatpush1.msra.mxu0 0.0
          %2910 = vmatprep.subr.mxu0 0.0
          %2911 = vmatpush1.msra.mxu0 0.0
          %2912 = vmatprep.subr.mxu0 0.0
          %2913 = vmatpush1.msra.mxu0 0.0
          %2914 = vmatprep.subr.mxu0 0.0
          %2915 = vmatpush1.msra.mxu0 0.0
          %2916 = vmatprep.subr.mxu0 0.0
          %2917 = vmatpush1.msra.mxu0 0.0
          %2918 = vmatprep.subr.mxu0 0.0
          %2919 = vmatpush1.msra.mxu0 0.0
          %2920 = vmatprep.subr.mxu0 0.0
          %2921 = vmatpush1.msra.mxu0 0.0
          %2922 = vmatprep.subr.mxu0 0.0
          %2923 = vmatpush1.msra.mxu0 0.0
          %2924 = vmatprep.subr.mxu0 0.0
          %2925 = vmatpush1.msra.mxu0 0.0
          %2926 = vmatprep.subr.mxu0 0.0
          %2927 = vmatpush1.msra.mxu0 0.0
          %2928 = vmatprep.subr.mxu0 0.0
          %2929 = vmatpush1.msra.mxu0 0.0
          %2930 = vmatprep.subr.mxu0 0.0
          %2931 = vmatpush1.msra.mxu0 0.0
          %2932 = vmatprep.subr.mxu0 0.0
          %2933 = vmatpush1.msra.mxu0 0.0
          %2934 = vmatprep.subr.mxu0 0.0
          %2935 = vmatpush1.msra.mxu0 0.0
          %2936 = vmatprep.subr.mxu0 0.0
          %2937 = vmatpush1.msra.mxu0 0.0
          %2938 = vmatprep.subr.mxu0 0.0
          %2939 = vmatpush1.msra.mxu0 0.0
          %2940 = vmatprep.subr.mxu0 0.0
          %2941 = vmatpush1.msra.mxu0 0.0
          %2942 = vmatprep.subr.mxu0 0.0
          %2943 = vmatpush1.msra.mxu0 0.0
          %2944 = vmatprep.subr.mxu0 0.0
          %2945 = vmatpush1.msra.mxu0 0.0
          %2946 = vmatprep.subr.mxu0 0.0
          %2947 = vmatpush1.msra.mxu0 0.0
          %2948 = vmatprep.subr.mxu0 0.0
          %2949 = vmatpush1.msra.mxu0 0.0
          %2950 = vmatprep.subr.mxu0 0.0
          %2951 = vmatpush1.msra.mxu0 0.0
          %2952 = vmatprep.subr.mxu0 0.0
          %2953 = vmatpush1.msra.mxu0 0.0
          %2954 = vmatprep.subr.mxu0 0.0
          %2955 = vmatpush1.msra.mxu0 0.0
          %2956 = vmatprep.subr.mxu0 0.0
          %2957 = vmatpush1.msra.mxu0 0.0
          %2958 = vmatprep.mubr.f32.mxu0 0.0
          %2959 = vmatmul.mubr.f32.gmra.mrb[0].mxu0 %v2890
          %v2960 = vpop.f32.mrb[0].mxu0
          %v2961 = vadd.f32 %v2860, %v2960
          %v2962 = vpop.f32.mrb[0].mxu0
          %2963 = vmatprep.mubr.f32.mxu0 0.0
          %2964 = vmatmul.mubr.f32.gmra.mrb[0].mxu0 %v2892
          %v2965 = vpop.f32.mrb[0].mxu0
          %v2966 = vadd.f32 %v2860, %v2965
          %v2967 = vpop.f32.mrb[0].mxu0
          %2968 = vdwg.mxu0
          %s2969 = scalar_lea.vmem [#allocation2], 16
          %2970 = vst.msk [vmem:[%s2969] sm:$0xff] %vm1656, %v2961
          %2971 = vst.msk [vmem:[%s2969 + $0x8] sm:$0xff] %vm1656, %v2966
          %v2972 = vld [vmem:[%s4] sm:$0xff]
          %v2973 = vld [vmem:[%s4 + $0x8] sm:$0xff]
          %v2974 = vld [vmem:[%s6 + $0x2] sm:$0x1]
          %s2976 = vtos %v2974
          %v2977 = vstv %s2976
          %v2979 = vrot.slane %v2220, 2
          %v2980 = vrot.slane %v2252, 1
          %v2981 = vsel %vm2740, %v2980, %v2979
          %v2982 = vsel %vm2743, %v2284, %v2981
          %v2983 = vrot.slane %v2316, 7
          %v2984 = vsel %vm2746, %v2983, %v2982
          %v2985 = vrot.slane %v2348, 6
          %v2986 = vsel %vm2749, %v2985, %v2984
          %v2987 = vrot.slane %v2380, 5
          %v2988 = vsel %vm2752, %v2987, %v2986
          %v2989 = vrot.slane %v2412, 4
          %v2990 = vsel %vm2755, %v2989, %v2988
          %v2991 = vrot.slane %v2444, 3
          %v2992 = vsel %vm2758, %v2991, %v2990
          %v2993 = vrot.slane %v2476, 2
          %v2994 = vrot.slane %v2508, 1
          %v2995 = vsel %vm2740, %v2994, %v2993
          %v2996 = vsel %vm2743, %v2540, %v2995
          %v2997 = vrot.slane %v2572, 7
          %v2998 = vsel %vm2746, %v2997, %v2996
          %v2999 = vrot.slane %v2604, 6
          %v3000 = vsel %vm2749, %v2999, %v2998
          %v3001 = vrot.slane %v2636, 5
          %v3002 = vsel %vm2752, %v3001, %v3000
          %v3003 = vrot.slane %v2668, 4
          %v3004 = vsel %vm2755, %v3003, %v3002
          %v3005 = vrot.slane %v2700, 3
          %v3006 = vsel %vm2758, %v3005, %v3004
          %v3007 = vsel %vm1524, %v2992, 0
          %v3009 = vsel %vm1524, %v3006, 0
          %3011 = vmatprep.subr.mxu0 0.0
          %3012 = vmatpush1.msra.mxu0 %v2972
          %3013 = vmatprep.subr.mxu0 0.0
          %3014 = vmatpush1.msra.mxu0 %v2973
          %3015 = vmatprep.subr.mxu0 0.0
          %3016 = vmatpush1.msra.mxu0 0.0
          %3017 = vmatprep.subr.mxu0 0.0
          %3018 = vmatpush1.msra.mxu0 0.0
          %3019 = vmatprep.subr.mxu0 0.0
          %3020 = vmatpush1.msra.mxu0 0.0
          %3021 = vmatprep.subr.mxu0 0.0
          %3022 = vmatpush1.msra.mxu0 0.0
          %3023 = vmatprep.subr.mxu0 0.0
          %3024 = vmatpush1.msra.mxu0 0.0
          %3025 = vmatprep.subr.mxu0 0.0
          %3026 = vmatpush1.msra.mxu0 0.0
          %3027 = vmatprep.subr.mxu0 0.0
          %3028 = vmatpush1.msra.mxu0 0.0
          %3029 = vmatprep.subr.mxu0 0.0
          %3030 = vmatpush1.msra.mxu0 0.0
          %3031 = vmatprep.subr.mxu0 0.0
          %3032 = vmatpush1.msra.mxu0 0.0
          %3033 = vmatprep.subr.mxu0 0.0
          %3034 = vmatpush1.msra.mxu0 0.0
          %3035 = vmatprep.subr.mxu0 0.0
          %3036 = vmatpush1.msra.mxu0 0.0
          %3037 = vmatprep.subr.mxu0 0.0
          %3038 = vmatpush1.msra.mxu0 0.0
          %3039 = vmatprep.subr.mxu0 0.0
          %3040 = vmatpush1.msra.mxu0 0.0
          %3041 = vmatprep.subr.mxu0 0.0
          %3042 = vmatpush1.msra.mxu0 0.0
          %3043 = vmatprep.subr.mxu0 0.0
          %3044 = vmatpush1.msra.mxu0 0.0
          %3045 = vmatprep.subr.mxu0 0.0
          %3046 = vmatpush1.msra.mxu0 0.0
          %3047 = vmatprep.subr.mxu0 0.0
          %3048 = vmatpush1.msra.mxu0 0.0
          %3049 = vmatprep.subr.mxu0 0.0
          %3050 = vmatpush1.msra.mxu0 0.0
          %3051 = vmatprep.subr.mxu0 0.0
          %3052 = vmatpush1.msra.mxu0 0.0
          %3053 = vmatprep.subr.mxu0 0.0
          %3054 = vmatpush1.msra.mxu0 0.0
          %3055 = vmatprep.subr.mxu0 0.0
          %3056 = vmatpush1.msra.mxu0 0.0
          %3057 = vmatprep.subr.mxu0 0.0
          %3058 = vmatpush1.msra.mxu0 0.0
          %3059 = vmatprep.subr.mxu0 0.0
          %3060 = vmatpush1.msra.mxu0 0.0
          %3061 = vmatprep.subr.mxu0 0.0
          %3062 = vmatpush1.msra.mxu0 0.0
          %3063 = vmatprep.subr.mxu0 0.0
          %3064 = vmatpush1.msra.mxu0 0.0
          %3065 = vmatprep.subr.mxu0 0.0
          %3066 = vmatpush1.msra.mxu0 0.0
          %3067 = vmatprep.subr.mxu0 0.0
          %3068 = vmatpush1.msra.mxu0 0.0
          %3069 = vmatprep.subr.mxu0 0.0
          %3070 = vmatpush1.msra.mxu0 0.0
          %3071 = vmatprep.subr.mxu0 0.0
          %3072 = vmatpush1.msra.mxu0 0.0
          %3073 = vmatprep.subr.mxu0 0.0
          %3074 = vmatpush1.msra.mxu0 0.0
          %3075 = vmatprep.mubr.f32.mxu0 0.0
          %3076 = vmatmul.mubr.f32.gmra.mrb[0].mxu0 %v3007
          %v3077 = vpop.f32.mrb[0].mxu0
          %v3078 = vadd.f32 %v2977, %v3077
          %v3079 = vpop.f32.mrb[0].mxu0
          %3080 = vmatprep.mubr.f32.mxu0 0.0
          %3081 = vmatmul.mubr.f32.gmra.mrb[0].mxu0 %v3009
          %v3082 = vpop.f32.mrb[0].mxu0
          %v3083 = vadd.f32 %v2977, %v3082
          %v3084 = vpop.f32.mrb[0].mxu0
          %3085 = vdwg.mxu0
          %s3086 = scalar_lea.vmem [#allocation2], 32
          %3087 = vst.msk [vmem:[%s3086] sm:$0xff] %vm1656, %v3078
          %3088 = vst.msk [vmem:[%s3086 + $0x8] sm:$0xff] %vm1656, %v3083
        $region52: #{bisenet_head_forward.1} parent=47 // pred_fallthru
          _
        %v3089 = vld [vmem:[%s311] sm:$0xff]
        %v3090 = vld [vmem:[%s311 + $0x8] sm:$0xff]
        %v3091 = vld [vmem:[%s311 + $0x10] sm:$0xff]
        %v3092 = vld [vmem:[%s311 + $0x18] sm:$0xff]
        %v3093 = vld [vmem:[#allocation2] sm:$0xff]
        %v3094 = vld [vmem:[#allocation2 + $0x8] sm:$0xff]
        %vm3095 = vcmask 130048
        %v3097 = vsel %vm3095, %v3089, 0
        %v3100 = vsel %vm3095, %v3090, 0
        %v3103 = vsel %vm3095, %v3091, 0
        %v3106 = vsel %vm3095, %v3092, 0
        %3108 = vmatprep.subr.mxu0 0.0
        %3109 = vmatpush1.msra.mxu0 %v3093
        %3110 = vmatprep.subr.mxu0 0.0
        %3111 = vmatpush1.msra.mxu0 %v3094
        %3112 = vmatprep.subr.mxu0 0.0
        %3113 = vmatpush1.msra.mxu0 0.0
        %3114 = vmatprep.subr.mxu0 0.0
        %3115 = vmatpush1.msra.mxu0 0.0
        %3116 = vmatprep.subr.mxu0 0.0
        %3117 = vmatpush1.msra.mxu0 0.0
        %3118 = vmatprep.subr.mxu0 0.0
        %3119 = vmatpush1.msra.mxu0 0.0
        %3120 = vmatprep.subr.mxu0 0.0
        %3121 = vmatpush1.msra.mxu0 0.0
        %3122 = vmatprep.subr.mxu0 0.0
        %3123 = vmatpush1.msra.mxu0 0.0
        %3124 = vmatprep.subr.mxu0 0.0
        %3125 = vmatpush1.msra.mxu0 0.0
        %3126 = vmatprep.subr.mxu0 0.0
        %3127 = vmatpush1.msra.mxu0 0.0
        %3128 = vmatprep.subr.mxu0 0.0
        %3129 = vmatpush1.msra.mxu0 0.0
        %3130 = vmatprep.subr.mxu0 0.0
        %3131 = vmatpush1.msra.mxu0 0.0
        %3132 = vmatprep.subr.mxu0 0.0
        %3133 = vmatpush1.msra.mxu0 0.0
        %3134 = vmatprep.subr.mxu0 0.0
        %3135 = vmatpush1.msra.mxu0 0.0
        %3136 = vmatprep.subr.mxu0 0.0
        %3137 = vmatpush1.msra.mxu0 0.0
        %3138 = vmatprep.subr.mxu0 0.0
        %3139 = vmatpush1.msra.mxu0 0.0
        %3140 = vmatprep.subr.mxu0 0.0
        %3141 = vmatpush1.msra.mxu0 0.0
        %3142 = vmatprep.subr.mxu0 0.0
        %3143 = vmatpush1.msra.mxu0 0.0
        %3144 = vmatprep.subr.mxu0 0.0
        %3145 = vmatpush1.msra.mxu0 0.0
        %3146 = vmatprep.subr.mxu0 0.0
        %3147 = vmatpush1.msra.mxu0 0.0
        %3148 = vmatprep.subr.mxu0 0.0
        %3149 = vmatpush1.msra.mxu0 0.0
        %3150 = vmatprep.subr.mxu0 0.0
        %3151 = vmatpush1.msra.mxu0 0.0
        %3152 = vmatprep.subr.mxu0 0.0
        %3153 = vmatpush1.msra.mxu0 0.0
        %3154 = vmatprep.subr.mxu0 0.0
        %3155 = vmatpush1.msra.mxu0 0.0
        %3156 = vmatprep.subr.mxu0 0.0
        %3157 = vmatpush1.msra.mxu0 0.0
        %3158 = vmatprep.subr.mxu0 0.0
        %3159 = vmatpush1.msra.mxu0 0.0
        %3160 = vmatprep.subr.mxu0 0.0
        %3161 = vmatpush1.msra.mxu0 0.0
        %3162 = vmatprep.subr.mxu0 0.0
        %3163 = vmatpush1.msra.mxu0 0.0
        %3164 = vmatprep.subr.mxu0 0.0
        %3165 = vmatpush1.msra.mxu0 0.0
        %3166 = vmatprep.subr.mxu0 0.0
        %3167 = vmatpush1.msra.mxu0 0.0
        %3168 = vmatprep.subr.mxu0 0.0
        %3169 = vmatpush1.msra.mxu0 0.0
        %3170 = vmatprep.subr.mxu0 0.0
        %3171 = vmatpush1.msra.mxu0 0.0
        %3172 = vmatprep.mubr.f32.mxu0 0.0
        %3173 = vmatmul.mubr.f32.gmra.mrb[0].mxu0 %v3097
        %v3174 = vpop.f32.mrb[0].mxu0
        %v3175 = vadd.f32 0.0, %v3174
        %v3176 = vpop.f32.mrb[0].mxu0
        %3177 = vmatprep.mubr.f32.mxu0 0.0
        %3178 = vmatmul.mubr.f32.gmra.mrb[0].mxu0 %v3100
        %v3179 = vpop.f32.mrb[0].mxu0
        %v3180 = vadd.f32 0.0, %v3179
        %v3181 = vpop.f32.mrb[0].mxu0
        %3182 = vmatprep.mubr.f32.mxu0 0.0
        %3183 = vmatmul.mubr.f32.gmra.mrb[0].mxu0 %v3103
        %v3184 = vpop.f32.mrb[0].mxu0
        %v3185 = vadd.f32 0.0, %v3184
        %v3186 = vpop.f32.mrb[0].mxu0
        %3187 = vmatprep.mubr.f32.mxu0 0.0
        %3188 = vmatmul.mubr.f32.gmra.mrb[0].mxu0 %v3106
        %v3189 = vpop.f32.mrb[0].mxu0
        %v3190 = vadd.f32 0.0, %v3189
        %v3191 = vpop.f32.mrb[0].mxu0
        %3192 = vdwg.mxu0
        %vm3193 = vcmask 261120
        %3194 = vst.msk [vmem:[%s301] sm:$0xff] %vm3193, %v3175
        %3195 = vst.msk [vmem:[%s301 + $0x8] sm:$0xff] %vm3193, %v3180
        %3196 = vst.msk [vmem:[%s301 + $0x10] sm:$0xff] %vm3193, %v3185
        %3197 = vst.msk [vmem:[%s301 + $0x18] sm:$0xff] %vm3193, %v3190
        %s3198 = scalar_lea.vmem [#allocation2], 16
        %v3199 = vld [vmem:[%s3198] sm:$0xff]
        %v3200 = vld [vmem:[%s3198 + $0x8] sm:$0xff]
        %3201 = vmatprep.subr.mxu0 0.0
        %3202 = vmatpush1.msra.mxu0 %v3199
        %3203 = vmatprep.subr.mxu0 0.0
        %3204 = vmatpush1.msra.mxu0 %v3200
        %3205 = vmatprep.subr.mxu0 0.0
        %3206 = vmatpush1.msra.mxu0 0.0
        %3207 = vmatprep.subr.mxu0 0.0
        %3208 = vmatpush1.msra.mxu0 0.0
        %3209 = vmatprep.subr.mxu0 0.0
        %3210 = vmatpush1.msra.mxu0 0.0
        %3211 = vmatprep.subr.mxu0 0.0
        %3212 = vmatpush1.msra.mxu0 0.0
        %3213 = vmatprep.subr.mxu0 0.0
        %3214 = vmatpush1.msra.mxu0 0.0
        %3215 = vmatprep.subr.mxu0 0.0
        %3216 = vmatpush1.msra.mxu0 0.0
        %3217 = vmatprep.subr.mxu0 0.0
        %3218 = vmatpush1.msra.mxu0 0.0
        %3219 = vmatprep.subr.mxu0 0.0
        %3220 = vmatpush1.msra.mxu0 0.0
        %3221 = vmatprep.subr.mxu0 0.0
        %3222 = vmatpush1.msra.mxu0 0.0
        %3223 = vmatprep.subr.mxu0 0.0
        %3224 = vmatpush1.msra.mxu0 0.0
        %3225 = vmatprep.subr.mxu0 0.0
        %3226 = vmatpush1.msra.mxu0 0.0
        %3227 = vmatprep.subr.mxu0 0.0
        %3228 = vmatpush1.msra.mxu0 0.0
        %3229 = vmatprep.subr.mxu0 0.0
        %3230 = vmatpush1.msra.mxu0 0.0
        %3231 = vmatprep.subr.mxu0 0.0
        %3232 = vmatpush1.msra.mxu0 0.0
        %3233 = vmatprep.subr.mxu0 0.0
        %3234 = vmatpush1.msra.mxu0 0.0
        %3235 = vmatprep.subr.mxu0 0.0
        %3236 = vmatpush1.msra.mxu0 0.0
        %3237 = vmatprep.subr.mxu0 0.0
        %3238 = vmatpush1.msra.mxu0 0.0
        %3239 = vmatprep.subr.mxu0 0.0
        %3240 = vmatpush1.msra.mxu0 0.0
        %3241 = vmatprep.subr.mxu0 0.0
        %3242 = vmatpush1.msra.mxu0 0.0
        %3243 = vmatprep.subr.mxu0 0.0
        %3244 = vmatpush1.msra.mxu0 0.0
        %3245 = vmatprep.subr.mxu0 0.0
        %3246 = vmatpush1.msra.mxu0 0.0
        %3247 = vmatprep.subr.mxu0 0.0
        %3248 = vmatpush1.msra.mxu0 0.0
        %3249 = vmatprep.subr.mxu0 0.0
        %3250 = vmatpush1.msra.mxu0 0.0
        %3251 = vmatprep.subr.mxu0 0.0
        %3252 = vmatpush1.msra.mxu0 0.0
        %3253 = vmatprep.subr.mxu0 0.0
        %3254 = vmatpush1.msra.mxu0 0.0
        %3255 = vmatprep.subr.mxu0 0.0
        %3256 = vmatpush1.msra.mxu0 0.0
        %3257 = vmatprep.subr.mxu0 0.0
        %3258 = vmatpush1.msra.mxu0 0.0
        %3259 = vmatprep.subr.mxu0 0.0
        %3260 = vmatpush1.msra.mxu0 0.0
        %3261 = vmatprep.subr.mxu0 0.0
        %3262 = vmatpush1.msra.mxu0 0.0
        %3263 = vmatprep.subr.mxu0 0.0
        %3264 = vmatpush1.msra.mxu0 0.0
        %3265 = vmatprep.mubr.f32.mxu0 0.0
        %3266 = vmatmul.mubr.f32.gmra.mrb[0].mxu0 %v3097
        %v3267 = vpop.f32.mrb[0].mxu0
        %v3268 = vadd.f32 0.0, %v3267
        %v3269 = vpop.f32.mrb[0].mxu0
        %3270 = vmatprep.mubr.f32.mxu0 0.0
        %3271 = vmatmul.mubr.f32.gmra.mrb[0].mxu0 %v3100
        %v3272 = vpop.f32.mrb[0].mxu0
        %v3273 = vadd.f32 0.0, %v3272
        %v3274 = vpop.f32.mrb[0].mxu0
        %3275 = vmatprep.mubr.f32.mxu0 0.0
        %3276 = vmatmul.mubr.f32.gmra.mrb[0].mxu0 %v3103
        %v3277 = vpop.f32.mrb[0].mxu0
        %v3278 = vadd.f32 0.0, %v3277
        %v3279 = vpop.f32.mrb[0].mxu0
        %3280 = vmatprep.mubr.f32.mxu0 0.0
        %3281 = vmatmul.mubr.f32.gmra.mrb[0].mxu0 %v3106
        %v3282 = vpop.f32.mrb[0].mxu0
        %v3283 = vadd.f32 0.0, %v3282
        %v3284 = vpop.f32.mrb[0].mxu0
        %3285 = vdwg.mxu0
        %s3286 = scalar_lea.vmem %s301, 32 [#allocation3]
        %3287 = vst.msk [vmem:[%s3286] sm:$0xff] %vm3193, %v3268
        %3288 = vst.msk [vmem:[%s3286 + $0x8] sm:$0xff] %vm3193, %v3273
        %3289 = vst.msk [vmem:[%s3286 + $0x10] sm:$0xff] %vm3193, %v3278
        %3290 = vst.msk [vmem:[%s3286 + $0x18] sm:$0xff] %vm3193, %v3283
        %s3291 = scalar_lea.vmem [#allocation2], 32
        %v3292 = vld [vmem:[%s3291] sm:$0xff]
        %v3293 = vld [vmem:[%s3291 + $0x8] sm:$0xff]
        %3294 = vmatprep.subr.mxu0 0.0
        %3295 = vmatpush1.msra.mxu0 %v3292
        %3296 = vmatprep.subr.mxu0 0.0
        %3297 = vmatpush1.msra.mxu0 %v3293
        %3298 = vmatprep.subr.mxu0 0.0
        %3299 = vmatpush1.msra.mxu0 0.0
        %3300 = vmatprep.subr.mxu0 0.0
        %3301 = vmatpush1.msra.mxu0 0.0
        %3302 = vmatprep.subr.mxu0 0.0
        %3303 = vmatpush1.msra.mxu0 0.0
        %3304 = vmatprep.subr.mxu0 0.0
        %3305 = vmatpush1.msra.mxu0 0.0
        %3306 = vmatprep.subr.mxu0 0.0
        %3307 = vmatpush1.msra.mxu0 0.0
        %3308 = vmatprep.subr.mxu0 0.0
        %3309 = vmatpush1.msra.mxu0 0.0
        %3310 = vmatprep.subr.mxu0 0.0
        %3311 = vmatpush1.msra.mxu0 0.0
        %3312 = vmatprep.subr.mxu0 0.0
        %3313 = vmatpush1.msra.mxu0 0.0
        %3314 = vmatprep.subr.mxu0 0.0
        %3315 = vmatpush1.msra.mxu0 0.0
        %3316 = vmatprep.subr.mxu0 0.0
        %3317 = vmatpush1.msra.mxu0 0.0
        %3318 = vmatprep.subr.mxu0 0.0
        %3319 = vmatpush1.msra.mxu0 0.0
        %3320 = vmatprep.subr.mxu0 0.0
        %3321 = vmatpush1.msra.mxu0 0.0
        %3322 = vmatprep.subr.mxu0 0.0
        %3323 = vmatpush1.msra.mxu0 0.0
        %3324 = vmatprep.subr.mxu0 0.0
        %3325 = vmatpush1.msra.mxu0 0.0
        %3326 = vmatprep.subr.mxu0 0.0
        %3327 = vmatpush1.msra.mxu0 0.0
        %3328 = vmatprep.subr.mxu0 0.0
        %3329 = vmatpush1.msra.mxu0 0.0
        %3330 = vmatprep.subr.mxu0 0.0
        %3331 = vmatpush1.msra.mxu0 0.0
        %3332 = vmatprep.subr.mxu0 0.0
        %3333 = vmatpush1.msra.mxu0 0.0
        %3334 = vmatprep.subr.mxu0 0.0
        %3335 = vmatpush1.msra.mxu0 0.0
        %3336 = vmatprep.subr.mxu0 0.0
        %3337 = vmatpush1.msra.mxu0 0.0
        %3338 = vmatprep.subr.mxu0 0.0
        %3339 = vmatpush1.msra.mxu0 0.0
        %3340 = vmatprep.subr.mxu0 0.0
        %3341 = vmatpush1.msra.mxu0 0.0
        %3342 = vmatprep.subr.mxu0 0.0
        %3343 = vmatpush1.msra.mxu0 0.0
        %3344 = vmatprep.subr.mxu0 0.0
        %3345 = vmatpush1.msra.mxu0 0.0
        %3346 = vmatprep.subr.mxu0 0.0
        %3347 = vmatpush1.msra.mxu0 0.0
        %3348 = vmatprep.subr.mxu0 0.0
        %3349 = vmatpush1.msra.mxu0 0.0
        %3350 = vmatprep.subr.mxu0 0.0
        %3351 = vmatpush1.msra.mxu0 0.0
        %3352 = vmatprep.subr.mxu0 0.0
        %3353 = vmatpush1.msra.mxu0 0.0
        %3354 = vmatprep.subr.mxu0 0.0
        %3355 = vmatpush1.msra.mxu0 0.0
        %3356 = vmatprep.subr.mxu0 0.0
        %3357 = vmatpush1.msra.mxu0 0.0
        %3358 = vmatprep.mubr.f32.mxu0 0.0
        %3359 = vmatmul.mubr.f32.gmra.mrb[0].mxu0 %v3097
        %v3360 = vpop.f32.mrb[0].mxu0
        %v3361 = vadd.f32 0.0, %v3360
        %v3362 = vpop.f32.mrb[0].mxu0
        %3363 = vmatprep.mubr.f32.mxu0 0.0
        %3364 = vmatmul.mubr.f32.gmra.mrb[0].mxu0 %v3100
        %v3365 = vpop.f32.mrb[0].mxu0
        %v3366 = vadd.f32 0.0, %v3365
        %v3367 = vpop.f32.mrb[0].mxu0
        %3368 = vmatprep.mubr.f32.mxu0 0.0
        %3369 = vmatmul.mubr.f32.gmra.mrb[0].mxu0 %v3103
        %v3370 = vpop.f32.mrb[0].mxu0
        %v3371 = vadd.f32 0.0, %v3370
        %v3372 = vpop.f32.mrb[0].mxu0
        %3373 = vmatprep.mubr.f32.mxu0 0.0
        %3374 = vmatmul.mubr.f32.gmra.mrb[0].mxu0 %v3106
        %v3375 = vpop.f32.mrb[0].mxu0
        %v3376 = vadd.f32 0.0, %v3375
        %v3377 = vpop.f32.mrb[0].mxu0
        %3378 = vdwg.mxu0
        %s3379 = scalar_lea.vmem %s301, 64 [#allocation3]
        %3380 = vst.msk [vmem:[%s3379] sm:$0xff] %vm3193, %v3361
        %3381 = vst.msk [vmem:[%s3379 + $0x8] sm:$0xff] %vm3193, %v3366
        %3382 = vst.msk [vmem:[%s3379 + $0x10] sm:$0xff] %vm3193, %v3371
        %3383 = vst.msk [vmem:[%s3379 + $0x18] sm:$0xff] %vm3193, %v3376
        %s3384 = sand.u32 %s200, 1
        %s3385 = scalar_lea.sflag [#allocation4], %s3384
        %s3386 = sand.u32 %s200, 1
        %s3387 = smul.addr %s3386, 96
        %s3388 = scalar_lea.vmem [#allocation3], %s3387
        // Predicated region
        $region53: #{bisenet_head_forward.1} parent=47 // pred_check
          %p3389 = pneg %p210
        $region54: #{bisenet_head_forward.1} parent=47 // pred_check_branch
          %3391 = sbr.rel (%p3389) target = $region56
        $region55: #{bisenet_head_forward.1} parent=47 // pred_region
          %s3392 = smul.u32 4, %s26
          %s3394 = ssub.s32 1536, 1536
          %3395 = vsyncadd %s3385, %s3394
          %s3396 = smul.addr %s25, 12
          %s3397 = sadd.s32 %s3392, %s3396
          %s3398 = smul.addr %s3397, 128
          %s3399 = scalar_lea.hbm %s7, %s3398
          %s3400 = sshll.u32 %s3388, 4
          %s3401 = int_to_ptr.vmem [resolvable:$true] %s3400
          %3406 = dma.vmem_to_hbm [thread:$0]  %s3401, 1536, %s3399, %s3385, 128, 128, 8
        $region56: #{bisenet_head_forward.1} parent=47 // pred_fallthru
          _
      $region48: #{bisenet_head_forward.1} parent=5 // pred_fallthru
        _
      %p3407 = scmp.le.s32.totalorder 2, %s16
      // Predicated region
      $region57: #{bisenet_head_forward.1} parent=5 // pred_check
        %p3408 = pneg %p3407
      $region58: #{bisenet_head_forward.1} parent=5 // pred_check_branch
        %3410 = sbr.rel (%p3408) target = $region60
      $region59: #{bisenet_head_forward.1} parent=5 // pred_region
        %s3411 = ssub.s32 %s16, 2
        // Predicated region
        $region61: #{bisenet_head_forward.1} parent=59 // pred_check
          %p3412 = pneg %p216
        $region62: #{bisenet_head_forward.1} parent=59 // pred_check_branch
          %3414 = sbr.rel (%p3412) target = $region64
        $region63: #{bisenet_head_forward.1} parent=59 // pred_region
          %s3415 = sand.u32 %s201, 1
          %s3416 = scalar_lea.sflag [#allocation4], %s3415
          %s3417 = sand.u32 %s201, 1
          %s3418 = smul.addr %s3417, 96
          %s3419 = scalar_lea.vmem [#allocation3], %s3418
          %3420 = dma.done %s3416, 1536
        $region64: #{bisenet_head_forward.1} parent=59 // pred_fallthru
          _
      $region60: #{bisenet_head_forward.1} parent=5 // pred_fallthru
        _
    $region6: #{bisenet_head_forward.1} parent=1 // loop_footer
      %s20 = sadd.s32 1, %s16
    $region7: #{bisenet_head_forward.1} parent=1 // loop_footer_branch
      %15 = sbr.rel target = $region3
    $region8: #{bisenet_head_forward.1} parent=1 // loop_exit
      _
    %3421 = vsyncpa [#allocation4], 1
    %s3422 = scalar_lea.sflag [#allocation4], 1
    %3423 = vsyncpa %s3422, 1

</llo_original>
